<compile_context>
chip_gen: v5e
topology: v5e:2x2
jax: 0.10.0
libtpu: 0.0.40
codegen_flags: <defaults>
</compile_context>

<pallas_src>
import functools

import jax
import jax.numpy as jnp
from jax import lax
from jax.experimental import pallas as pl
from jax.experimental.pallas import tpu as pltpu

KSIZE = 7
PAD = KSIZE // 2


def _spatial_attention_kernel(w_ref, x_ref, o_ref,
                              sum_ref, max_ref, avg_pad_ref, max_pad_ref,
                              *, C, H, W, masked):
    # w_ref:        SMEM (2*K*K,) f32      flattened conv weight [in, kh, kw]
    # x_ref:        VMEM (1, tc, H*W)      one channel tile of one batch element
    # o_ref:        VMEM (1, 1, H, W)      attention map (written at last c step)
    # sum_ref:      VMEM (1, H*W) f32      running channel sum
    # max_ref:      VMEM (1, H*W) f32      running channel max
    # avg_pad_ref:  VMEM (H+2P, W+2P) f32  zero-padded mean plane (conv input)
    # max_pad_ref:  VMEM (H+2P, W+2P) f32  zero-padded max plane  (conv input)
    c_idx = pl.program_id(1)
    n_c = pl.num_programs(1)

    @pl.when(c_idx == 0)
    def _init():
        sum_ref[...] = jnp.zeros_like(sum_ref)
        max_ref[...] = jnp.full_like(max_ref, -jnp.inf)
        # Only the 3-wide border must stay zero (interior is fully rewritten at
        # finalize).  Cleared per batch element for megacore correctness; the
        # ~4 KB of stores overlap the first channel tile's DMA.
        avg_pad_ref[...] = jnp.zeros_like(avg_pad_ref)
        max_pad_ref[...] = jnp.zeros_like(max_pad_ref)

    # Lane-dense partial reduction over this channel tile.
    xt = x_ref[0]                                     # (tc, H*W), native dtype
    tc = xt.shape[0]
    if masked:
        # cdiv grid: the last tile may read past C; mask the padded sublanes.
        ch = lax.broadcasted_iota(jnp.int32, xt.shape, 0) + c_idx * tc
        valid = ch < C
        if jnp.issubdtype(xt.dtype, jnp.floating):
            lowest = jnp.array(-jnp.inf, xt.dtype)
        else:
            lowest = jnp.array(jnp.iinfo(xt.dtype).min, xt.dtype)
        x_sum = jnp.where(valid, xt, jnp.zeros_like(xt))
        x_max = jnp.where(valid, xt, lowest)
    else:
        x_sum = xt
        x_max = xt

    sum_ref[...] += jnp.sum(x_sum, axis=0, keepdims=True, dtype=jnp.float32)
    max_ref[...] = jnp.maximum(
        max_ref[...],
        jnp.max(x_max, axis=0, keepdims=True).astype(jnp.float32))

    @pl.when(c_idx == n_c - 1)
    def _finalize():
        inv_c = 1.0 / C
        # Scatter the flattened (H*W,) mean/max rows into the padded 2-D planes
        # row by row (static slices; avoids a lane->sublane value reshape).
        for r in range(H):
            cols = slice(r * W, (r + 1) * W)
            avg_pad_ref[PAD + r:PAD + r + 1, PAD:PAD + W] = sum_ref[0:1, cols] * inv_c
            max_pad_ref[PAD + r:PAD + r + 1, PAD:PAD + W] = max_ref[0:1, cols]

        # Unrolled 7x7 conv, 2 input planes -> 1 output plane, padding=3, no
        # bias.  The lane shift (dx) is hoisted out of the dy loop: one
        # lane-shifted band load per (plane, dx), then cheap sublane slices.
        # 4 independent accumulators shorten the VALU dependency chain.
        w = [w_ref[i] for i in range(2 * KSIZE * KSIZE)]
        accs = [jnp.zeros((H, W), jnp.float32) for _ in range(4)]
        tap = 0
        for cc, plane in enumerate((avg_pad_ref, max_pad_ref)):
            for dx in range(KSIZE):
                band = plane[:, dx:dx + W]            # (H + 2*PAD, W)
                for dy in range(KSIZE):
                    widx = (cc * KSIZE + dy) * KSIZE + dx
                    accs[tap % 4] = accs[tap % 4] + w[widx] * band[dy:dy + H, :]
                    tap += 1
        acc = (accs[0] + accs[1]) + (accs[2] + accs[3])
        o_ref[0, 0, :, :] = jax.nn.sigmoid(acc).astype(o_ref.dtype)


def _pick_channel_tile(C, HW, itemsize, budget_bytes):
    """Channel-tile size: full C if it fits the budget, else the largest
    sublane-aligned multiple (8 f32 / 16 bf16 / 32 int8) that fits.  Never an
    arbitrary divisor of C, so awkward C cannot blow up the grid step count."""
    sub = max(1, 32 // itemsize)
    bytes_per_channel = max(1, HW * itemsize)
    if C * bytes_per_channel <= budget_bytes:
        return C                                   # full extent: always layout-legal
    tc = (budget_bytes // bytes_per_channel // sub) * sub
    tc = max(sub, tc)                              # layout floor
    return C if tc >= C else tc


def spatial_attention(x, conv_weight, *,
                      budget_bytes=8 * 1024 * 1024,
                      vmem_limit_bytes=48 * 1024 * 1024):
    """x: (B, C, H, W); conv_weight: (1, 2, K, K) (PyTorch OIHW). Returns (B, 1, H, W)."""
    B, C, H, W = x.shape
    HW = H * W
    x_flat = x.reshape(B, C, HW)                   # free: contiguous in HBM
    w_flat = conv_weight.reshape(-1).astype(jnp.float32)

    tc = _pick_channel_tile(C, HW, x.dtype.itemsize, budget_bytes)
    n_c = pl.cdiv(C, tc)
    masked = (C % tc) != 0

    kernel = functools.partial(_spatial_attention_kernel,
                               C=C, H=H, W=W, masked=masked)

    cost = pl.CostEstimate(
        flops=2 * B * C * HW + 2 * 2 * KSIZE * KSIZE * B * HW,
        transcendentals=B * HW,
        bytes_accessed=(B * C * HW + B * HW) * x.dtype.itemsize + w_flat.size * 4,
    )

    return pl.pallas_call(
        kernel,
        out_shape=jax.ShapeDtypeStruct((B, 1, H, W), x.dtype),
        grid_spec=pltpu.PrefetchScalarGridSpec(
            num_scalar_prefetch=0,
            grid=(B, n_c),
            in_specs=[
                pl.BlockSpec(memory_space=pltpu.MemorySpace.SMEM),     # conv weights
                pl.BlockSpec((1, tc, HW), lambda b, c: (b, c, 0)),     # lane-dense x tile
            ],
            out_specs=pl.BlockSpec((1, 1, H, W), lambda b, c: (b, 0, 0, 0)),
            scratch_shapes=[
                pltpu.VMEM((1, HW), jnp.float32),                      # running sum
                pltpu.VMEM((1, HW), jnp.float32),                      # running max
                pltpu.VMEM((H + 2 * PAD, W + 2 * PAD), jnp.float32),   # padded mean plane
                pltpu.VMEM((H + 2 * PAD, W + 2 * PAD), jnp.float32),   # padded max plane
            ],
        ),
        compiler_params=pltpu.CompilerParams(
            dimension_semantics=("parallel", "arbitrary"),
            vmem_limit_bytes=vmem_limit_bytes,
        ),
        cost_estimate=cost,
    )(w_flat, x_flat)


def _reference(x, conv_weight):
    avg_out = jnp.mean(x, axis=1, keepdims=True)
    max_out = jnp.max(x, axis=1, keepdims=True)
    cat = jnp.concatenate([avg_out, max_out], axis=1)
    y = lax.conv_general_dilated(
        cat.astype(jnp.float32), conv_weight.astype(jnp.float32),
        window_strides=(1, 1), padding=[(PAD, PAD), (PAD, PAD)],
        dimension_numbers=("NCHW", "OIHW", "NCHW"))
    return jax.nn.sigmoid(y).astype(x.dtype)


if __name__ == "__main__":
    key = jax.random.PRNGKey(0)
    kx, kw, kx2 = jax.random.split(key, 3)

    # Deterministic synthetic conv weight (nn.Conv2d(2, 1, 7, padding=3, bias=False)).
    conv_weight = 0.05 * jax.random.normal(kw, (1, 2, KSIZE, KSIZE), dtype=jnp.float32)

    # Case 1: module-sized input; C fits in a single channel tile (full extent).
    B, C, H, W = 2, 4, 16, 16
    x = jax.random.normal(kx, (B, C, H, W), dtype=jnp.float32)
    out = jax.block_until_ready(spatial_attention(x, conv_weight))
    ref = _reference(x, conv_weight)
    assert out.shape == (B, 1, H, W)
    assert jnp.allclose(out, ref, atol=1e-5, rtol=1e-5), "case 1 mismatch vs reference"

    # Case 2: C not a multiple of the channel tile -> exercises the cdiv grid
    # and the masked tail tile (tiny budget forces tc=16 over C=20).
    B2, C2, H2, W2 = 1, 20, 8, 16
    x2 = jax.random.normal(kx2, (B2, C2, H2, W2), dtype=jnp.float32)
    out2 = jax.block_until_ready(spatial_attention(x2, conv_weight, budget_bytes=8 * 1024))
    ref2 = _reference(x2, conv_weight)
    assert out2.shape == (B2, 1, H2, W2)
    assert jnp.allclose(out2, ref2, atol=1e-5, rtol=1e-5), "case 2 mismatch vs reference"

    print("KERNEL_OK")
</pallas_src>

<mosaic_0001>
module attributes {stable_mosaic.version = 11 : i64} {
  func.func @_spatial_attention_kernel(%arg0: i32, %arg1: i32, %arg2: memref<98xf32, #tpu.memory_space<smem>>, %arg3: memref<1x4x256xf32, #tpu.memory_space<vmem>>, %arg4: memref<1x1x16x16xf32, #tpu.memory_space<vmem>>, %arg5: memref<1x256xf32, #tpu.memory_space<vmem>>, %arg6: memref<1x256xf32, #tpu.memory_space<vmem>>, %arg7: memref<22x22xf32, #tpu.memory_space<vmem>>, %arg8: memref<22x22xf32, #tpu.memory_space<vmem>>) attributes {dimension_semantics = [#tpu.dimension_semantics<parallel>, #tpu.dimension_semantics<arbitrary>], iteration_bounds = array<i64: 2, 1>, scalar_prefetch = 0 : i64, scratch_operands = 4 : i64, tpu.core_type = #tpu.core_type<tc>, window_params = [{transform_indices = @transform_0, window_bounds = array<i64: 98>}, {transform_indices = @transform_1, window_bounds = array<i64: 1, 4, 256>}, {transform_indices = @transform_2, window_bounds = array<i64: 1, 1, 16, 16>}]} {
    %c0_i32 = arith.constant 0 : i32
    %0 = arith.cmpi eq, %arg1, %c0_i32 : i32
    %1 = arith.extui %0 : i1 to i32
    %c0_i32_0 = arith.constant 0 : i32
    %2 = arith.cmpi ne, %1, %c0_i32_0 : i32
    scf.if %2 {
      %cst_14 = arith.constant 0.000000e+00 : f32
      %18 = vector.broadcast %cst_14 : f32 to vector<1x256xf32>
      %c0_15 = arith.constant 0 : index
      %c0_16 = arith.constant 0 : index
      %19 = vector.load %arg5[%c0_15, %c0_16] : memref<1x256xf32, #tpu.memory_space<vmem>>, vector<1x256xf32>
      tpu.vector_store %arg5[%c0_15, %c0_16], %18 {strides = array<i32>} : memref<1x256xf32, #tpu.memory_space<vmem>>, vector<1x256xf32>,
      %cst_17 = arith.constant 0xFF800000 : f32
      %20 = vector.broadcast %cst_17 : f32 to vector<1x256xf32>
      %c0_18 = arith.constant 0 : index
      %c0_19 = arith.constant 0 : index
      %21 = vector.load %arg6[%c0_18, %c0_19] : memref<1x256xf32, #tpu.memory_space<vmem>>, vector<1x256xf32>
      tpu.vector_store %arg6[%c0_18, %c0_19], %20 {strides = array<i32>} : memref<1x256xf32, #tpu.memory_space<vmem>>, vector<1x256xf32>,
      %cst_20 = arith.constant 0.000000e+00 : f32
      %22 = vector.broadcast %cst_20 : f32 to vector<22x22xf32>
      %c0_21 = arith.constant 0 : index
      %c0_22 = arith.constant 0 : index
      %23 = vector.load %arg7[%c0_21, %c0_22] : memref<22x22xf32, #tpu.memory_space<vmem>>, vector<22x22xf32>
      tpu.vector_store %arg7[%c0_21, %c0_22], %22 {strides = array<i32>} : memref<22x22xf32, #tpu.memory_space<vmem>>, vector<22x22xf32>,
      %cst_23 = arith.constant 0.000000e+00 : f32
      %24 = vector.broadcast %cst_23 : f32 to vector<22x22xf32>
      %c0_24 = arith.constant 0 : index
      %c0_25 = arith.constant 0 : index
      %25 = vector.load %arg8[%c0_24, %c0_25] : memref<22x22xf32, #tpu.memory_space<vmem>>, vector<22x22xf32>
      tpu.vector_store %arg8[%c0_24, %c0_25], %24 {strides = array<i32>} : memref<22x22xf32, #tpu.memory_space<vmem>>, vector<22x22xf32>,
    } else {
    }
    %c0 = arith.constant 0 : index
    %c0_1 = arith.constant 0 : index
    %c0_2 = arith.constant 0 : index
    %3 = vector.load %arg3[%c0, %c0_1, %c0_2] : memref<1x4x256xf32, #tpu.memory_space<vmem>>, vector<1x4x256xf32>
    %4 = vector.shape_cast %3 : vector<1x4x256xf32> to vector<4x256xf32>
    %c0_3 = arith.constant 0 : index
    %c0_4 = arith.constant 0 : index
    %5 = vector.load %arg5[%c0_3, %c0_4] : memref<1x256xf32, #tpu.memory_space<vmem>>, vector<1x256xf32>
    %cst = arith.constant dense<0.000000e+00> : vector<256xf32>
    %6 = vector.multi_reduction <add>, %4, %cst [0] : vector<4x256xf32> to vector<256xf32>
    %7 = vector.shape_cast %6 : vector<256xf32> to vector<1x256xf32>
    %8 = arith.addf %5, %7 : vector<1x256xf32>
    %c0_5 = arith.constant 0 : index
    %c0_6 = arith.constant 0 : index
    %9 = vector.load %arg5[%c0_5, %c0_6] : memref<1x256xf32, #tpu.memory_space<vmem>>, vector<1x256xf32>
    tpu.vector_store %arg5[%c0_5, %c0_6], %8 {strides = array<i32>} : memref<1x256xf32, #tpu.memory_space<vmem>>, vector<1x256xf32>,
    %c0_7 = arith.constant 0 : index
    %c0_8 = arith.constant 0 : index
    %10 = vector.load %arg6[%c0_7, %c0_8] : memref<1x256xf32, #tpu.memory_space<vmem>>, vector<1x256xf32>
    %cst_9 = arith.constant dense<0xFF800000> : vector<256xf32>
    %11 = vector.multi_reduction <maximumf>, %4, %cst_9 [0] : vector<4x256xf32> to vector<256xf32>
    %12 = vector.shape_cast %11 : vector<256xf32> to vector<1x256xf32>
    %13 = arith.maximumf %10, %12 : vector<1x256xf32>
    %c0_10 = arith.constant 0 : index
    %c0_11 = arith.constant 0 : index
    %14 = vector.load %arg6[%c0_10, %c0_11] : memref<1x256xf32, #tpu.memory_space<vmem>>, vector<1x256xf32>
    tpu.vector_store %arg6[%c0_10, %c0_11], %13 {strides = array<i32>} : memref<1x256xf32, #tpu.memory_space<vmem>>, vector<1x256xf32>,
    %c0_i32_12 = arith.constant 0 : i32
    %15 = arith.cmpi eq, %arg1, %c0_i32_12 : i32
    %16 = arith.extui %15 : i1 to i32
    %c0_i32_13 = arith.constant 0 : i32
    %17 = arith.cmpi ne, %16, %c0_i32_13 : i32
    scf.if %17 {
      %c0_14 = arith.constant 0 : index
      %c0_15 = arith.constant 0 : index
      %18 = vector.load %arg5[%c0_14, %c0_15] : memref<1x256xf32, #tpu.memory_space<vmem>>, vector<1x16xf32>
      %cst_16 = arith.constant 2.500000e-01 : f32
      %19 = vector.broadcast %cst_16 : f32 to vector<1x16xf32>
      %20 = arith.mulf %18, %19 : vector<1x16xf32>
      %c3 = arith.constant 3 : index
      %c3_17 = arith.constant 3 : index
      %21 = vector.load %arg7[%c3, %c3_17] : memref<22x22xf32, #tpu.memory_space<vmem>>, vector<1x16xf32>
      tpu.vector_store %arg7[%c3, %c3_17], %20 {strides = array<i32>} : memref<22x22xf32, #tpu.memory_space<vmem>>, vector<1x16xf32>,
      %c0_18 = arith.constant 0 : index
      %c0_19 = arith.constant 0 : index
      %22 = vector.load %arg6[%c0_18, %c0_19] : memref<1x256xf32, #tpu.memory_space<vmem>>, vector<1x16xf32>
      %c3_20 = arith.constant 3 : index
      %c3_21 = arith.constant 3 : index
      %23 = vector.load %arg8[%c3_20, %c3_21] : memref<22x22xf32, #tpu.memory_space<vmem>>, vector<1x16xf32>
      tpu.vector_store %arg8[%c3_20, %c3_21], %22 {strides = array<i32>} : memref<22x22xf32, #tpu.memory_space<vmem>>, vector<1x16xf32>,
      %c0_22 = arith.constant 0 : index
      %c16 = arith.constant 16 : index
      %24 = vector.load %arg5[%c0_22, %c16] : memref<1x256xf32, #tpu.memory_space<vmem>>, vector<1x16xf32>
      %cst_23 = arith.constant 2.500000e-01 : f32
      %25 = vector.broadcast %cst_23 : f32 to vector<1x16xf32>
      %26 = arith.mulf %24, %25 : vector<1x16xf32>
      %c4 = arith.constant 4 : index
      %c3_24 = arith.constant 3 : index
      %27 = vector.load %arg7[%c4, %c3_24] : memref<22x22xf32, #tpu.memory_space<vmem>>, vector<1x16xf32>
      tpu.vector_store %arg7[%c4, %c3_24], %26 {strides = array<i32>} : memref<22x22xf32, #tpu.memory_space<vmem>>, vector<1x16xf32>,
      %c0_25 = arith.constant 0 : index
      %c16_26 = arith.constant 16 : index
      %28 = vector.load %arg6[%c0_25, %c16_26] : memref<1x256xf32, #tpu.memory_space<vmem>>, vector<1x16xf32>
      %c4_27 = arith.constant 4 : index
      %c3_28 = arith.constant 3 : index
      %29 = vector.load %arg8[%c4_27, %c3_28] : memref<22x22xf32, #tpu.memory_space<vmem>>, vector<1x16xf32>
      tpu.vector_store %arg8[%c4_27, %c3_28], %28 {strides = array<i32>} : memref<22x22xf32, #tpu.memory_space<vmem>>, vector<1x16xf32>,
      %c0_29 = arith.constant 0 : index
      %c32 = arith.constant 32 : index
      %30 = vector.load %arg5[%c0_29, %c32] : memref<1x256xf32, #tpu.memory_space<vmem>>, vector<1x16xf32>
      %cst_30 = arith.constant 2.500000e-01 : f32
      %31 = vector.broadcast %cst_30 : f32 to vector<1x16xf32>
      %32 = arith.mulf %30, %31 : vector<1x16xf32>
      %c5 = arith.constant 5 : index
      %c3_31 = arith.constant 3 : index
      %33 = vector.load %arg7[%c5, %c3_31] : memref<22x22xf32, #tpu.memory_space<vmem>>, vector<1x16xf32>
      tpu.vector_store %arg7[%c5, %c3_31], %32 {strides = array<i32>} : memref<22x22xf32, #tpu.memory_space<vmem>>, vector<1x16xf32>,
      %c0_32 = arith.constant 0 : index
      %c32_33 = arith.constant 32 : index
      %34 = vector.load %arg6[%c0_32, %c32_33] : memref<1x256xf32, #tpu.memory_space<vmem>>, vector<1x16xf32>
      %c5_34 = arith.constant 5 : index
      %c3_35 = arith.constant 3 : index
      %35 = vector.load %arg8[%c5_34, %c3_35] : memref<22x22xf32, #tpu.memory_space<vmem>>, vector<1x16xf32>
      tpu.vector_store %arg8[%c5_34, %c3_35], %34 {strides = array<i32>} : memref<22x22xf32, #tpu.memory_space<vmem>>, vector<1x16xf32>,
      %c0_36 = arith.constant 0 : index
      %c48 = arith.constant 48 : index
      %36 = vector.load %arg5[%c0_36, %c48] : memref<1x256xf32, #tpu.memory_space<vmem>>, vector<1x16xf32>
      %cst_37 = arith.constant 2.500000e-01 : f32
      %37 = vector.broadcast %cst_37 : f32 to vector<1x16xf32>
      %38 = arith.mulf %36, %37 : vector<1x16xf32>
      %c6 = arith.constant 6 : index
      %c3_38 = arith.constant 3 : index
      %39 = vector.load %arg7[%c6, %c3_38] : memref<22x22xf32, #tpu.memory_space<vmem>>, vector<1x16xf32>
      tpu.vector_store %arg7[%c6, %c3_38], %38 {strides = array<i32>} : memref<22x22xf32, #tpu.memory_space<vmem>>, vector<1x16xf32>,
      %c0_39 = arith.constant 0 : index
      %c48_40 = arith.constant 48 : index
      %40 = vector.load %arg6[%c0_39, %c48_40] : memref<1x256xf32, #tpu.memory_space<vmem>>, vector<1x16xf32>
      %c6_41 = arith.constant 6 : index
      %c3_42 = arith.constant 3 : index
      %41 = vector.load %arg8[%c6_41, %c3_42] : memref<22x22xf32, #tpu.memory_space<vmem>>, vector<1x16xf32>
      tpu.vector_store %arg8[%c6_41, %c3_42], %40 {strides = array<i32>} : memref<22x22xf32, #tpu.memory_space<vmem>>, vector<1x16xf32>,
      %c0_43 = arith.constant 0 : index
      %c64 = arith.constant 64 : index
      %42 = vector.load %arg5[%c0_43, %c64] : memref<1x256xf32, #tpu.memory_space<vmem>>, vector<1x16xf32>
      %cst_44 = arith.constant 2.500000e-01 : f32
      %43 = vector.broadcast %cst_44 : f32 to vector<1x16xf32>
      %44 = arith.mulf %42, %43 : vector<1x16xf32>
      %c7 = arith.constant 7 : index
      %c3_45 = arith.constant 3 : index
      %45 = vector.load %arg7[%c7, %c3_45] : memref<22x22xf32, #tpu.memory_space<vmem>>, vector<1x16xf32>
      tpu.vector_store %arg7[%c7, %c3_45], %44 {strides = array<i32>} : memref<22x22xf32, #tpu.memory_space<vmem>>, vector<1x16xf32>,
      %c0_46 = arith.constant 0 : index
      %c64_47 = arith.constant 64 : index
      %46 = vector.load %arg6[%c0_46, %c64_47] : memref<1x256xf32, #tpu.memory_space<vmem>>, vector<1x16xf32>
      %c7_48 = arith.constant 7 : index
      %c3_49 = arith.constant 3 : index
      %47 = vector.load %arg8[%c7_48, %c3_49] : memref<22x22xf32, #tpu.memory_space<vmem>>, vector<1x16xf32>
      tpu.vector_store %arg8[%c7_48, %c3_49], %46 {strides = array<i32>} : memref<22x22xf32, #tpu.memory_space<vmem>>, vector<1x16xf32>,
      %c0_50 = arith.constant 0 : index
      %c80 = arith.constant 80 : index
      %48 = vector.load %arg5[%c0_50, %c80] : memref<1x256xf32, #tpu.memory_space<vmem>>, vector<1x16xf32>
      %cst_51 = arith.constant 2.500000e-01 : f32
      %49 = vector.broadcast %cst_51 : f32 to vector<1x16xf32>
      %50 = arith.mulf %48, %49 : vector<1x16xf32>
      %c8 = arith.constant 8 : index
      %c3_52 = arith.constant 3 : index
      %51 = vector.load %arg7[%c8, %c3_52] : memref<22x22xf32, #tpu.memory_space<vmem>>, vector<1x16xf32>
      tpu.vector_store %arg7[%c8, %c3_52], %50 {strides = array<i32>} : memref<22x22xf32, #tpu.memory_space<vmem>>, vector<1x16xf32>,
      %c0_53 = arith.constant 0 : index
      %c80_54 = arith.constant 80 : index
      %52 = vector.load %arg6[%c0_53, %c80_54] : memref<1x256xf32, #tpu.memory_space<vmem>>, vector<1x16xf32>
      %c8_55 = arith.constant 8 : index
      %c3_56 = arith.constant 3 : index
      %53 = vector.load %arg8[%c8_55, %c3_56] : memref<22x22xf32, #tpu.memory_space<vmem>>, vector<1x16xf32>
      tpu.vector_store %arg8[%c8_55, %c3_56], %52 {strides = array<i32>} : memref<22x22xf32, #tpu.memory_space<vmem>>, vector<1x16xf32>,
      %c0_57 = arith.constant 0 : index
      %c96 = arith.constant 96 : index
      %54 = vector.load %arg5[%c0_57, %c96] : memref<1x256xf32, #tpu.memory_space<vmem>>, vector<1x16xf32>
      %cst_58 = arith.constant 2.500000e-01 : f32
      %55 = vector.broadcast %cst_58 : f32 to vector<1x16xf32>
      %56 = arith.mulf %54, %55 : vector<1x16xf32>
      %c9 = arith.constant 9 : index
      %c3_59 = arith.constant 3 : index
      %57 = vector.load %arg7[%c9, %c3_59] : memref<22x22xf32, #tpu.memory_space<vmem>>, vector<1x16xf32>
      tpu.vector_store %arg7[%c9, %c3_59], %56 {strides = array<i32>} : memref<22x22xf32, #tpu.memory_space<vmem>>, vector<1x16xf32>,
      %c0_60 = arith.constant 0 : index
      %c96_61 = arith.constant 96 : index
      %58 = vector.load %arg6[%c0_60, %c96_61] : memref<1x256xf32, #tpu.memory_space<vmem>>, vector<1x16xf32>
      %c9_62 = arith.constant 9 : index
      %c3_63 = arith.constant 3 : index
      %59 = vector.load %arg8[%c9_62, %c3_63] : memref<22x22xf32, #tpu.memory_space<vmem>>, vector<1x16xf32>
      tpu.vector_store %arg8[%c9_62, %c3_63], %58 {strides = array<i32>} : memref<22x22xf32, #tpu.memory_space<vmem>>, vector<1x16xf32>,
      %c0_64 = arith.constant 0 : index
      %c112 = arith.constant 112 : index
      %60 = vector.load %arg5[%c0_64, %c112] : memref<1x256xf32, #tpu.memory_space<vmem>>, vector<1x16xf32>
      %cst_65 = arith.constant 2.500000e-01 : f32
      %61 = vector.broadcast %cst_65 : f32 to vector<1x16xf32>
      %62 = arith.mulf %60, %61 : vector<1x16xf32>
      %c10 = arith.constant 10 : index
      %c3_66 = arith.constant 3 : index
      %63 = vector.load %arg7[%c10, %c3_66] : memref<22x22xf32, #tpu.memory_space<vmem>>, vector<1x16xf32>
      tpu.vector_store %arg7[%c10, %c3_66], %62 {strides = array<i32>} : memref<22x22xf32, #tpu.memory_space<vmem>>, vector<1x16xf32>,
      %c0_67 = arith.constant 0 : index
      %c112_68 = arith.constant 112 : index
      %64 = vector.load %arg6[%c0_67, %c112_68] : memref<1x256xf32, #tpu.memory_space<vmem>>, vector<1x16xf32>
      %c10_69 = arith.constant 10 : index
      %c3_70 = arith.constant 3 : index
      %65 = vector.load %arg8[%c10_69, %c3_70] : memref<22x22xf32, #tpu.memory_space<vmem>>, vector<1x16xf32>
      tpu.vector_store %arg8[%c10_69, %c3_70], %64 {strides = array<i32>} : memref<22x22xf32, #tpu.memory_space<vmem>>, vector<1x16xf32>,
      %c0_71 = arith.constant 0 : index
      %c128 = arith.constant 128 : index
      %66 = vector.load %arg5[%c0_71, %c128] : memref<1x256xf32, #tpu.memory_space<vmem>>, vector<1x16xf32>
      %cst_72 = arith.constant 2.500000e-01 : f32
      %67 = vector.broadcast %cst_72 : f32 to vector<1x16xf32>
      %68 = arith.mulf %66, %67 : vector<1x16xf32>
      %c11 = arith.constant 11 : index
      %c3_73 = arith.constant 3 : index
      %69 = vector.load %arg7[%c11, %c3_73] : memref<22x22xf32, #tpu.memory_space<vmem>>, vector<1x16xf32>
      tpu.vector_store %arg7[%c11, %c3_73], %68 {strides = array<i32>} : memref<22x22xf32, #tpu.memory_space<vmem>>, vector<1x16xf32>,
      %c0_74 = arith.constant 0 : index
      %c128_75 = arith.constant 128 : index
      %70 = vector.load %arg6[%c0_74, %c128_75] : memref<1x256xf32, #tpu.memory_space<vmem>>, vector<1x16xf32>
      %c11_76 = arith.constant 11 : index
      %c3_77 = arith.constant 3 : index
      %71 = vector.load %arg8[%c11_76, %c3_77] : memref<22x22xf32, #tpu.memory_space<vmem>>, vector<1x16xf32>
      tpu.vector_store %arg8[%c11_76, %c3_77], %70 {strides = array<i32>} : memref<22x22xf32, #tpu.memory_space<vmem>>, vector<1x16xf32>,
      %c0_78 = arith.constant 0 : index
      %c144 = arith.constant 144 : index
      %72 = vector.load %arg5[%c0_78, %c144] : memref<1x256xf32, #tpu.memory_space<vmem>>, vector<1x16xf32>
      %cst_79 = arith.constant 2.500000e-01 : f32
      %73 = vector.broadcast %cst_79 : f32 to vector<1x16xf32>
      %74 = arith.mulf %72, %73 : vector<1x16xf32>
      %c12 = arith.constant 12 : index
      %c3_80 = arith.constant 3 : index
      %75 = vector.load %arg7[%c12, %c3_80] : memref<22x22xf32, #tpu.memory_space<vmem>>, vector<1x16xf32>
      tpu.vector_store %arg7[%c12, %c3_80], %74 {strides = array<i32>} : memref<22x22xf32, #tpu.memory_space<vmem>>, vector<1x16xf32>,
      %c0_81 = arith.constant 0 : index
      %c144_82 = arith.constant 144 : index
      %76 = vector.load %arg6[%c0_81, %c144_82] : memref<1x256xf32, #tpu.memory_space<vmem>>, vector<1x16xf32>
      %c12_83 = arith.constant 12 : index
      %c3_84 = arith.constant 3 : index
      %77 = vector.load %arg8[%c12_83, %c3_84] : memref<22x22xf32, #tpu.memory_space<vmem>>, vector<1x16xf32>
      tpu.vector_store %arg8[%c12_83, %c3_84], %76 {strides = array<i32>} : memref<22x22xf32, #tpu.memory_space<vmem>>, vector<1x16xf32>,
      %c0_85 = arith.constant 0 : index
      %c160 = arith.constant 160 : index
      %78 = vector.load %arg5[%c0_85, %c160] : memref<1x256xf32, #tpu.memory_space<vmem>>, vector<1x16xf32>
      %cst_86 = arith.constant 2.500000e-01 : f32
      %79 = vector.broadcast %cst_86 : f32 to vector<1x16xf32>
      %80 = arith.mulf %78, %79 : vector<1x16xf32>
      %c13 = arith.constant 13 : index
      %c3_87 = arith.constant 3 : index
      %81 = vector.load %arg7[%c13, %c3_87] : memref<22x22xf32, #tpu.memory_space<vmem>>, vector<1x16xf32>
      tpu.vector_store %arg7[%c13, %c3_87], %80 {strides = array<i32>} : memref<22x22xf32, #tpu.memory_space<vmem>>, vector<1x16xf32>,
      %c0_88 = arith.constant 0 : index
      %c160_89 = arith.constant 160 : index
      %82 = vector.load %arg6[%c0_88, %c160_89] : memref<1x256xf32, #tpu.memory_space<vmem>>, vector<1x16xf32>
      %c13_90 = arith.constant 13 : index
      %c3_91 = arith.constant 3 : index
      %83 = vector.load %arg8[%c13_90, %c3_91] : memref<22x22xf32, #tpu.memory_space<vmem>>, vector<1x16xf32>
      tpu.vector_store %arg8[%c13_90, %c3_91], %82 {strides = array<i32>} : memref<22x22xf32, #tpu.memory_space<vmem>>, vector<1x16xf32>,
      %c0_92 = arith.constant 0 : index
      %c176 = arith.constant 176 : index
      %84 = vector.load %arg5[%c0_92, %c176] : memref<1x256xf32, #tpu.memory_space<vmem>>, vector<1x16xf32>
      %cst_93 = arith.constant 2.500000e-01 : f32
      %85 = vector.broadcast %cst_93 : f32 to vector<1x16xf32>
      %86 = arith.mulf %84, %85 : vector<1x16xf32>
      %c14 = arith.constant 14 : index
      %c3_94 = arith.constant 3 : index
      %87 = vector.load %arg7[%c14, %c3_94] : memref<22x22xf32, #tpu.memory_space<vmem>>, vector<1x16xf32>
      tpu.vector_store %arg7[%c14, %c3_94], %86 {strides = array<i32>} : memref<22x22xf32, #tpu.memory_space<vmem>>, vector<1x16xf32>,
      %c0_95 = arith.constant 0 : index
      %c176_96 = arith.constant 176 : index
      %88 = vector.load %arg6[%c0_95, %c176_96] : memref<1x256xf32, #tpu.memory_space<vmem>>, vector<1x16xf32>
      %c14_97 = arith.constant 14 : index
      %c3_98 = arith.constant 3 : index
      %89 = vector.load %arg8[%c14_97, %c3_98] : memref<22x22xf32, #tpu.memory_space<vmem>>, vector<1x16xf32>
      tpu.vector_store %arg8[%c14_97, %c3_98], %88 {strides = array<i32>} : memref<22x22xf32, #tpu.memory_space<vmem>>, vector<1x16xf32>,
      %c0_99 = arith.constant 0 : index
      %c192 = arith.constant 192 : index
      %90 = vector.load %arg5[%c0_99, %c192] : memref<1x256xf32, #tpu.memory_space<vmem>>, vector<1x16xf32>
      %cst_100 = arith.constant 2.500000e-01 : f32
      %91 = vector.broadcast %cst_100 : f32 to vector<1x16xf32>
      %92 = arith.mulf %90, %91 : vector<1x16xf32>
      %c15 = arith.constant 15 : index
      %c3_101 = arith.constant 3 : index
      %93 = vector.load %arg7[%c15, %c3_101] : memref<22x22xf32, #tpu.memory_space<vmem>>, vector<1x16xf32>
      tpu.vector_store %arg7[%c15, %c3_101], %92 {strides = array<i32>} : memref<22x22xf32, #tpu.memory_space<vmem>>, vector<1x16xf32>,
      %c0_102 = arith.constant 0 : index
      %c192_103 = arith.constant 192 : index
      %94 = vector.load %arg6[%c0_102, %c192_103] : memref<1x256xf32, #tpu.memory_space<vmem>>, vector<1x16xf32>
      %c15_104 = arith.constant 15 : index
      %c3_105 = arith.constant 3 : index
      %95 = vector.load %arg8[%c15_104, %c3_105] : memref<22x22xf32, #tpu.memory_space<vmem>>, vector<1x16xf32>
      tpu.vector_store %arg8[%c15_104, %c3_105], %94 {strides = array<i32>} : memref<22x22xf32, #tpu.memory_space<vmem>>, vector<1x16xf32>,
      %c0_106 = arith.constant 0 : index
      %c208 = arith.constant 208 : index
      %96 = vector.load %arg5[%c0_106, %c208] : memref<1x256xf32, #tpu.memory_space<vmem>>, vector<1x16xf32>
      %cst_107 = arith.constant 2.500000e-01 : f32
      %97 = vector.broadcast %cst_107 : f32 to vector<1x16xf32>
      %98 = arith.mulf %96, %97 : vector<1x16xf32>
      %c16_108 = arith.constant 16 : index
      %c3_109 = arith.constant 3 : index
      %99 = vector.load %arg7[%c16_108, %c3_109] : memref<22x22xf32, #tpu.memory_space<vmem>>, vector<1x16xf32>
      tpu.vector_store %arg7[%c16_108, %c3_109], %98 {strides = array<i32>} : memref<22x22xf32, #tpu.memory_space<vmem>>, vector<1x16xf32>,
      %c0_110 = arith.constant 0 : index
      %c208_111 = arith.constant 208 : index
      %100 = vector.load %arg6[%c0_110, %c208_111] : memref<1x256xf32, #tpu.memory_space<vmem>>, vector<1x16xf32>
      %c16_112 = arith.constant 16 : index
      %c3_113 = arith.constant 3 : index
      %101 = vector.load %arg8[%c16_112, %c3_113] : memref<22x22xf32, #tpu.memory_space<vmem>>, vector<1x16xf32>
      tpu.vector_store %arg8[%c16_112, %c3_113], %100 {strides = array<i32>} : memref<22x22xf32, #tpu.memory_space<vmem>>, vector<1x16xf32>,
      %c0_114 = arith.constant 0 : index
      %c224 = arith.constant 224 : index
      %102 = vector.load %arg5[%c0_114, %c224] : memref<1x256xf32, #tpu.memory_space<vmem>>, vector<1x16xf32>
      %cst_115 = arith.constant 2.500000e-01 : f32
      %103 = vector.broadcast %cst_115 : f32 to vector<1x16xf32>
      %104 = arith.mulf %102, %103 : vector<1x16xf32>
      %c17 = arith.constant 17 : index
      %c3_116 = arith.constant 3 : index
      %105 = vector.load %arg7[%c17, %c3_116] : memref<22x22xf32, #tpu.memory_space<vmem>>, vector<1x16xf32>
      tpu.vector_store %arg7[%c17, %c3_116], %104 {strides = array<i32>} : memref<22x22xf32, #tpu.memory_space<vmem>>, vector<1x16xf32>,
      %c0_117 = arith.constant 0 : index
      %c224_118 = arith.constant 224 : index
      %106 = vector.load %arg6[%c0_117, %c224_118] : memref<1x256xf32, #tpu.memory_space<vmem>>, vector<1x16xf32>
      %c17_119 = arith.constant 17 : index
      %c3_120 = arith.constant 3 : index
      %107 = vector.load %arg8[%c17_119, %c3_120] : memref<22x22xf32, #tpu.memory_space<vmem>>, vector<1x16xf32>
      tpu.vector_store %arg8[%c17_119, %c3_120], %106 {strides = array<i32>} : memref<22x22xf32, #tpu.memory_space<vmem>>, vector<1x16xf32>,
      %c0_121 = arith.constant 0 : index
      %c240 = arith.constant 240 : index
      %108 = vector.load %arg5[%c0_121, %c240] : memref<1x256xf32, #tpu.memory_space<vmem>>, vector<1x16xf32>
      %cst_122 = arith.constant 2.500000e-01 : f32
      %109 = vector.broadcast %cst_122 : f32 to vector<1x16xf32>
      %110 = arith.mulf %108, %109 : vector<1x16xf32>
      %c18 = arith.constant 18 : index
      %c3_123 = arith.constant 3 : index
      %111 = vector.load %arg7[%c18, %c3_123] : memref<22x22xf32, #tpu.memory_space<vmem>>, vector<1x16xf32>
      tpu.vector_store %arg7[%c18, %c3_123], %110 {strides = array<i32>} : memref<22x22xf32, #tpu.memory_space<vmem>>, vector<1x16xf32>,
      %c0_124 = arith.constant 0 : index
      %c240_125 = arith.constant 240 : index
      %112 = vector.load %arg6[%c0_124, %c240_125] : memref<1x256xf32, #tpu.memory_space<vmem>>, vector<1x16xf32>
      %c18_126 = arith.constant 18 : index
      %c3_127 = arith.constant 3 : index
      %113 = vector.load %arg8[%c18_126, %c3_127] : memref<22x22xf32, #tpu.memory_space<vmem>>, vector<1x16xf32>
      tpu.vector_store %arg8[%c18_126, %c3_127], %112 {strides = array<i32>} : memref<22x22xf32, #tpu.memory_space<vmem>>, vector<1x16xf32>,
      %c0_128 = arith.constant 0 : index
      %114 = memref.load %arg2[%c0_128] : memref<98xf32, #tpu.memory_space<smem>>
      %c1 = arith.constant 1 : index
      %115 = memref.load %arg2[%c1] : memref<98xf32, #tpu.memory_space<smem>>
      %c2 = arith.constant 2 : index
      %116 = memref.load %arg2[%c2] : memref<98xf32, #tpu.memory_space<smem>>
      %c3_129 = arith.constant 3 : index
      %117 = memref.load %arg2[%c3_129] : memref<98xf32, #tpu.memory_space<smem>>
      %c4_130 = arith.constant 4 : index
      %118 = memref.load %arg2[%c4_130] : memref<98xf32, #tpu.memory_space<smem>>
      %c5_131 = arith.constant 5 : index
      %119 = memref.load %arg2[%c5_131] : memref<98xf32, #tpu.memory_space<smem>>
      %c6_132 = arith.constant 6 : index
      %120 = memref.load %arg2[%c6_132] : memref<98xf32, #tpu.memory_space<smem>>
      %c7_133 = arith.constant 7 : index
      %121 = memref.load %arg2[%c7_133] : memref<98xf32, #tpu.memory_space<smem>>
      %c8_134 = arith.constant 8 : index
      %122 = memref.load %arg2[%c8_134] : memref<98xf32, #tpu.memory_space<smem>>
      %c9_135 = arith.constant 9 : index
      %123 = memref.load %arg2[%c9_135] : memref<98xf32, #tpu.memory_space<smem>>
      %c10_136 = arith.constant 10 : index
      %124 = memref.load %arg2[%c10_136] : memref<98xf32, #tpu.memory_space<smem>>
      %c11_137 = arith.constant 11 : index
      %125 = memref.load %arg2[%c11_137] : memref<98xf32, #tpu.memory_space<smem>>
      %c12_138 = arith.constant 12 : index
      %126 = memref.load %arg2[%c12_138] : memref<98xf32, #tpu.memory_space<smem>>
      %c13_139 = arith.constant 13 : index
      %127 = memref.load %arg2[%c13_139] : memref<98xf32, #tpu.memory_space<smem>>
      %c14_140 = arith.constant 14 : index
      %128 = memref.load %arg2[%c14_140] : memref<98xf32, #tpu.memory_space<smem>>
      %c15_141 = arith.constant 15 : index
      %129 = memref.load %arg2[%c15_141] : memref<98xf32, #tpu.memory_space<smem>>
      %c16_142 = arith.constant 16 : index
      %130 = memref.load %arg2[%c16_142] : memref<98xf32, #tpu.memory_space<smem>>
      %c17_143 = arith.constant 17 : index
      %131 = memref.load %arg2[%c17_143] : memref<98xf32, #tpu.memory_space<smem>>
      %c18_144 = arith.constant 18 : index
      %132 = memref.load %arg2[%c18_144] : memref<98xf32, #tpu.memory_space<smem>>
      %c19 = arith.constant 19 : index
      %133 = memref.load %arg2[%c19] : memref<98xf32, #tpu.memory_space<smem>>
      %c20 = arith.constant 20 : index
      %134 = memref.load %arg2[%c20] : memref<98xf32, #tpu.memory_space<smem>>
      %c21 = arith.constant 21 : index
      %135 = memref.load %arg2[%c21] : memref<98xf32, #tpu.memory_space<smem>>
      %c22 = arith.constant 22 : index
      %136 = memref.load %arg2[%c22] : memref<98xf32, #tpu.memory_space<smem>>
      %c23 = arith.constant 23 : index
      %137 = memref.load %arg2[%c23] : memref<98xf32, #tpu.memory_space<smem>>
      %c24 = arith.constant 24 : index
      %138 = memref.load %arg2[%c24] : memref<98xf32, #tpu.memory_space<smem>>
      %c25 = arith.constant 25 : index
      %139 = memref.load %arg2[%c25] : memref<98xf32, #tpu.memory_space<smem>>
      %c26 = arith.constant 26 : index
      %140 = memref.load %arg2[%c26] : memref<98xf32, #tpu.memory_space<smem>>
      %c27 = arith.constant 27 : index
      %141 = memref.load %arg2[%c27] : memref<98xf32, #tpu.memory_space<smem>>
      %c28 = arith.constant 28 : index
      %142 = memref.load %arg2[%c28] : memref<98xf32, #tpu.memory_space<smem>>
      %c29 = arith.constant 29 : index
      %143 = memref.load %arg2[%c29] : memref<98xf32, #tpu.memory_space<smem>>
      %c30 = arith.constant 30 : index
      %144 = memref.load %arg2[%c30] : memref<98xf32, #tpu.memory_space<smem>>
      %c31 = arith.constant 31 : index
      %145 = memref.load %arg2[%c31] : memref<98xf32, #tpu.memory_space<smem>>
      %c32_145 = arith.constant 32 : index
      %146 = memref.load %arg2[%c32_145] : memref<98xf32, #tpu.memory_space<smem>>
      %c33 = arith.constant 33 : index
      %147 = memref.load %arg2[%c33] : memref<98xf32, #tpu.memory_space<smem>>
      %c34 = arith.constant 34 : index
      %148 = memref.load %arg2[%c34] : memref<98xf32, #tpu.memory_space<smem>>
      %c35 = arith.constant 35 : index
      %149 = memref.load %arg2[%c35] : memref<98xf32, #tpu.memory_space<smem>>
      %c36 = arith.constant 36 : index
      %150 = memref.load %arg2[%c36] : memref<98xf32, #tpu.memory_space<smem>>
      %c37 = arith.constant 37 : index
      %151 = memref.load %arg2[%c37] : memref<98xf32, #tpu.memory_space<smem>>
      %c38 = arith.constant 38 : index
      %152 = memref.load %arg2[%c38] : memref<98xf32, #tpu.memory_space<smem>>
      %c39 = arith.constant 39 : index
      %153 = memref.load %arg2[%c39] : memref<98xf32, #tpu.memory_space<smem>>
      %c40 = arith.constant 40 : index
      %154 = memref.load %arg2[%c40] : memref<98xf32, #tpu.memory_space<smem>>
      %c41 = arith.constant 41 : index
      %155 = memref.load %arg2[%c41] : memref<98xf32, #tpu.memory_space<smem>>
      %c42 = arith.constant 42 : index
      %156 = memref.load %arg2[%c42] : memref<98xf32, #tpu.memory_space<smem>>
      %c43 = arith.constant 43 : index
      %157 = memref.load %arg2[%c43] : memref<98xf32, #tpu.memory_space<smem>>
      %c44 = arith.constant 44 : index
      %158 = memref.load %arg2[%c44] : memref<98xf32, #tpu.memory_space<smem>>
      %c45 = arith.constant 45 : index
      %159 = memref.load %arg2[%c45] : memref<98xf32, #tpu.memory_space<smem>>
      %c46 = arith.constant 46 : index
      %160 = memref.load %arg2[%c46] : memref<98xf32, #tpu.memory_space<smem>>
      %c47 = arith.constant 47 : index
      %161 = memref.load %arg2[%c47] : memref<98xf32, #tpu.memory_space<smem>>
      %c48_146 = arith.constant 48 : index
      %162 = memref.load %arg2[%c48_146] : memref<98xf32, #tpu.memory_space<smem>>
      %c49 = arith.constant 49 : index
      %163 = memref.load %arg2[%c49] : memref<98xf32, #tpu.memory_space<smem>>
      %c50 = arith.constant 50 : index
      %164 = memref.load %arg2[%c50] : memref<98xf32, #tpu.memory_space<smem>>
      %c51 = arith.constant 51 : index
      %165 = memref.load %arg2[%c51] : memref<98xf32, #tpu.memory_space<smem>>
      %c52 = arith.constant 52 : index
      %166 = memref.load %arg2[%c52] : memref<98xf32, #tpu.memory_space<smem>>
      %c53 = arith.constant 53 : index
      %167 = memref.load %arg2[%c53] : memref<98xf32, #tpu.memory_space<smem>>
      %c54 = arith.constant 54 : index
      %168 = memref.load %arg2[%c54] : memref<98xf32, #tpu.memory_space<smem>>
      %c55 = arith.constant 55 : index
      %169 = memref.load %arg2[%c55] : memref<98xf32, #tpu.memory_space<smem>>
      %c56 = arith.constant 56 : index
      %170 = memref.load %arg2[%c56] : memref<98xf32, #tpu.memory_space<smem>>
      %c57 = arith.constant 57 : index
      %171 = memref.load %arg2[%c57] : memref<98xf32, #tpu.memory_space<smem>>
      %c58 = arith.constant 58 : index
      %172 = memref.load %arg2[%c58] : memref<98xf32, #tpu.memory_space<smem>>
      %c59 = arith.constant 59 : index
      %173 = memref.load %arg2[%c59] : memref<98xf32, #tpu.memory_space<smem>>
      %c60 = arith.constant 60 : index
      %174 = memref.load %arg2[%c60] : memref<98xf32, #tpu.memory_space<smem>>
      %c61 = arith.constant 61 : index
      %175 = memref.load %arg2[%c61] : memref<98xf32, #tpu.memory_space<smem>>
      %c62 = arith.constant 62 : index
      %176 = memref.load %arg2[%c62] : memref<98xf32, #tpu.memory_space<smem>>
      %c63 = arith.constant 63 : index
      %177 = memref.load %arg2[%c63] : memref<98xf32, #tpu.memory_space<smem>>
      %c64_147 = arith.constant 64 : index
      %178 = memref.load %arg2[%c64_147] : memref<98xf32, #tpu.memory_space<smem>>
      %c65 = arith.constant 65 : index
      %179 = memref.load %arg2[%c65] : memref<98xf32, #tpu.memory_space<smem>>
      %c66 = arith.constant 66 : index
      %180 = memref.load %arg2[%c66] : memref<98xf32, #tpu.memory_space<smem>>
      %c67 = arith.constant 67 : index
      %181 = memref.load %arg2[%c67] : memref<98xf32, #tpu.memory_space<smem>>
      %c68 = arith.constant 68 : index
      %182 = memref.load %arg2[%c68] : memref<98xf32, #tpu.memory_space<smem>>
      %c69 = arith.constant 69 : index
      %183 = memref.load %arg2[%c69] : memref<98xf32, #tpu.memory_space<smem>>
      %c70 = arith.constant 70 : index
      %184 = memref.load %arg2[%c70] : memref<98xf32, #tpu.memory_space<smem>>
      %c71 = arith.constant 71 : index
      %185 = memref.load %arg2[%c71] : memref<98xf32, #tpu.memory_space<smem>>
      %c72 = arith.constant 72 : index
      %186 = memref.load %arg2[%c72] : memref<98xf32, #tpu.memory_space<smem>>
      %c73 = arith.constant 73 : index
      %187 = memref.load %arg2[%c73] : memref<98xf32, #tpu.memory_space<smem>>
      %c74 = arith.constant 74 : index
      %188 = memref.load %arg2[%c74] : memref<98xf32, #tpu.memory_space<smem>>
      %c75 = arith.constant 75 : index
      %189 = memref.load %arg2[%c75] : memref<98xf32, #tpu.memory_space<smem>>
      %c76 = arith.constant 76 : index
      %190 = memref.load %arg2[%c76] : memref<98xf32, #tpu.memory_space<smem>>
      %c77 = arith.constant 77 : index
      %191 = memref.load %arg2[%c77] : memref<98xf32, #tpu.memory_space<smem>>
      %c78 = arith.constant 78 : index
      %192 = memref.load %arg2[%c78] : memref<98xf32, #tpu.memory_space<smem>>
      %c79 = arith.constant 79 : index
      %193 = memref.load %arg2[%c79] : memref<98xf32, #tpu.memory_space<smem>>
      %c80_148 = arith.constant 80 : index
      %194 = memref.load %arg2[%c80_148] : memref<98xf32, #tpu.memory_space<smem>>
      %c81 = arith.constant 81 : index
      %195 = memref.load %arg2[%c81] : memref<98xf32, #tpu.memory_space<smem>>
      %c82 = arith.constant 82 : index
      %196 = memref.load %arg2[%c82] : memref<98xf32, #tpu.memory_space<smem>>
      %c83 = arith.constant 83 : index
      %197 = memref.load %arg2[%c83] : memref<98xf32, #tpu.memory_space<smem>>
      %c84 = arith.constant 84 : index
      %198 = memref.load %arg2[%c84] : memref<98xf32, #tpu.memory_space<smem>>
      %c85 = arith.constant 85 : index
      %199 = memref.load %arg2[%c85] : memref<98xf32, #tpu.memory_space<smem>>
      %c86 = arith.constant 86 : index
      %200 = memref.load %arg2[%c86] : memref<98xf32, #tpu.memory_space<smem>>
      %c87 = arith.constant 87 : index
      %201 = memref.load %arg2[%c87] : memref<98xf32, #tpu.memory_space<smem>>
      %c88 = arith.constant 88 : index
      %202 = memref.load %arg2[%c88] : memref<98xf32, #tpu.memory_space<smem>>
      %c89 = arith.constant 89 : index
      %203 = memref.load %arg2[%c89] : memref<98xf32, #tpu.memory_space<smem>>
      %c90 = arith.constant 90 : index
      %204 = memref.load %arg2[%c90] : memref<98xf32, #tpu.memory_space<smem>>
      %c91 = arith.constant 91 : index
      %205 = memref.load %arg2[%c91] : memref<98xf32, #tpu.memory_space<smem>>
      %c92 = arith.constant 92 : index
      %206 = memref.load %arg2[%c92] : memref<98xf32, #tpu.memory_space<smem>>
      %c93 = arith.constant 93 : index
      %207 = memref.load %arg2[%c93] : memref<98xf32, #tpu.memory_space<smem>>
      %c94 = arith.constant 94 : index
      %208 = memref.load %arg2[%c94] : memref<98xf32, #tpu.memory_space<smem>>
      %c95 = arith.constant 95 : index
      %209 = memref.load %arg2[%c95] : memref<98xf32, #tpu.memory_space<smem>>
      %c96_149 = arith.constant 96 : index
      %210 = memref.load %arg2[%c96_149] : memref<98xf32, #tpu.memory_space<smem>>
      %c97 = arith.constant 97 : index
      %211 = memref.load %arg2[%c97] : memref<98xf32, #tpu.memory_space<smem>>
      %cst_150 = arith.constant 0.000000e+00 : f32
      %212 = vector.broadcast %cst_150 : f32 to vector<16x16xf32>
      %cst_151 = arith.constant 0.000000e+00 : f32
      %213 = vector.broadcast %cst_151 : f32 to vector<16x16xf32>
      %cst_152 = arith.constant 0.000000e+00 : f32
      %214 = vector.broadcast %cst_152 : f32 to vector<16x16xf32>
      %cst_153 = arith.constant 0.000000e+00 : f32
      %215 = vector.broadcast %cst_153 : f32 to vector<16x16xf32>
      %c0_154 = arith.constant 0 : index
      %c0_155 = arith.constant 0 : index
      %216 = vector.load %arg7[%c0_154, %c0_155] : memref<22x22xf32, #tpu.memory_space<vmem>>, vector<22x16xf32>
      %217 = vector.extract_strided_slice %216 {offsets = [0, 0], sizes = [16, 16], strides = [1, 1]} : vector<22x16xf32> to vector<16x16xf32>
      %218 = vector.broadcast %114 : f32 to vector<16x16xf32>
      %219 = arith.mulf %218, %217 : vector<16x16xf32>
      %220 = arith.addf %212, %219 : vector<16x16xf32>
      %221 = vector.extract_strided_slice %216 {offsets = [1, 0], sizes = [16, 16], strides = [1, 1]} : vector<22x16xf32> to vector<16x16xf32>
      %222 = vector.broadcast %121 : f32 to vector<16x16xf32>
      %223 = arith.mulf %222, %221 : vector<16x16xf32>
      %224 = arith.addf %213, %223 : vector<16x16xf32>
      %225 = vector.extract_strided_slice %216 {offsets = [2, 0], sizes = [16, 16], strides = [1, 1]} : vector<22x16xf32> to vector<16x16xf32>
      %226 = vector.broadcast %128 : f32 to vector<16x16xf32>
      %227 = arith.mulf %226, %225 : vector<16x16xf32>
      %228 = arith.addf %214, %227 : vector<16x16xf32>
      %229 = vector.extract_strided_slice %216 {offsets = [3, 0], sizes = [16, 16], strides = [1, 1]} : vector<22x16xf32> to vector<16x16xf32>
      %230 = vector.broadcast %135 : f32 to vector<16x16xf32>
      %231 = arith.mulf %230, %229 : vector<16x16xf32>
      %232 = arith.addf %215, %231 : vector<16x16xf32>
      %233 = vector.extract_strided_slice %216 {offsets = [4, 0], sizes = [16, 16], strides = [1, 1]} : vector<22x16xf32> to vector<16x16xf32>
      %234 = vector.broadcast %142 : f32 to vector<16x16xf32>
      %235 = arith.mulf %234, %233 : vector<16x16xf32>
      %236 = arith.addf %220, %235 : vector<16x16xf32>
      %237 = vector.extract_strided_slice %216 {offsets = [5, 0], sizes = [16, 16], strides = [1, 1]} : vector<22x16xf32> to vector<16x16xf32>
      %238 = vector.broadcast %149 : f32 to vector<16x16xf32>
      %239 = arith.mulf %238, %237 : vector<16x16xf32>
      %240 = arith.addf %224, %239 : vector<16x16xf32>
      %241 = vector.extract_strided_slice %216 {offsets = [6, 0], sizes = [16, 16], strides = [1, 1]} : vector<22x16xf32> to vector<16x16xf32>
      %242 = vector.broadcast %156 : f32 to vector<16x16xf32>
      %243 = arith.mulf %242, %241 : vector<16x16xf32>
      %244 = arith.addf %228, %243 : vector<16x16xf32>
      %c0_156 = arith.constant 0 : index
      %c1_157 = arith.constant 1 : index
      %245 = vector.load %arg7[%c0_156, %c1_157] : memref<22x22xf32, #tpu.memory_space<vmem>>, vector<22x16xf32>
      %246 = vector.extract_strided_slice %245 {offsets = [0, 0], sizes = [16, 16], strides = [1, 1]} : vector<22x16xf32> to vector<16x16xf32>
      %247 = vector.broadcast %115 : f32 to vector<16x16xf32>
      %248 = arith.mulf %247, %246 : vector<16x16xf32>
      %249 = arith.addf %232, %248 : vector<16x16xf32>
      %250 = vector.extract_strided_slice %245 {offsets = [1, 0], sizes = [16, 16], strides = [1, 1]} : vector<22x16xf32> to vector<16x16xf32>
      %251 = vector.broadcast %122 : f32 to vector<16x16xf32>
      %252 = arith.mulf %251, %250 : vector<16x16xf32>
      %253 = arith.addf %236, %252 : vector<16x16xf32>
      %254 = vector.extract_strided_slice %245 {offsets = [2, 0], sizes = [16, 16], strides = [1, 1]} : vector<22x16xf32> to vector<16x16xf32>
      %255 = vector.broadcast %129 : f32 to vector<16x16xf32>
      %256 = arith.mulf %255, %254 : vector<16x16xf32>
      %257 = arith.addf %240, %256 : vector<16x16xf32>
      %258 = vector.extract_strided_slice %245 {offsets = [3, 0], sizes = [16, 16], strides = [1, 1]} : vector<22x16xf32> to vector<16x16xf32>
      %259 = vector.broadcast %136 : f32 to vector<16x16xf32>
      %260 = arith.mulf %259, %258 : vector<16x16xf32>
      %261 = arith.addf %244, %260 : vector<16x16xf32>
      %262 = vector.extract_strided_slice %245 {offsets = [4, 0], sizes = [16, 16], strides = [1, 1]} : vector<22x16xf32> to vector<16x16xf32>
      %263 = vector.broadcast %143 : f32 to vector<16x16xf32>
      %264 = arith.mulf %263, %262 : vector<16x16xf32>
      %265 = arith.addf %249, %264 : vector<16x16xf32>
      %266 = vector.extract_strided_slice %245 {offsets = [5, 0], sizes = [16, 16], strides = [1, 1]} : vector<22x16xf32> to vector<16x16xf32>
      %267 = vector.broadcast %150 : f32 to vector<16x16xf32>
      %268 = arith.mulf %267, %266 : vector<16x16xf32>
      %269 = arith.addf %253, %268 : vector<16x16xf32>
      %270 = vector.extract_strided_slice %245 {offsets = [6, 0], sizes = [16, 16], strides = [1, 1]} : vector<22x16xf32> to vector<16x16xf32>
      %271 = vector.broadcast %157 : f32 to vector<16x16xf32>
      %272 = arith.mulf %271, %270 : vector<16x16xf32>
      %273 = arith.addf %257, %272 : vector<16x16xf32>
      %c0_158 = arith.constant 0 : index
      %c2_159 = arith.constant 2 : index
      %274 = vector.load %arg7[%c0_158, %c2_159] : memref<22x22xf32, #tpu.memory_space<vmem>>, vector<22x16xf32>
      %275 = vector.extract_strided_slice %274 {offsets = [0, 0], sizes = [16, 16], strides = [1, 1]} : vector<22x16xf32> to vector<16x16xf32>
      %276 = vector.broadcast %116 : f32 to vector<16x16xf32>
      %277 = arith.mulf %276, %275 : vector<16x16xf32>
      %278 = arith.addf %261, %277 : vector<16x16xf32>
      %279 = vector.extract_strided_slice %274 {offsets = [1, 0], sizes = [16, 16], strides = [1, 1]} : vector<22x16xf32> to vector<16x16xf32>
      %280 = vector.broadcast %123 : f32 to vector<16x16xf32>
      %281 = arith.mulf %280, %279 : vector<16x16xf32>
      %282 = arith.addf %265, %281 : vector<16x16xf32>
      %283 = vector.extract_strided_slice %274 {offsets = [2, 0], sizes = [16, 16], strides = [1, 1]} : vector<22x16xf32> to vector<16x16xf32>
      %284 = vector.broadcast %130 : f32 to vector<16x16xf32>
      %285 = arith.mulf %284, %283 : vector<16x16xf32>
      %286 = arith.addf %269, %285 : vector<16x16xf32>
      %287 = vector.extract_strided_slice %274 {offsets = [3, 0], sizes = [16, 16], strides = [1, 1]} : vector<22x16xf32> to vector<16x16xf32>
      %288 = vector.broadcast %137 : f32 to vector<16x16xf32>
      %289 = arith.mulf %288, %287 : vector<16x16xf32>
      %290 = arith.addf %273, %289 : vector<16x16xf32>
      %291 = vector.extract_strided_slice %274 {offsets = [4, 0], sizes = [16, 16], strides = [1, 1]} : vector<22x16xf32> to vector<16x16xf32>
      %292 = vector.broadcast %144 : f32 to vector<16x16xf32>
      %293 = arith.mulf %292, %291 : vector<16x16xf32>
      %294 = arith.addf %278, %293 : vector<16x16xf32>
      %295 = vector.extract_strided_slice %274 {offsets = [5, 0], sizes = [16, 16], strides = [1, 1]} : vector<22x16xf32> to vector<16x16xf32>
      %296 = vector.broadcast %151 : f32 to vector<16x16xf32>
      %297 = arith.mulf %296, %295 : vector<16x16xf32>
      %298 = arith.addf %282, %297 : vector<16x16xf32>
      %299 = vector.extract_strided_slice %274 {offsets = [6, 0], sizes = [16, 16], strides = [1, 1]} : vector<22x16xf32> to vector<16x16xf32>
      %300 = vector.broadcast %158 : f32 to vector<16x16xf32>
      %301 = arith.mulf %300, %299 : vector<16x16xf32>
      %302 = arith.addf %286, %301 : vector<16x16xf32>
      %c0_160 = arith.constant 0 : index
      %c3_161 = arith.constant 3 : index
      %303 = vector.load %arg7[%c0_160, %c3_161] : memref<22x22xf32, #tpu.memory_space<vmem>>, vector<22x16xf32>
      %304 = vector.extract_strided_slice %303 {offsets = [0, 0], sizes = [16, 16], strides = [1, 1]} : vector<22x16xf32> to vector<16x16xf32>
      %305 = vector.broadcast %117 : f32 to vector<16x16xf32>
      %306 = arith.mulf %305, %304 : vector<16x16xf32>
      %307 = arith.addf %290, %306 : vector<16x16xf32>
      %308 = vector.extract_strided_slice %303 {offsets = [1, 0], sizes = [16, 16], strides = [1, 1]} : vector<22x16xf32> to vector<16x16xf32>
      %309 = vector.broadcast %124 : f32 to vector<16x16xf32>
      %310 = arith.mulf %309, %308 : vector<16x16xf32>
      %311 = arith.addf %294, %310 : vector<16x16xf32>
      %312 = vector.extract_strided_slice %303 {offsets = [2, 0], sizes = [16, 16], strides = [1, 1]} : vector<22x16xf32> to vector<16x16xf32>
      %313 = vector.broadcast %131 : f32 to vector<16x16xf32>
      %314 = arith.mulf %313, %312 : vector<16x16xf32>
      %315 = arith.addf %298, %314 : vector<16x16xf32>
      %316 = vector.extract_strided_slice %303 {offsets = [3, 0], sizes = [16, 16], strides = [1, 1]} : vector<22x16xf32> to vector<16x16xf32>
      %317 = vector.broadcast %138 : f32 to vector<16x16xf32>
      %318 = arith.mulf %317, %316 : vector<16x16xf32>
      %319 = arith.addf %302, %318 : vector<16x16xf32>
      %320 = vector.extract_strided_slice %303 {offsets = [4, 0], sizes = [16, 16], strides = [1, 1]} : vector<22x16xf32> to vector<16x16xf32>
      %321 = vector.broadcast %145 : f32 to vector<16x16xf32>
      %322 = arith.mulf %321, %320 : vector<16x16xf32>
      %323 = arith.addf %307, %322 : vector<16x16xf32>
      %324 = vector.extract_strided_slice %303 {offsets = [5, 0], sizes = [16, 16], strides = [1, 1]} : vector<22x16xf32> to vector<16x16xf32>
      %325 = vector.broadcast %152 : f32 to vector<16x16xf32>
      %326 = arith.mulf %325, %324 : vector<16x16xf32>
      %327 = arith.addf %311, %326 : vector<16x16xf32>
      %328 = vector.extract_strided_slice %303 {offsets = [6, 0], sizes = [16, 16], strides = [1, 1]} : vector<22x16xf32> to vector<16x16xf32>
      %329 = vector.broadcast %159 : f32 to vector<16x16xf32>
      %330 = arith.mulf %329, %328 : vector<16x16xf32>
      %331 = arith.addf %315, %330 : vector<16x16xf32>
      %c0_162 = arith.constant 0 : index
      %c4_163 = arith.constant 4 : index
      %332 = vector.load %arg7[%c0_162, %c4_163] : memref<22x22xf32, #tpu.memory_space<vmem>>, vector<22x16xf32>
      %333 = vector.extract_strided_slice %332 {offsets = [0, 0], sizes = [16, 16], strides = [1, 1]} : vector<22x16xf32> to vector<16x16xf32>
      %334 = vector.broadcast %118 : f32 to vector<16x16xf32>
      %335 = arith.mulf %334, %333 : vector<16x16xf32>
      %336 = arith.addf %319, %335 : vector<16x16xf32>
      %337 = vector.extract_strided_slice %332 {offsets = [1, 0], sizes = [16, 16], strides = [1, 1]} : vector<22x16xf32> to vector<16x16xf32>
      %338 = vector.broadcast %125 : f32 to vector<16x16xf32>
      %339 = arith.mulf %338, %337 : vector<16x16xf32>
      %340 = arith.addf %323, %339 : vector<16x16xf32>
      %341 = vector.extract_strided_slice %332 {offsets = [2, 0], sizes = [16, 16], strides = [1, 1]} : vector<22x16xf32> to vector<16x16xf32>
      %342 = vector.broadcast %132 : f32 to vector<16x16xf32>
      %343 = arith.mulf %342, %341 : vector<16x16xf32>
      %344 = arith.addf %327, %343 : vector<16x16xf32>
      %345 = vector.extract_strided_slice %332 {offsets = [3, 0], sizes = [16, 16], strides = [1, 1]} : vector<22x16xf32> to vector<16x16xf32>
      %346 = vector.broadcast %139 : f32 to vector<16x16xf32>
      %347 = arith.mulf %346, %345 : vector<16x16xf32>
      %348 = arith.addf %331, %347 : vector<16x16xf32>
      %349 = vector.extract_strided_slice %332 {offsets = [4, 0], sizes = [16, 16], strides = [1, 1]} : vector<22x16xf32> to vector<16x16xf32>
      %350 = vector.broadcast %146 : f32 to vector<16x16xf32>
      %351 = arith.mulf %350, %349 : vector<16x16xf32>
      %352 = arith.addf %336, %351 : vector<16x16xf32>
      %353 = vector.extract_strided_slice %332 {offsets = [5, 0], sizes = [16, 16], strides = [1, 1]} : vector<22x16xf32> to vector<16x16xf32>
      %354 = vector.broadcast %153 : f32 to vector<16x16xf32>
      %355 = arith.mulf %354, %353 : vector<16x16xf32>
      %356 = arith.addf %340, %355 : vector<16x16xf32>
      %357 = vector.extract_strided_slice %332 {offsets = [6, 0], sizes = [16, 16], strides = [1, 1]} : vector<22x16xf32> to vector<16x16xf32>
      %358 = vector.broadcast %160 : f32 to vector<16x16xf32>
      %359 = arith.mulf %358, %357 : vector<16x16xf32>
      %360 = arith.addf %344, %359 : vector<16x16xf32>
      %c0_164 = arith.constant 0 : index
      %c5_165 = arith.constant 5 : index
      %361 = vector.load %arg7[%c0_164, %c5_165] : memref<22x22xf32, #tpu.memory_space<vmem>>, vector<22x16xf32>
      %362 = vector.extract_strided_slice %361 {offsets = [0, 0], sizes = [16, 16], strides = [1, 1]} : vector<22x16xf32> to vector<16x16xf32>
      %363 = vector.broadcast %119 : f32 to vector<16x16xf32>
      %364 = arith.mulf %363, %362 : vector<16x16xf32>
      %365 = arith.addf %348, %364 : vector<16x16xf32>
      %366 = vector.extract_strided_slice %361 {offsets = [1, 0], sizes = [16, 16], strides = [1, 1]} : vector<22x16xf32> to vector<16x16xf32>
      %367 = vector.broadcast %126 : f32 to vector<16x16xf32>
      %368 = arith.mulf %367, %366 : vector<16x16xf32>
      %369 = arith.addf %352, %368 : vector<16x16xf32>
      %370 = vector.extract_strided_slice %361 {offsets = [2, 0], sizes = [16, 16], strides = [1, 1]} : vector<22x16xf32> to vector<16x16xf32>
      %371 = vector.broadcast %133 : f32 to vector<16x16xf32>
      %372 = arith.mulf %371, %370 : vector<16x16xf32>
      %373 = arith.addf %356, %372 : vector<16x16xf32>
      %374 = vector.extract_strided_slice %361 {offsets = [3, 0], sizes = [16, 16], strides = [1, 1]} : vector<22x16xf32> to vector<16x16xf32>
      %375 = vector.broadcast %140 : f32 to vector<16x16xf32>
      %376 = arith.mulf %375, %374 : vector<16x16xf32>
      %377 = arith.addf %360, %376 : vector<16x16xf32>
      %378 = vector.extract_strided_slice %361 {offsets = [4, 0], sizes = [16, 16], strides = [1, 1]} : vector<22x16xf32> to vector<16x16xf32>
      %379 = vector.broadcast %147 : f32 to vector<16x16xf32>
      %380 = arith.mulf %379, %378 : vector<16x16xf32>
      %381 = arith.addf %365, %380 : vector<16x16xf32>
      %382 = vector.extract_strided_slice %361 {offsets = [5, 0], sizes = [16, 16], strides = [1, 1]} : vector<22x16xf32> to vector<16x16xf32>
      %383 = vector.broadcast %154 : f32 to vector<16x16xf32>
      %384 = arith.mulf %383, %382 : vector<16x16xf32>
      %385 = arith.addf %369, %384 : vector<16x16xf32>
      %386 = vector.extract_strided_slice %361 {offsets = [6, 0], sizes = [16, 16], strides = [1, 1]} : vector<22x16xf32> to vector<16x16xf32>
      %387 = vector.broadcast %161 : f32 to vector<16x16xf32>
      %388 = arith.mulf %387, %386 : vector<16x16xf32>
      %389 = arith.addf %373, %388 : vector<16x16xf32>
      %c0_166 = arith.constant 0 : index
      %c6_167 = arith.constant 6 : index
      %390 = vector.load %arg7[%c0_166, %c6_167] : memref<22x22xf32, #tpu.memory_space<vmem>>, vector<22x16xf32>
      %391 = vector.extract_strided_slice %390 {offsets = [0, 0], sizes = [16, 16], strides = [1, 1]} : vector<22x16xf32> to vector<16x16xf32>
      %392 = vector.broadcast %120 : f32 to vector<16x16xf32>
      %393 = arith.mulf %392, %391 : vector<16x16xf32>
      %394 = arith.addf %377, %393 : vector<16x16xf32>
      %395 = vector.extract_strided_slice %390 {offsets = [1, 0], sizes = [16, 16], strides = [1, 1]} : vector<22x16xf32> to vector<16x16xf32>
      %396 = vector.broadcast %127 : f32 to vector<16x16xf32>
      %397 = arith.mulf %396, %395 : vector<16x16xf32>
      %398 = arith.addf %381, %397 : vector<16x16xf32>
      %399 = vector.extract_strided_slice %390 {offsets = [2, 0], sizes = [16, 16], strides = [1, 1]} : vector<22x16xf32> to vector<16x16xf32>
      %400 = vector.broadcast %134 : f32 to vector<16x16xf32>
      %401 = arith.mulf %400, %399 : vector<16x16xf32>
      %402 = arith.addf %385, %401 : vector<16x16xf32>
      %403 = vector.extract_strided_slice %390 {offsets = [3, 0], sizes = [16, 16], strides = [1, 1]} : vector<22x16xf32> to vector<16x16xf32>
      %404 = vector.broadcast %141 : f32 to vector<16x16xf32>
      %405 = arith.mulf %404, %403 : vector<16x16xf32>
      %406 = arith.addf %389, %405 : vector<16x16xf32>
      %407 = vector.extract_strided_slice %390 {offsets = [4, 0], sizes = [16, 16], strides = [1, 1]} : vector<22x16xf32> to vector<16x16xf32>
      %408 = vector.broadcast %148 : f32 to vector<16x16xf32>
      %409 = arith.mulf %408, %407 : vector<16x16xf32>
      %410 = arith.addf %394, %409 : vector<16x16xf32>
      %411 = vector.extract_strided_slice %390 {offsets = [5, 0], sizes = [16, 16], strides = [1, 1]} : vector<22x16xf32> to vector<16x16xf32>
      %412 = vector.broadcast %155 : f32 to vector<16x16xf32>
      %413 = arith.mulf %412, %411 : vector<16x16xf32>
      %414 = arith.addf %398, %413 : vector<16x16xf32>
      %415 = vector.extract_strided_slice %390 {offsets = [6, 0], sizes = [16, 16], strides = [1, 1]} : vector<22x16xf32> to vector<16x16xf32>
      %416 = vector.broadcast %162 : f32 to vector<16x16xf32>
      %417 = arith.mulf %416, %415 : vector<16x16xf32>
      %418 = arith.addf %402, %417 : vector<16x16xf32>
      %c0_168 = arith.constant 0 : index
      %c0_169 = arith.constant 0 : index
      %419 = vector.load %arg8[%c0_168, %c0_169] : memref<22x22xf32, #tpu.memory_space<vmem>>, vector<22x16xf32>
      %420 = vector.extract_strided_slice %419 {offsets = [0, 0], sizes = [16, 16], strides = [1, 1]} : vector<22x16xf32> to vector<16x16xf32>
      %421 = vector.broadcast %163 : f32 to vector<16x16xf32>
      %422 = arith.mulf %421, %420 : vector<16x16xf32>
      %423 = arith.addf %406, %422 : vector<16x16xf32>
      %424 = vector.extract_strided_slice %419 {offsets = [1, 0], sizes = [16, 16], strides = [1, 1]} : vector<22x16xf32> to vector<16x16xf32>
      %425 = vector.broadcast %170 : f32 to vector<16x16xf32>
      %426 = arith.mulf %425, %424 : vector<16x16xf32>
      %427 = arith.addf %410, %426 : vector<16x16xf32>
      %428 = vector.extract_strided_slice %419 {offsets = [2, 0], sizes = [16, 16], strides = [1, 1]} : vector<22x16xf32> to vector<16x16xf32>
      %429 = vector.broadcast %177 : f32 to vector<16x16xf32>
      %430 = arith.mulf %429, %428 : vector<16x16xf32>
      %431 = arith.addf %414, %430 : vector<16x16xf32>
      %432 = vector.extract_strided_slice %419 {offsets = [3, 0], sizes = [16, 16], strides = [1, 1]} : vector<22x16xf32> to vector<16x16xf32>
      %433 = vector.broadcast %184 : f32 to vector<16x16xf32>
      %434 = arith.mulf %433, %432 : vector<16x16xf32>
      %435 = arith.addf %418, %434 : vector<16x16xf32>
      %436 = vector.extract_strided_slice %419 {offsets = [4, 0], sizes = [16, 16], strides = [1, 1]} : vector<22x16xf32> to vector<16x16xf32>
      %437 = vector.broadcast %191 : f32 to vector<16x16xf32>
      %438 = arith.mulf %437, %436 : vector<16x16xf32>
      %439 = arith.addf %423, %438 : vector<16x16xf32>
      %440 = vector.extract_strided_slice %419 {offsets = [5, 0], sizes = [16, 16], strides = [1, 1]} : vector<22x16xf32> to vector<16x16xf32>
      %441 = vector.broadcast %198 : f32 to vector<16x16xf32>
      %442 = arith.mulf %441, %440 : vector<16x16xf32>
      %443 = arith.addf %427, %442 : vector<16x16xf32>
      %444 = vector.extract_strided_slice %419 {offsets = [6, 0], sizes = [16, 16], strides = [1, 1]} : vector<22x16xf32> to vector<16x16xf32>
      %445 = vector.broadcast %205 : f32 to vector<16x16xf32>
      %446 = arith.mulf %445, %444 : vector<16x16xf32>
      %447 = arith.addf %431, %446 : vector<16x16xf32>
      %c0_170 = arith.constant 0 : index
      %c1_171 = arith.constant 1 : index
      %448 = vector.load %arg8[%c0_170, %c1_171] : memref<22x22xf32, #tpu.memory_space<vmem>>, vector<22x16xf32>
      %449 = vector.extract_strided_slice %448 {offsets = [0, 0], sizes = [16, 16], strides = [1, 1]} : vector<22x16xf32> to vector<16x16xf32>
      %450 = vector.broadcast %164 : f32 to vector<16x16xf32>
      %451 = arith.mulf %450, %449 : vector<16x16xf32>
      %452 = arith.addf %435, %451 : vector<16x16xf32>
      %453 = vector.extract_strided_slice %448 {offsets = [1, 0], sizes = [16, 16], strides = [1, 1]} : vector<22x16xf32> to vector<16x16xf32>
      %454 = vector.broadcast %171 : f32 to vector<16x16xf32>
      %455 = arith.mulf %454, %453 : vector<16x16xf32>
      %456 = arith.addf %439, %455 : vector<16x16xf32>
      %457 = vector.extract_strided_slice %448 {offsets = [2, 0], sizes = [16, 16], strides = [1, 1]} : vector<22x16xf32> to vector<16x16xf32>
      %458 = vector.broadcast %178 : f32 to vector<16x16xf32>
      %459 = arith.mulf %458, %457 : vector<16x16xf32>
      %460 = arith.addf %443, %459 : vector<16x16xf32>
      %461 = vector.extract_strided_slice %448 {offsets = [3, 0], sizes = [16, 16], strides = [1, 1]} : vector<22x16xf32> to vector<16x16xf32>
      %462 = vector.broadcast %185 : f32 to vector<16x16xf32>
      %463 = arith.mulf %462, %461 : vector<16x16xf32>
      %464 = arith.addf %447, %463 : vector<16x16xf32>
      %465 = vector.extract_strided_slice %448 {offsets = [4, 0], sizes = [16, 16], strides = [1, 1]} : vector<22x16xf32> to vector<16x16xf32>
      %466 = vector.broadcast %192 : f32 to vector<16x16xf32>
      %467 = arith.mulf %466, %465 : vector<16x16xf32>
      %468 = arith.addf %452, %467 : vector<16x16xf32>
      %469 = vector.extract_strided_slice %448 {offsets = [5, 0], sizes = [16, 16], strides = [1, 1]} : vector<22x16xf32> to vector<16x16xf32>
      %470 = vector.broadcast %199 : f32 to vector<16x16xf32>
      %471 = arith.mulf %470, %469 : vector<16x16xf32>
      %472 = arith.addf %456, %471 : vector<16x16xf32>
      %473 = vector.extract_strided_slice %448 {offsets = [6, 0], sizes = [16, 16], strides = [1, 1]} : vector<22x16xf32> to vector<16x16xf32>
      %474 = vector.broadcast %206 : f32 to vector<16x16xf32>
      %475 = arith.mulf %474, %473 : vector<16x16xf32>
      %476 = arith.addf %460, %475 : vector<16x16xf32>
      %c0_172 = arith.constant 0 : index
      %c2_173 = arith.constant 2 : index
      %477 = vector.load %arg8[%c0_172, %c2_173] : memref<22x22xf32, #tpu.memory_space<vmem>>, vector<22x16xf32>
      %478 = vector.extract_strided_slice %477 {offsets = [0, 0], sizes = [16, 16], strides = [1, 1]} : vector<22x16xf32> to vector<16x16xf32>
      %479 = vector.broadcast %165 : f32 to vector<16x16xf32>
      %480 = arith.mulf %479, %478 : vector<16x16xf32>
      %481 = arith.addf %464, %480 : vector<16x16xf32>
      %482 = vector.extract_strided_slice %477 {offsets = [1, 0], sizes = [16, 16], strides = [1, 1]} : vector<22x16xf32> to vector<16x16xf32>
      %483 = vector.broadcast %172 : f32 to vector<16x16xf32>
      %484 = arith.mulf %483, %482 : vector<16x16xf32>
      %485 = arith.addf %468, %484 : vector<16x16xf32>
      %486 = vector.extract_strided_slice %477 {offsets = [2, 0], sizes = [16, 16], strides = [1, 1]} : vector<22x16xf32> to vector<16x16xf32>
      %487 = vector.broadcast %179 : f32 to vector<16x16xf32>
      %488 = arith.mulf %487, %486 : vector<16x16xf32>
      %489 = arith.addf %472, %488 : vector<16x16xf32>
      %490 = vector.extract_strided_slice %477 {offsets = [3, 0], sizes = [16, 16], strides = [1, 1]} : vector<22x16xf32> to vector<16x16xf32>
      %491 = vector.broadcast %186 : f32 to vector<16x16xf32>
      %492 = arith.mulf %491, %490 : vector<16x16xf32>
      %493 = arith.addf %476, %492 : vector<16x16xf32>
      %494 = vector.extract_strided_slice %477 {offsets = [4, 0], sizes = [16, 16], strides = [1, 1]} : vector<22x16xf32> to vector<16x16xf32>
      %495 = vector.broadcast %193 : f32 to vector<16x16xf32>
      %496 = arith.mulf %495, %494 : vector<16x16xf32>
      %497 = arith.addf %481, %496 : vector<16x16xf32>
      %498 = vector.extract_strided_slice %477 {offsets = [5, 0], sizes = [16, 16], strides = [1, 1]} : vector<22x16xf32> to vector<16x16xf32>
      %499 = vector.broadcast %200 : f32 to vector<16x16xf32>
      %500 = arith.mulf %499, %498 : vector<16x16xf32>
      %501 = arith.addf %485, %500 : vector<16x16xf32>
      %502 = vector.extract_strided_slice %477 {offsets = [6, 0], sizes = [16, 16], strides = [1, 1]} : vector<22x16xf32> to vector<16x16xf32>
      %503 = vector.broadcast %207 : f32 to vector<16x16xf32>
      %504 = arith.mulf %503, %502 : vector<16x16xf32>
      %505 = arith.addf %489, %504 : vector<16x16xf32>
      %c0_174 = arith.constant 0 : index
      %c3_175 = arith.constant 3 : index
      %506 = vector.load %arg8[%c0_174, %c3_175] : memref<22x22xf32, #tpu.memory_space<vmem>>, vector<22x16xf32>
      %507 = vector.extract_strided_slice %506 {offsets = [0, 0], sizes = [16, 16], strides = [1, 1]} : vector<22x16xf32> to vector<16x16xf32>
      %508 = vector.broadcast %166 : f32 to vector<16x16xf32>
      %509 = arith.mulf %508, %507 : vector<16x16xf32>
      %510 = arith.addf %493, %509 : vector<16x16xf32>
      %511 = vector.extract_strided_slice %506 {offsets = [1, 0], sizes = [16, 16], strides = [1, 1]} : vector<22x16xf32> to vector<16x16xf32>
      %512 = vector.broadcast %173 : f32 to vector<16x16xf32>
      %513 = arith.mulf %512, %511 : vector<16x16xf32>
      %514 = arith.addf %497, %513 : vector<16x16xf32>
      %515 = vector.extract_strided_slice %506 {offsets = [2, 0], sizes = [16, 16], strides = [1, 1]} : vector<22x16xf32> to vector<16x16xf32>
      %516 = vector.broadcast %180 : f32 to vector<16x16xf32>
      %517 = arith.mulf %516, %515 : vector<16x16xf32>
      %518 = arith.addf %501, %517 : vector<16x16xf32>
      %519 = vector.extract_strided_slice %506 {offsets = [3, 0], sizes = [16, 16], strides = [1, 1]} : vector<22x16xf32> to vector<16x16xf32>
      %520 = vector.broadcast %187 : f32 to vector<16x16xf32>
      %521 = arith.mulf %520, %519 : vector<16x16xf32>
      %522 = arith.addf %505, %521 : vector<16x16xf32>
      %523 = vector.extract_strided_slice %506 {offsets = [4, 0], sizes = [16, 16], strides = [1, 1]} : vector<22x16xf32> to vector<16x16xf32>
      %524 = vector.broadcast %194 : f32 to vector<16x16xf32>
      %525 = arith.mulf %524, %523 : vector<16x16xf32>
      %526 = arith.addf %510, %525 : vector<16x16xf32>
      %527 = vector.extract_strided_slice %506 {offsets = [5, 0], sizes = [16, 16], strides = [1, 1]} : vector<22x16xf32> to vector<16x16xf32>
      %528 = vector.broadcast %201 : f32 to vector<16x16xf32>
      %529 = arith.mulf %528, %527 : vector<16x16xf32>
      %530 = arith.addf %514, %529 : vector<16x16xf32>
      %531 = vector.extract_strided_slice %506 {offsets = [6, 0], sizes = [16, 16], strides = [1, 1]} : vector<22x16xf32> to vector<16x16xf32>
      %532 = vector.broadcast %208 : f32 to vector<16x16xf32>
      %533 = arith.mulf %532, %531 : vector<16x16xf32>
      %534 = arith.addf %518, %533 : vector<16x16xf32>
      %c0_176 = arith.constant 0 : index
      %c4_177 = arith.constant 4 : index
      %535 = vector.load %arg8[%c0_176, %c4_177] : memref<22x22xf32, #tpu.memory_space<vmem>>, vector<22x16xf32>
      %536 = vector.extract_strided_slice %535 {offsets = [0, 0], sizes = [16, 16], strides = [1, 1]} : vector<22x16xf32> to vector<16x16xf32>
      %537 = vector.broadcast %167 : f32 to vector<16x16xf32>
      %538 = arith.mulf %537, %536 : vector<16x16xf32>
      %539 = arith.addf %522, %538 : vector<16x16xf32>
      %540 = vector.extract_strided_slice %535 {offsets = [1, 0], sizes = [16, 16], strides = [1, 1]} : vector<22x16xf32> to vector<16x16xf32>
      %541 = vector.broadcast %174 : f32 to vector<16x16xf32>
      %542 = arith.mulf %541, %540 : vector<16x16xf32>
      %543 = arith.addf %526, %542 : vector<16x16xf32>
      %544 = vector.extract_strided_slice %535 {offsets = [2, 0], sizes = [16, 16], strides = [1, 1]} : vector<22x16xf32> to vector<16x16xf32>
      %545 = vector.broadcast %181 : f32 to vector<16x16xf32>
      %546 = arith.mulf %545, %544 : vector<16x16xf32>
      %547 = arith.addf %530, %546 : vector<16x16xf32>
      %548 = vector.extract_strided_slice %535 {offsets = [3, 0], sizes = [16, 16], strides = [1, 1]} : vector<22x16xf32> to vector<16x16xf32>
      %549 = vector.broadcast %188 : f32 to vector<16x16xf32>
      %550 = arith.mulf %549, %548 : vector<16x16xf32>
      %551 = arith.addf %534, %550 : vector<16x16xf32>
      %552 = vector.extract_strided_slice %535 {offsets = [4, 0], sizes = [16, 16], strides = [1, 1]} : vector<22x16xf32> to vector<16x16xf32>
      %553 = vector.broadcast %195 : f32 to vector<16x16xf32>
      %554 = arith.mulf %553, %552 : vector<16x16xf32>
      %555 = arith.addf %539, %554 : vector<16x16xf32>
      %556 = vector.extract_strided_slice %535 {offsets = [5, 0], sizes = [16, 16], strides = [1, 1]} : vector<22x16xf32> to vector<16x16xf32>
      %557 = vector.broadcast %202 : f32 to vector<16x16xf32>
      %558 = arith.mulf %557, %556 : vector<16x16xf32>
      %559 = arith.addf %543, %558 : vector<16x16xf32>
      %560 = vector.extract_strided_slice %535 {offsets = [6, 0], sizes = [16, 16], strides = [1, 1]} : vector<22x16xf32> to vector<16x16xf32>
      %561 = vector.broadcast %209 : f32 to vector<16x16xf32>
      %562 = arith.mulf %561, %560 : vector<16x16xf32>
      %563 = arith.addf %547, %562 : vector<16x16xf32>
      %c0_178 = arith.constant 0 : index
      %c5_179 = arith.constant 5 : index
      %564 = vector.load %arg8[%c0_178, %c5_179] : memref<22x22xf32, #tpu.memory_space<vmem>>, vector<22x16xf32>
      %565 = vector.extract_strided_slice %564 {offsets = [0, 0], sizes = [16, 16], strides = [1, 1]} : vector<22x16xf32> to vector<16x16xf32>
      %566 = vector.broadcast %168 : f32 to vector<16x16xf32>
      %567 = arith.mulf %566, %565 : vector<16x16xf32>
      %568 = arith.addf %551, %567 : vector<16x16xf32>
      %569 = vector.extract_strided_slice %564 {offsets = [1, 0], sizes = [16, 16], strides = [1, 1]} : vector<22x16xf32> to vector<16x16xf32>
      %570 = vector.broadcast %175 : f32 to vector<16x16xf32>
      %571 = arith.mulf %570, %569 : vector<16x16xf32>
      %572 = arith.addf %555, %571 : vector<16x16xf32>
      %573 = vector.extract_strided_slice %564 {offsets = [2, 0], sizes = [16, 16], strides = [1, 1]} : vector<22x16xf32> to vector<16x16xf32>
      %574 = vector.broadcast %182 : f32 to vector<16x16xf32>
      %575 = arith.mulf %574, %573 : vector<16x16xf32>
      %576 = arith.addf %559, %575 : vector<16x16xf32>
      %577 = vector.extract_strided_slice %564 {offsets = [3, 0], sizes = [16, 16], strides = [1, 1]} : vector<22x16xf32> to vector<16x16xf32>
      %578 = vector.broadcast %189 : f32 to vector<16x16xf32>
      %579 = arith.mulf %578, %577 : vector<16x16xf32>
      %580 = arith.addf %563, %579 : vector<16x16xf32>
      %581 = vector.extract_strided_slice %564 {offsets = [4, 0], sizes = [16, 16], strides = [1, 1]} : vector<22x16xf32> to vector<16x16xf32>
      %582 = vector.broadcast %196 : f32 to vector<16x16xf32>
      %583 = arith.mulf %582, %581 : vector<16x16xf32>
      %584 = arith.addf %568, %583 : vector<16x16xf32>
      %585 = vector.extract_strided_slice %564 {offsets = [5, 0], sizes = [16, 16], strides = [1, 1]} : vector<22x16xf32> to vector<16x16xf32>
      %586 = vector.broadcast %203 : f32 to vector<16x16xf32>
      %587 = arith.mulf %586, %585 : vector<16x16xf32>
      %588 = arith.addf %572, %587 : vector<16x16xf32>
      %589 = vector.extract_strided_slice %564 {offsets = [6, 0], sizes = [16, 16], strides = [1, 1]} : vector<22x16xf32> to vector<16x16xf32>
      %590 = vector.broadcast %210 : f32 to vector<16x16xf32>
      %591 = arith.mulf %590, %589 : vector<16x16xf32>
      %592 = arith.addf %576, %591 : vector<16x16xf32>
      %c0_180 = arith.constant 0 : index
      %c6_181 = arith.constant 6 : index
      %593 = vector.load %arg8[%c0_180, %c6_181] : memref<22x22xf32, #tpu.memory_space<vmem>>, vector<22x16xf32>
      %594 = vector.extract_strided_slice %593 {offsets = [0, 0], sizes = [16, 16], strides = [1, 1]} : vector<22x16xf32> to vector<16x16xf32>
      %595 = vector.broadcast %169 : f32 to vector<16x16xf32>
      %596 = arith.mulf %595, %594 : vector<16x16xf32>
      %597 = arith.addf %580, %596 : vector<16x16xf32>
      %598 = vector.extract_strided_slice %593 {offsets = [1, 0], sizes = [16, 16], strides = [1, 1]} : vector<22x16xf32> to vector<16x16xf32>
      %599 = vector.broadcast %176 : f32 to vector<16x16xf32>
      %600 = arith.mulf %599, %598 : vector<16x16xf32>
      %601 = arith.addf %584, %600 : vector<16x16xf32>
      %602 = vector.extract_strided_slice %593 {offsets = [2, 0], sizes = [16, 16], strides = [1, 1]} : vector<22x16xf32> to vector<16x16xf32>
      %603 = vector.broadcast %183 : f32 to vector<16x16xf32>
      %604 = arith.mulf %603, %602 : vector<16x16xf32>
      %605 = arith.addf %588, %604 : vector<16x16xf32>
      %606 = vector.extract_strided_slice %593 {offsets = [3, 0], sizes = [16, 16], strides = [1, 1]} : vector<22x16xf32> to vector<16x16xf32>
      %607 = vector.broadcast %190 : f32 to vector<16x16xf32>
      %608 = arith.mulf %607, %606 : vector<16x16xf32>
      %609 = arith.addf %592, %608 : vector<16x16xf32>
      %610 = vector.extract_strided_slice %593 {offsets = [4, 0], sizes = [16, 16], strides = [1, 1]} : vector<22x16xf32> to vector<16x16xf32>
      %611 = vector.broadcast %197 : f32 to vector<16x16xf32>
      %612 = arith.mulf %611, %610 : vector<16x16xf32>
      %613 = arith.addf %597, %612 : vector<16x16xf32>
      %614 = vector.extract_strided_slice %593 {offsets = [5, 0], sizes = [16, 16], strides = [1, 1]} : vector<22x16xf32> to vector<16x16xf32>
      %615 = vector.broadcast %204 : f32 to vector<16x16xf32>
      %616 = arith.mulf %615, %614 : vector<16x16xf32>
      %617 = arith.addf %601, %616 : vector<16x16xf32>
      %618 = vector.extract_strided_slice %593 {offsets = [6, 0], sizes = [16, 16], strides = [1, 1]} : vector<22x16xf32> to vector<16x16xf32>
      %619 = vector.broadcast %211 : f32 to vector<16x16xf32>
      %620 = arith.mulf %619, %618 : vector<16x16xf32>
      %621 = arith.addf %605, %620 : vector<16x16xf32>
      %622 = arith.addf %617, %621 : vector<16x16xf32>
      %623 = arith.addf %609, %613 : vector<16x16xf32>
      %624 = arith.addf %622, %623 : vector<16x16xf32>
      %625 = arith.negf %624 : vector<16x16xf32>
      %626 = math.exp %625 : vector<16x16xf32>
      %cst_182 = arith.constant 1.000000e+00 : f32
      %627 = vector.broadcast %cst_182 : f32 to vector<16x16xf32>
      %628 = arith.addf %627, %626 : vector<16x16xf32>
      %629 = arith.divf %627, %628 : vector<16x16xf32>
      %c0_183 = arith.constant 0 : index
      %c0_184 = arith.constant 0 : index
      %c0_185 = arith.constant 0 : index
      %c0_186 = arith.constant 0 : index
      %630 = vector.load %arg4[%c0_183, %c0_184, %c0_185, %c0_186] : memref<1x1x16x16xf32, #tpu.memory_space<vmem>>, vector<1x1x16x16xf32>
      %631 = vector.shape_cast %630 : vector<1x1x16x16xf32> to vector<16x16xf32>
      %632 = vector.shape_cast %629 : vector<16x16xf32> to vector<1x1x16x16xf32>
      tpu.vector_store %arg4[%c0_183, %c0_184, %c0_185, %c0_186], %632 {strides = array<i32>} : memref<1x1x16x16xf32, #tpu.memory_space<vmem>>, vector<1x1x16x16xf32>,
    } else {
    }
    return
  }
  func.func @transform_0(%arg0: i32, %arg1: i32) -> i32 {
    %c0_i32 = arith.constant 0 : i32
    %c0_i32_0 = arith.constant 0 : i32
    return %c0_i32 : i32
  }
  func.func @transform_1(%arg0: i32, %arg1: i32) -> (i32, i32, i32) {
    %c0_i32 = arith.constant 0 : i32
    %c0_i32_0 = arith.constant 0 : i32
    return %arg0, %arg1, %c0_i32 : i32, i32, i32
  }
  func.func @transform_2(%arg0: i32, %arg1: i32) -> (i32, i32, i32, i32) {
    %c0_i32 = arith.constant 0 : i32
    %c0_i32_0 = arith.constant 0 : i32
    %c0_i32_1 = arith.constant 0 : i32
    %c0_i32_2 = arith.constant 0 : i32
    return %arg0, %c0_i32, %c0_i32_0, %c0_i32_1 : i32, i32, i32, i32
  }
}

</mosaic_0001>

<llo_original>
// kernel: tpu_custom_call.1
$region0: #{tpu_custom_call.1}
  #allocation0 [shape = 'u32[]', space=smem, size = 0x4, offset = 0x4, fixed_abs, tag = 'smem constant byte address 0x4 - core index']
  #allocation1 [shape = 'u32[72,128]{1,0:T(1,128)}', space=vmem, size = 0x9000, scoped, tag = 'internal scratch']
  #allocation2 [shape = 'f32[1,256]{1,0:T(1,128)}', space=vmem, size = 0x400, scoped, tag = 'scratch operand']
  #allocation3 [shape = 'f32[1,256]{1,0:T(1,128)}', space=vmem, size = 0x400, scoped, tag = 'scratch operand']
  #allocation4 [shape = 'f32[22,22]{1,0:T(8,128)}', space=vmem, size = 0x3000, scoped, tag = 'scratch operand']
  #allocation5 [shape = 'f32[22,22]{1,0:T(8,128)}', space=vmem, size = 0x3000, scoped, tag = 'scratch operand']
  %s0 = inlined_call_operand.hbm [shape: f32[98], index: 0, kind: input, shape index: {}]
  %s1 = inlined_call_operand.hbm [shape: f32[2,4,256], index: 1, kind: input, shape index: {}]
  %s2 = inlined_call_operand.hbm [shape: f32[2,1,16,16], index: 2, kind: output, shape index: {}]
  %s3 = sld [smem:[#allocation0]]
  $region57: #{tpu_custom_call.1} parent=0
    _
  %s5 = ssub.s32 1, %s3
  %s6 = scalar_select 0, %s5, %s3
  $region1: #{tpu_custom_call.1} parent=0
    #allocation6 [shape = 'u8[512]{0}', space=smem, size = 0x200, scoped, tag = 'input window, operand 0, single buffered']
    #allocation7 [shape = 's32[2]{0}', space=sflag, size = 0x8, scoped, tag = 'scoped memory for tpu_custom_call.1']
    #allocation8 [shape = 's32[2]{0}', space=sflag, size = 0x8, scoped, tag = 'scoped memory for tpu_custom_call.1']
    #allocation9 [shape = 's32[2]{0}', space=sflag, size = 0x8, scoped, tag = 'scoped memory for tpu_custom_call.1']
    #allocation10 [shape = 'u8[8192]{0}', space=vmem, size = 0x2000, scoped, tag = 'input window, operand 1']
    #allocation11 [shape = 'u8[16384]{0}', space=vmem, size = 0x4000, scoped, tag = 'output window, operand 0']
    %7 = vsyncpa [#allocation9], 0
    %8 = vsyncpa [#allocation7], 0
    %s9 = scalar_lea.sflag [#allocation7], 1
    %10 = vsyncpa %s9, 0
    %11 = vsyncpa [#allocation8], 0
    %s12 = scalar_lea.sflag [#allocation8], 1
    %13 = vsyncpa %s12, 0
    loop: start=0, step=1, limit=4
    $region2: #{tpu_custom_call.1} parent=1 // loop_pre_header
      _
    $region3: #{tpu_custom_call.1} parent=1 // loop_header
      %s15 = sphi 0, %s19
      %p16 = scmp.ge.s32.totalorder %s15, 4
      %s22 = sphi 0, %s34
      %s23 = sphi 0, %s30
      %s24 = sphi 0, %s22
      %s25 = sphi 0, %s23
      %s26 = sphi 0, %s24
      %s27 = sphi 0, %s25
      %s35 = sphi 0, %s35
      %s37 = sphi 0, %s35
      %s38 = sphi 0, %s37
      %s52 = sphi 0, %s38
      %s60 = sphi 0, %s62
      %s63 = sphi 0, %s60
      %s64 = sphi 0, %s63
      %s80 = sphi 0, %s64
      %s86 = sphi 0, %s88
      %s89 = sphi 0, %s86
      %s90 = sphi 0, %s89
      %s106 = sphi 0, %s90
    $region4: #{tpu_custom_call.1} parent=1 // loop_header_branch
      %18 = sbr.rel (%p16) target = $region8
    $region5: #{tpu_custom_call.1} parent=1 // loop_body
      %s20 = ssub.s32 %s15, 1
      %s21 = ssub.s32 %s15, 2
      %s28 = sadd.s32 1, %s23
      %p29 = scmp.ge.s32.totalorder %s28, 1
      %s30 = scalar_select %p29, 0, %s28
      %s31 = sadd.s32 1, %s22
      %s32 = scalar_select %p29, %s31, %s22
      %p33 = scmp.ge.s32.totalorder %s32, 2
      %s34 = scalar_select %p33, 0, %s32
      %s36 = sadd.s32 %s35, 1
      %p39 = scmp.eq.s32.totalorder %s15, 1
      %p40 = scmp.ne.s32.totalorder %s35, %s37
      %p41 = scmp.eq.s32.totalorder %s15, 0
      %p42 = por %p40, %p41
      %p43 = scmp.ne.s32.totalorder %s35, %s37
      %p44 = scmp.eq.s32.totalorder %s20, 1
      %p45 = por %p43, %p44
      %p46 = scmp.ne.s32.totalorder %s37, %s38
      %p47 = scmp.eq.s32.totalorder %s20, 0
      %p48 = por %p46, %p47
      %p49 = scmp.ne.s32.totalorder %s37, %s38
      %p50 = scmp.eq.s32.totalorder %s21, 1
      %p51 = por %p49, %p50
      %p53 = scmp.ne.s32.totalorder %s38, %s52
      %p54 = scmp.eq.s32.totalorder %s21, 0
      %p55 = por %p53, %p54
      %s56 = ssub.s32 %s22, %s34
      %s57 = ssub.s32 %s23, %s30
      %s58 = sor.u32 %s56, %s57
      %p59 = scmp.eq.s32.totalorder %s58, 0
      %s61 = sadd.s32 %s60, 1
      %s62 = scalar_select %p59, %s60, %s61
      %p65 = pneg %p59
      %p66 = scmp.eq.s32.totalorder %s15, 1
      %p67 = por %p65, %p66
      %p68 = scmp.ne.s32.totalorder %s60, %s63
      %p69 = scmp.eq.s32.totalorder %s15, 0
      %p70 = por %p68, %p69
      %p71 = scmp.ne.s32.totalorder %s60, %s63
      %p72 = scmp.eq.s32.totalorder %s20, 1
      %p73 = por %p71, %p72
      %p74 = scmp.ne.s32.totalorder %s63, %s64
      %p75 = scmp.eq.s32.totalorder %s20, 0
      %p76 = por %p74, %p75
      %p77 = scmp.ne.s32.totalorder %s63, %s64
      %p78 = scmp.eq.s32.totalorder %s21, 1
      %p79 = por %p77, %p78
      %p81 = scmp.ne.s32.totalorder %s64, %s80
      %p82 = scmp.eq.s32.totalorder %s21, 0
      %p83 = por %p81, %p82
      %s84 = ssub.s32 %s22, %s34
      %p85 = scmp.eq.s32.totalorder %s84, 0
      %s87 = sadd.s32 %s86, 1
      %s88 = scalar_select %p85, %s86, %s87
      %p91 = pneg %p85
      %p92 = scmp.eq.s32.totalorder %s15, 1
      %p93 = por %p91, %p92
      %p94 = scmp.ne.s32.totalorder %s86, %s89
      %p95 = scmp.eq.s32.totalorder %s15, 0
      %p96 = por %p94, %p95
      %p97 = scmp.ne.s32.totalorder %s86, %s89
      %p98 = scmp.eq.s32.totalorder %s20, 1
      %p99 = por %p97, %p98
      %p100 = scmp.ne.s32.totalorder %s89, %s90
      %p101 = scmp.eq.s32.totalorder %s20, 0
      %p102 = por %p100, %p101
      %p103 = scmp.ne.s32.totalorder %s89, %s90
      %p104 = scmp.eq.s32.totalorder %s21, 1
      %p105 = por %p103, %p104
      %p107 = scmp.ne.s32.totalorder %s90, %s106
      %p108 = scmp.eq.s32.totalorder %s21, 0
      %p109 = por %p107, %p108
      %p110 = scmp.le.s32.totalorder 1, %s15
      %p111 = scmp.lt.s32.totalorder %s15, 3
      %p112 = pnand %p110, %p111
      %p113 = pneg %p112
      // Predicated region
      $region9: #{tpu_custom_call.1} parent=5 // pred_check
        _
      $region10: #{tpu_custom_call.1} parent=5 // pred_check_branch
        %115 = sbr.rel (%p112) target = $region12
      $region11: #{tpu_custom_call.1} parent=5 // pred_region
        %s116 = ssub.s32 %s15, 1
        // Predicated region
        $region13: #{tpu_custom_call.1} parent=11 // pred_check
          %p117 = pneg %p48
        $region14: #{tpu_custom_call.1} parent=11 // pred_check_branch
          %119 = sbr.rel (%p117) target = $region16
        $region15: #{tpu_custom_call.1} parent=11 // pred_region
          %121 = vsyncadd [#allocation9], 0
          %s123 = sshll.u32 %s0, 4
          %s124 = int_to_ptr.hbm [resolvable:$true] %s123
          %126 = dma.hbm_to_smem %s124, 16, [#allocation6], [#allocation9]
        $region16: #{tpu_custom_call.1} parent=11 // pred_fallthru
          _
      $region12: #{tpu_custom_call.1} parent=5 // pred_fallthru
        _
      %p127 = scmp.lt.s32.totalorder %s15, 2
      // Predicated region
      $region17: #{tpu_custom_call.1} parent=5 // pred_check
        %p128 = pneg %p127
      $region18: #{tpu_custom_call.1} parent=5 // pred_check_branch
        %130 = sbr.rel (%p128) target = $region20
      $region19: #{tpu_custom_call.1} parent=5 // pred_region
        // Predicated region
        $region21: #{tpu_custom_call.1} parent=19 // pred_check
          %p131 = pneg %p70
        $region22: #{tpu_custom_call.1} parent=19 // pred_check_branch
          %133 = sbr.rel (%p131) target = $region24
        $region23: #{tpu_custom_call.1} parent=19 // pred_region
          %s134 = sand.u32 %s60, 1
          %s135 = scalar_lea.sflag [#allocation7], %s134
          %s136 = sand.u32 %s60, 1
          %s137 = smul.addr %s136, 8
          %s138 = scalar_lea.vmem [#allocation10], %s137
          %140 = vsyncadd %s135, 0
          %s141 = smul.addr %s23, 2
          %s142 = smul.addr %s22, 2
          %s143 = sadd.s32 %s141, %s142
          %s144 = smul.addr %s143, 4
          %s145 = scalar_lea.hbm %s1, %s144
          %s147 = sshll.u32 %s145, 4
          %s148 = int_to_ptr.hbm [resolvable:$true] %s147
          %s149 = sshll.u32 %s138, 4
          %s150 = int_to_ptr.vmem [resolvable:$true] %s149
          %152 = dma.hbm_to_vmem [thread:$0]  %s148, 128, %s150, %s135
        $region24: #{tpu_custom_call.1} parent=19 // pred_fallthru
          _
      $region20: #{tpu_custom_call.1} parent=5 // pred_fallthru
        _
      %p153 = scmp.le.s32.totalorder 1, %s15
      %p154 = scmp.lt.s32.totalorder %s15, 3
      %p155 = pnand %p153, %p154
      %p156 = pneg %p155
      // Predicated region
      $region25: #{tpu_custom_call.1} parent=5 // pred_check
        _
      $region26: #{tpu_custom_call.1} parent=5 // pred_check_branch
        %158 = sbr.rel (%p155) target = $region28
      $region27: #{tpu_custom_call.1} parent=5 // pred_region
        %s159 = ssub.s32 %s15, 1
        // Predicated region
        $region29: #{tpu_custom_call.1} parent=27 // pred_check
          %p160 = pneg %p48
        $region30: #{tpu_custom_call.1} parent=27 // pred_check_branch
          %162 = sbr.rel (%p160) target = $region32
        $region31: #{tpu_custom_call.1} parent=27 // pred_region
          %164 = dma.done [#allocation9], 16
        $region32: #{tpu_custom_call.1} parent=27 // pred_fallthru
          _
        %s165 = sand.u32 %s63, 1
        %s166 = scalar_lea.sflag [#allocation7], %s165
        %s167 = sand.u32 %s63, 1
        %s168 = smul.addr %s167, 8
        %s169 = scalar_lea.vmem [#allocation10], %s168
        // Predicated region
        $region33: #{tpu_custom_call.1} parent=27 // pred_check
          %p170 = pneg %p76
        $region34: #{tpu_custom_call.1} parent=27 // pred_check_branch
          %172 = sbr.rel (%p170) target = $region36
        $region35: #{tpu_custom_call.1} parent=27 // pred_region
          %174 = dma.done %s166, 128
        $region36: #{tpu_custom_call.1} parent=27 // pred_fallthru
          _
        %175 = sfence
        %p176 = pneg %p48
        %p177 = pneg %p45
        %s178 = sand.u32 %s63, 1
        %s179 = scalar_lea.sflag [#allocation7], %s178
        %s180 = sand.u32 %s63, 1
        %s181 = smul.addr %s180, 8
        %s182 = scalar_lea.vmem [#allocation10], %s181
        %p183 = pneg %p76
        %p184 = pneg %p73
        %p185 = pneg %p102
        %p186 = pneg %p99
        %s187 = sand.u32 %s89, 1
        %s188 = scalar_lea.sflag [#allocation8], %s187
        %s189 = sand.u32 %s89, 1
        %s190 = smul.addr %s189, 16
        %s191 = scalar_lea.vmem [#allocation11], %s190
        %p192 = scmp.eq.s32.totalorder %s25, 0
        // Predicated region
        $region37: #{tpu_custom_call.1} parent=27 // pred_check
          %p193 = pneg %p192
        $region38: #{tpu_custom_call.1} parent=27 // pred_check_branch
          %195 = sbr.rel (%p193) target = $region40
        $region39: #{tpu_custom_call.1} parent=27 // pred_region
          %v196 = vlaneseq
          %vm197 = vcmp.ge.s32.totalorder %v196, 0
          %vm198 = vcmp.lt.s32.totalorder %v196, 256
          %vm199 = vmand %vm197, %vm198
          %200 = vst.msk [vmem:[#allocation2] sm:$0x3] %vm199, 0.0
          %201 = vst.msk [vmem:[#allocation3] sm:$0x3] %vm199, -inf
          %vm202 = vcmask 179200
          %203 = vst.msk [vmem:[#allocation4] sm:$0xff] %vm202, 0.0
          %204 = vst.msk [vmem:[#allocation4 + $0x8] sm:$0xff] %vm202, 0.0
          %vm205 = vcmask 177152
          %206 = vst.msk [vmem:[#allocation4 + $0x10] sm:$0x3f] %vm205, 0.0
          %207 = vst.msk [vmem:[#allocation5] sm:$0xff] %vm202, 0.0
          %208 = vst.msk [vmem:[#allocation5 + $0x8] sm:$0xff] %vm202, 0.0
          %209 = vst.msk [vmem:[#allocation5 + $0x10] sm:$0x3f] %vm205, 0.0
        $region40: #{tpu_custom_call.1} parent=27 // pred_fallthru
          _
        %v210 = vld [vmem:[%s169] sm:$0xff]
        %v211 = vld [vmem:[#allocation2] sm:$0x3]
        %213 = vst [vmem:[#allocation1] ss:$2 sm:$0xff] %v210
        %v214 = vld.sshfl [vmem:[#allocation1] sm:$0xff pattern:$0x75316420]
        %v215 = vld.sshfl [vmem:[#allocation1 + $0x8] sm:$0xff pattern:$0x75316420]
        %vm218 = vcmask 1043456
        %v219 = vsel %vm218, %v214, 0.0
        %v220 = vrot.slane %v219, 4
        %v221 = vadd.f32 %v219, %v220
        %v222 = vrot.slane %v221, 2
        %v223 = vadd.f32 %v221, %v222
        %v224 = vrot.slane %v223, 1
        %v225 = vadd.f32 %v223, %v224
        %v226 = vsel %vm218, %v215, 0.0
        %v227 = vrot.slane %v226, 4
        %v228 = vadd.f32 %v226, %v227
        %v229 = vrot.slane %v228, 2
        %v230 = vadd.f32 %v228, %v229
        %v231 = vrot.slane %v230, 1
        %v232 = vadd.f32 %v230, %v231
        %v235 = vrot.slane %v232, 7
        %vm236 = vcmask 1040384
        %v237 = vsel %vm236, %v225, %v235
        %v239 = vadd.f32 %v211, %v237
        %v240 = vlaneseq
        %vm241 = vcmp.ge.s32.totalorder %v240, 0
        %vm242 = vcmp.lt.s32.totalorder %v240, 256
        %vm243 = vmand %vm241, %vm242
        %244 = vst.msk [vmem:[#allocation2] sm:$0x3] %vm243, %v239
        %v245 = vld [vmem:[#allocation3] sm:$0x3]
        %246 = vst [vmem:[#allocation1] ss:$2 sm:$0xff] %v210
        %v247 = vld.sshfl [vmem:[#allocation1] sm:$0xff pattern:$0x75316420]
        %v248 = vld.sshfl [vmem:[#allocation1 + $0x8] sm:$0xff pattern:$0x75316420]
        %v251 = vsel %vm218, %v247, -inf
        %v252 = vrot.slane %v251, 4
        %v253 = vmax.f32 %v251, %v252
        %v254 = vrot.slane %v253, 2
        %v255 = vmax.f32 %v253, %v254
        %v256 = vrot.slane %v255, 1
        %v257 = vmax.f32 %v255, %v256
        %v258 = vsel %vm218, %v248, -inf
        %v259 = vrot.slane %v258, 4
        %v260 = vmax.f32 %v258, %v259
        %v261 = vrot.slane %v260, 2
        %v262 = vmax.f32 %v260, %v261
        %v263 = vrot.slane %v262, 1
        %v264 = vmax.f32 %v262, %v263
        %v267 = vrot.slane %v264, 7
        %v268 = vsel %vm236, %v257, %v267
        %v270 = vmax.f32 %v245, %v268
        %271 = vst.msk [vmem:[#allocation3] sm:$0x3] %vm243, %v270
        // Predicated region
        $region41: #{tpu_custom_call.1} parent=27 // pred_check
          %p272 = pneg %p192
        $region42: #{tpu_custom_call.1} parent=27 // pred_check_branch
          %274 = sbr.rel (%p272) target = $region44
        $region43: #{tpu_custom_call.1} parent=27 // pred_region
          %v275 = vld [vmem:[#allocation2] sm:$0x1]
          %v276 = vmul.f32 %v275, 0.25
          %v278 = vperm.slane %v276, 0
          %279 = vrot.lane.b32.xlu0 %v278, 3
          %v280 = vpop.permute.xlu0 %279
          %vm282 = vcmask 147480
          %283 = vst.msk [vmem:[#allocation4 + $0x3] sm:$0x1] %vm282, %v280
          %v284 = vld [vmem:[#allocation3] sm:$0x1]
          %v286 = vperm.slane %v284, 0
          %287 = vrot.lane.b32.xlu0 %v286, 3
          %v288 = vpop.permute.xlu0 %287
          %290 = vst.msk [vmem:[#allocation5 + $0x3] sm:$0x1] %vm282, %v288
          %v291 = vld [vmem:[#allocation2] sm:$0x1]
          %v292 = vmul.f32 %v291, 0.25
          %v294 = vperm.slane %v292, 0
          %295 = vrot.lane.b32.xlu0 %v294, 115
          %v296 = vpop.permute.xlu0 %295
          %298 = vst.msk [vmem:[#allocation4 + $0x4] sm:$0x1] %vm282, %v296
          %v299 = vld [vmem:[#allocation3] sm:$0x1]
          %v301 = vperm.slane %v299, 0
          %302 = vrot.lane.b32.xlu0 %v301, 115
          %v303 = vpop.permute.xlu0 %302
          %305 = vst.msk [vmem:[#allocation5 + $0x4] sm:$0x1] %vm282, %v303
          %v306 = vld [vmem:[#allocation2] sm:$0x1]
          %v307 = vmul.f32 %v306, 0.25
          %v309 = vperm.slane %v307, 0
          %310 = vrot.lane.b32.xlu0 %v309, 99
          %v311 = vpop.permute.xlu0 %310
          %313 = vst.msk [vmem:[#allocation4 + $0x5] sm:$0x1] %vm282, %v311
          %v314 = vld [vmem:[#allocation3] sm:$0x1]
          %v316 = vperm.slane %v314, 0
          %317 = vrot.lane.b32.xlu0 %v316, 99
          %v318 = vpop.permute.xlu0 %317
          %320 = vst.msk [vmem:[#allocation5 + $0x5] sm:$0x1] %vm282, %v318
          %v321 = vld [vmem:[#allocation2] sm:$0x1]
          %v322 = vmul.f32 %v321, 0.25
          %v324 = vperm.slane %v322, 0
          %325 = vrot.lane.b32.xlu0 %v324, 83
          %v326 = vpop.permute.xlu0 %325
          %328 = vst.msk [vmem:[#allocation4 + $0x6] sm:$0x1] %vm282, %v326
          %v329 = vld [vmem:[#allocation3] sm:$0x1]
          %v331 = vperm.slane %v329, 0
          %332 = vrot.lane.b32.xlu0 %v331, 83
          %v333 = vpop.permute.xlu0 %332
          %335 = vst.msk [vmem:[#allocation5 + $0x6] sm:$0x1] %vm282, %v333
          %v336 = vld [vmem:[#allocation2] sm:$0x1]
          %v337 = vmul.f32 %v336, 0.25
          %v339 = vperm.slane %v337, 0
          %340 = vrot.lane.b32.xlu0 %v339, 67
          %v341 = vpop.permute.xlu0 %340
          %343 = vst.msk [vmem:[#allocation4 + $0x7] sm:$0x1] %vm282, %v341
          %v344 = vld [vmem:[#allocation3] sm:$0x1]
          %v346 = vperm.slane %v344, 0
          %347 = vrot.lane.b32.xlu0 %v346, 67
          %v348 = vpop.permute.xlu0 %347
          %350 = vst.msk [vmem:[#allocation5 + $0x7] sm:$0x1] %vm282, %v348
          %v351 = vld [vmem:[#allocation2] sm:$0x1]
          %v352 = vmul.f32 %v351, 0.25
          %v354 = vperm.slane %v352, 0
          %355 = vrot.lane.b32.xlu0 %v354, 51
          %v356 = vpop.permute.xlu0 %355
          %358 = vst.msk [vmem:[#allocation4 + $0x8] sm:$0x1] %vm282, %v356
          %v359 = vld [vmem:[#allocation3] sm:$0x1]
          %v361 = vperm.slane %v359, 0
          %362 = vrot.lane.b32.xlu0 %v361, 51
          %v363 = vpop.permute.xlu0 %362
          %365 = vst.msk [vmem:[#allocation5 + $0x8] sm:$0x1] %vm282, %v363
          %v366 = vld [vmem:[#allocation2] sm:$0x1]
          %v367 = vmul.f32 %v366, 0.25
          %v369 = vperm.slane %v367, 0
          %370 = vrot.lane.b32.xlu0 %v369, 35
          %v371 = vpop.permute.xlu0 %370
          %373 = vst.msk [vmem:[#allocation4 + $0x9] sm:$0x1] %vm282, %v371
          %v374 = vld [vmem:[#allocation3] sm:$0x1]
          %v376 = vperm.slane %v374, 0
          %377 = vrot.lane.b32.xlu0 %v376, 35
          %v378 = vpop.permute.xlu0 %377
          %380 = vst.msk [vmem:[#allocation5 + $0x9] sm:$0x1] %vm282, %v378
          %v381 = vld [vmem:[#allocation2] sm:$0x1]
          %v382 = vmul.f32 %v381, 0.25
          %v384 = vperm.slane %v382, 0
          %385 = vrot.lane.b32.xlu0 %v384, 19
          %v386 = vpop.permute.xlu0 %385
          %388 = vst.msk [vmem:[#allocation4 + $0xa] sm:$0x1] %vm282, %v386
          %v389 = vld [vmem:[#allocation3] sm:$0x1]
          %v391 = vperm.slane %v389, 0
          %392 = vrot.lane.b32.xlu0 %v391, 19
          %v393 = vpop.permute.xlu0 %392
          %395 = vst.msk [vmem:[#allocation5 + $0xa] sm:$0x1] %vm282, %v393
          %v396 = vld [vmem:[#allocation2 + $0x1] sm:$0x1]
          %v397 = vmul.f32 %v396, 0.25
          %v399 = vperm.slane %v397, 0
          %400 = vrot.lane.b32.xlu0 %v399, 3
          %v401 = vpop.permute.xlu0 %400
          %403 = vst.msk [vmem:[#allocation4 + $0xb] sm:$0x1] %vm282, %v401
          %v404 = vld [vmem:[#allocation3 + $0x1] sm:$0x1]
          %v406 = vperm.slane %v404, 0
          %407 = vrot.lane.b32.xlu0 %v406, 3
          %v408 = vpop.permute.xlu0 %407
          %410 = vst.msk [vmem:[#allocation5 + $0xb] sm:$0x1] %vm282, %v408
          %v411 = vld [vmem:[#allocation2 + $0x1] sm:$0x1]
          %v412 = vmul.f32 %v411, 0.25
          %v414 = vperm.slane %v412, 0
          %415 = vrot.lane.b32.xlu0 %v414, 115
          %v416 = vpop.permute.xlu0 %415
          %418 = vst.msk [vmem:[#allocation4 + $0xc] sm:$0x1] %vm282, %v416
          %v419 = vld [vmem:[#allocation3 + $0x1] sm:$0x1]
          %v421 = vperm.slane %v419, 0
          %422 = vrot.lane.b32.xlu0 %v421, 115
          %v423 = vpop.permute.xlu0 %422
          %425 = vst.msk [vmem:[#allocation5 + $0xc] sm:$0x1] %vm282, %v423
          %v426 = vld [vmem:[#allocation2 + $0x1] sm:$0x1]
          %v427 = vmul.f32 %v426, 0.25
          %v429 = vperm.slane %v427, 0
          %430 = vrot.lane.b32.xlu0 %v429, 99
          %v431 = vpop.permute.xlu0 %430
          %433 = vst.msk [vmem:[#allocation4 + $0xd] sm:$0x1] %vm282, %v431
          %v434 = vld [vmem:[#allocation3 + $0x1] sm:$0x1]
          %v436 = vperm.slane %v434, 0
          %437 = vrot.lane.b32.xlu0 %v436, 99
          %v438 = vpop.permute.xlu0 %437
          %440 = vst.msk [vmem:[#allocation5 + $0xd] sm:$0x1] %vm282, %v438
          %v441 = vld [vmem:[#allocation2 + $0x1] sm:$0x1]
          %v442 = vmul.f32 %v441, 0.25
          %v444 = vperm.slane %v442, 0
          %445 = vrot.lane.b32.xlu0 %v444, 83
          %v446 = vpop.permute.xlu0 %445
          %448 = vst.msk [vmem:[#allocation4 + $0xe] sm:$0x1] %vm282, %v446
          %v449 = vld [vmem:[#allocation3 + $0x1] sm:$0x1]
          %v451 = vperm.slane %v449, 0
          %452 = vrot.lane.b32.xlu0 %v451, 83
          %v453 = vpop.permute.xlu0 %452
          %455 = vst.msk [vmem:[#allocation5 + $0xe] sm:$0x1] %vm282, %v453
          %v456 = vld [vmem:[#allocation2 + $0x1] sm:$0x1]
          %v457 = vmul.f32 %v456, 0.25
          %v459 = vperm.slane %v457, 0
          %460 = vrot.lane.b32.xlu0 %v459, 67
          %v461 = vpop.permute.xlu0 %460
          %463 = vst.msk [vmem:[#allocation4 + $0xf] sm:$0x1] %vm282, %v461
          %v464 = vld [vmem:[#allocation3 + $0x1] sm:$0x1]
          %v466 = vperm.slane %v464, 0
          %467 = vrot.lane.b32.xlu0 %v466, 67
          %v468 = vpop.permute.xlu0 %467
          %470 = vst.msk [vmem:[#allocation5 + $0xf] sm:$0x1] %vm282, %v468
          %v471 = vld [vmem:[#allocation2 + $0x1] sm:$0x1]
          %v472 = vmul.f32 %v471, 0.25
          %v474 = vperm.slane %v472, 0
          %475 = vrot.lane.b32.xlu0 %v474, 51
          %v476 = vpop.permute.xlu0 %475
          %478 = vst.msk [vmem:[#allocation4 + $0x10] sm:$0x1] %vm282, %v476
          %v479 = vld [vmem:[#allocation3 + $0x1] sm:$0x1]
          %v481 = vperm.slane %v479, 0
          %482 = vrot.lane.b32.xlu0 %v481, 51
          %v483 = vpop.permute.xlu0 %482
          %485 = vst.msk [vmem:[#allocation5 + $0x10] sm:$0x1] %vm282, %v483
          %v486 = vld [vmem:[#allocation2 + $0x1] sm:$0x1]
          %v487 = vmul.f32 %v486, 0.25
          %v489 = vperm.slane %v487, 0
          %490 = vrot.lane.b32.xlu0 %v489, 35
          %v491 = vpop.permute.xlu0 %490
          %493 = vst.msk [vmem:[#allocation4 + $0x11] sm:$0x1] %vm282, %v491
          %v494 = vld [vmem:[#allocation3 + $0x1] sm:$0x1]
          %v496 = vperm.slane %v494, 0
          %497 = vrot.lane.b32.xlu0 %v496, 35
          %v498 = vpop.permute.xlu0 %497
          %500 = vst.msk [vmem:[#allocation5 + $0x11] sm:$0x1] %vm282, %v498
          %v501 = vld [vmem:[#allocation2 + $0x1] sm:$0x1]
          %v502 = vmul.f32 %v501, 0.25
          %v504 = vperm.slane %v502, 0
          %505 = vrot.lane.b32.xlu0 %v504, 19
          %v506 = vpop.permute.xlu0 %505
          %508 = vst.msk [vmem:[#allocation4 + $0x12] sm:$0x1] %vm282, %v506
          %v509 = vld [vmem:[#allocation3 + $0x1] sm:$0x1]
          %v511 = vperm.slane %v509, 0
          %512 = vrot.lane.b32.xlu0 %v511, 19
          %v513 = vpop.permute.xlu0 %512
          %515 = vst.msk [vmem:[#allocation5 + $0x12] sm:$0x1] %vm282, %v513
          %s516 = sld [smem:[#allocation6]]
          %s517 = sld [smem:[#allocation6 + $0x1]]
          %s518 = sld [smem:[#allocation6 + $0x2]]
          %s519 = sld [smem:[#allocation6 + $0x3]]
          %s520 = sld [smem:[#allocation6 + $0x4]]
          %s521 = sld [smem:[#allocation6 + $0x5]]
          %s522 = sld [smem:[#allocation6 + $0x6]]
          %s523 = sld [smem:[#allocation6 + $0x7]]
          %s524 = sld [smem:[#allocation6 + $0x8]]
          %s525 = sld [smem:[#allocation6 + $0x9]]
          %s526 = sld [smem:[#allocation6 + $0xa]]
          %s527 = sld [smem:[#allocation6 + $0xb]]
          %s528 = sld [smem:[#allocation6 + $0xc]]
          %s529 = sld [smem:[#allocation6 + $0xd]]
          %s530 = sld [smem:[#allocation6 + $0xe]]
          %s531 = sld [smem:[#allocation6 + $0xf]]
          %s532 = sld [smem:[#allocation6 + $0x10]]
          %s533 = sld [smem:[#allocation6 + $0x11]]
          %s534 = sld [smem:[#allocation6 + $0x12]]
          %s535 = sld [smem:[#allocation6 + $0x13]]
          %s536 = sld [smem:[#allocation6 + $0x14]]
          %s537 = sld [smem:[#allocation6 + $0x15]]
          %s538 = sld [smem:[#allocation6 + $0x16]]
          %s539 = sld [smem:[#allocation6 + $0x17]]
          %s540 = sld [smem:[#allocation6 + $0x18]]
          %s541 = sld [smem:[#allocation6 + $0x19]]
          %s542 = sld [smem:[#allocation6 + $0x1a]]
          %s543 = sld [smem:[#allocation6 + $0x1b]]
          %s544 = sld [smem:[#allocation6 + $0x1c]]
          %s545 = sld [smem:[#allocation6 + $0x1d]]
          %s546 = sld [smem:[#allocation6 + $0x1e]]
          %s547 = sld [smem:[#allocation6 + $0x1f]]
          %s548 = sld [smem:[#allocation6 + $0x20]]
          %s549 = sld [smem:[#allocation6 + $0x21]]
          %s550 = sld [smem:[#allocation6 + $0x22]]
          %s551 = sld [smem:[#allocation6 + $0x23]]
          %s552 = sld [smem:[#allocation6 + $0x24]]
          %s553 = sld [smem:[#allocation6 + $0x25]]
          %s554 = sld [smem:[#allocation6 + $0x26]]
          %s555 = sld [smem:[#allocation6 + $0x27]]
          %s556 = sld [smem:[#allocation6 + $0x28]]
          %s557 = sld [smem:[#allocation6 + $0x29]]
          %s558 = sld [smem:[#allocation6 + $0x2a]]
          %s559 = sld [smem:[#allocation6 + $0x2b]]
          %s560 = sld [smem:[#allocation6 + $0x2c]]
          %s561 = sld [smem:[#allocation6 + $0x2d]]
          %s562 = sld [smem:[#allocation6 + $0x2e]]
          %s563 = sld [smem:[#allocation6 + $0x2f]]
          %s564 = sld [smem:[#allocation6 + $0x30]]
          %s565 = sld [smem:[#allocation6 + $0x31]]
          %s566 = sld [smem:[#allocation6 + $0x32]]
          %s567 = sld [smem:[#allocation6 + $0x33]]
          %s568 = sld [smem:[#allocation6 + $0x34]]
          %s569 = sld [smem:[#allocation6 + $0x35]]
          %s570 = sld [smem:[#allocation6 + $0x36]]
          %s571 = sld [smem:[#allocation6 + $0x37]]
          %s572 = sld [smem:[#allocation6 + $0x38]]
          %s573 = sld [smem:[#allocation6 + $0x39]]
          %s574 = sld [smem:[#allocation6 + $0x3a]]
          %s575 = sld [smem:[#allocation6 + $0x3b]]
          %s576 = sld [smem:[#allocation6 + $0x3c]]
          %s577 = sld [smem:[#allocation6 + $0x3d]]
          %s578 = sld [smem:[#allocation6 + $0x3e]]
          %s579 = sld [smem:[#allocation6 + $0x3f]]
          %s580 = sld [smem:[#allocation6 + $0x40]]
          %s581 = sld [smem:[#allocation6 + $0x41]]
          %s582 = sld [smem:[#allocation6 + $0x42]]
          %s583 = sld [smem:[#allocation6 + $0x43]]
          %s584 = sld [smem:[#allocation6 + $0x44]]
          %s585 = sld [smem:[#allocation6 + $0x45]]
          %s586 = sld [smem:[#allocation6 + $0x46]]
          %s587 = sld [smem:[#allocation6 + $0x47]]
          %s588 = sld [smem:[#allocation6 + $0x48]]
          %s589 = sld [smem:[#allocation6 + $0x49]]
          %s590 = sld [smem:[#allocation6 + $0x4a]]
          %s591 = sld [smem:[#allocation6 + $0x4b]]
          %s592 = sld [smem:[#allocation6 + $0x4c]]
          %s593 = sld [smem:[#allocation6 + $0x4d]]
          %s594 = sld [smem:[#allocation6 + $0x4e]]
          %s595 = sld [smem:[#allocation6 + $0x4f]]
          %s596 = sld [smem:[#allocation6 + $0x50]]
          %s597 = sld [smem:[#allocation6 + $0x51]]
          %s598 = sld [smem:[#allocation6 + $0x52]]
          %s599 = sld [smem:[#allocation6 + $0x53]]
          %s600 = sld [smem:[#allocation6 + $0x54]]
          %s601 = sld [smem:[#allocation6 + $0x55]]
          %s602 = sld [smem:[#allocation6 + $0x56]]
          %s603 = sld [smem:[#allocation6 + $0x57]]
          %s604 = sld [smem:[#allocation6 + $0x58]]
          %s605 = sld [smem:[#allocation6 + $0x59]]
          %s606 = sld [smem:[#allocation6 + $0x5a]]
          %s607 = sld [smem:[#allocation6 + $0x5b]]
          %s608 = sld [smem:[#allocation6 + $0x5c]]
          %s609 = sld [smem:[#allocation6 + $0x5d]]
          %s610 = sld [smem:[#allocation6 + $0x5e]]
          %s611 = sld [smem:[#allocation6 + $0x5f]]
          %s612 = sld [smem:[#allocation6 + $0x60]]
          %s613 = sld [smem:[#allocation6 + $0x61]]
          %v614 = vld [vmem:[#allocation4] sm:$0xff]
          %v615 = vld [vmem:[#allocation4 + $0x8] sm:$0xff]
          %v616 = vld [vmem:[#allocation4 + $0x10] sm:$0x3f]
          %v617 = vstv %s516
          %v618 = vmul.f32 %v617, %v614
          %v619 = vmul.f32 %v617, %v615
          %v620 = vadd.f32 %v618, 0.0
          %v621 = vadd.f32 %v619, 0.0
          %v622 = vstv %s523
          %v623 = vmul.f32 %v622, %v614
          %v624 = vmul.f32 %v622, %v615
          %v625 = vmul.f32 %v622, %v616
          %v626 = vadd.f32 %v623, 0.0
          %v627 = vadd.f32 %v624, 0.0
          %v628 = vadd.f32 %v625, 0.0
          %v629 = vstv %s530
          %v630 = vmul.f32 %v629, %v614
          %v631 = vmul.f32 %v629, %v615
          %v632 = vmul.f32 %v629, %v616
          %v633 = vadd.f32 %v630, 0.0
          %v634 = vadd.f32 %v631, 0.0
          %v635 = vadd.f32 %v632, 0.0
          %v636 = vstv %s537
          %v637 = vmul.f32 %v636, %v614
          %v638 = vmul.f32 %v636, %v615
          %v639 = vmul.f32 %v636, %v616
          %v640 = vadd.f32 %v637, 0.0
          %v641 = vadd.f32 %v638, 0.0
          %v642 = vadd.f32 %v639, 0.0
          %v643 = vstv %s544
          %v644 = vmul.f32 %v643, %v614
          %v645 = vmul.f32 %v643, %v615
          %v646 = vmul.f32 %v643, %v616
          %v650 = vrot.slane %v644, 4
          %v651 = vrot.slane %v645, 4
          %v652 = vsel %vm218, %v650, %v651
          %v653 = vrot.slane %v646, 4
          %v654 = vsel %vm218, %v651, %v653
          %v657 = vadd.f32 %v620, %v652
          %v658 = vadd.f32 %v621, %v654
          %v659 = vstv %s551
          %v660 = vmul.f32 %v659, %v614
          %v661 = vmul.f32 %v659, %v615
          %v662 = vmul.f32 %v659, %v616
          %v666 = vrot.slane %v660, 4
          %v667 = vrot.slane %v661, 4
          %v668 = vsel %vm218, %v666, %v667
          %v669 = vrot.slane %v662, 4
          %v670 = vsel %vm218, %v667, %v669
          %v674 = vadd.f32 %v626, %v668
          %v675 = vadd.f32 %v627, %v670
          %v676 = vadd.f32 %v628, %v669
          %v677 = vstv %s558
          %v678 = vmul.f32 %v677, %v614
          %v679 = vmul.f32 %v677, %v615
          %v680 = vmul.f32 %v677, %v616
          %v684 = vrot.slane %v678, 4
          %v685 = vrot.slane %v679, 4
          %v686 = vsel %vm218, %v684, %v685
          %v687 = vrot.slane %v680, 4
          %v688 = vsel %vm218, %v685, %v687
          %v692 = vadd.f32 %v633, %v686
          %v693 = vadd.f32 %v634, %v688
          %v694 = vadd.f32 %v635, %v687
          %v695 = vstv %s517
          %v696 = vmul.f32 %v695, %v614
          %v697 = vmul.f32 %v695, %v615
          %vm700 = vcmask 1042432
          %v701 = vrot.slane %v696, 5
          %v702 = vrot.slane %v697, 5
          %v703 = vsel %vm700, %v701, %v702
          %704 = vrot.lane.b32.xlu0 %v701, 127
          %v705 = vpop.permute.xlu0 %704
          %706 = vrot.lane.b32.xlu0 %v703, 127
          %v707 = vpop.permute.xlu0 %706
          %708 = vrot.lane.b32.xlu0 %v702, 127
          %v709 = vpop.permute.xlu0 %708
          %v713 = vadd.f32 %v640, %v705
          %v714 = vadd.f32 %v641, %v707
          %v715 = vadd.f32 %v642, %v709
          %v716 = vstv %s524
          %v717 = vmul.f32 %v716, %v614
          %v718 = vmul.f32 %v716, %v615
          %v719 = vmul.f32 %v716, %v616
          %vm723 = vcmask 1046528
          %v724 = vrot.slane %v717, 1
          %v725 = vrot.slane %v718, 1
          %v726 = vsel %vm723, %v724, %v725
          %v727 = vrot.slane %v719, 1
          %v728 = vsel %vm723, %v725, %v727
          %729 = vrot.lane.b32.xlu0 %v726, 127
          %v730 = vpop.permute.xlu0 %729
          %731 = vrot.lane.b32.xlu0 %v728, 127
          %v732 = vpop.permute.xlu0 %731
          %v735 = vadd.f32 %v657, %v730
          %v736 = vadd.f32 %v658, %v732
          %v737 = vstv %s531
          %v738 = vmul.f32 %v737, %v614
          %v739 = vmul.f32 %v737, %v615
          %v740 = vmul.f32 %v737, %v616
          %v744 = vrot.slane %v738, 1
          %v745 = vrot.slane %v739, 1
          %v746 = vsel %vm723, %v744, %v745
          %v747 = vrot.slane %v740, 1
          %v748 = vsel %vm723, %v745, %v747
          %749 = vrot.lane.b32.xlu0 %v746, 127
          %v750 = vpop.permute.xlu0 %749
          %751 = vrot.lane.b32.xlu0 %v748, 127
          %v752 = vpop.permute.xlu0 %751
          %753 = vrot.lane.b32.xlu0 %v747, 127
          %v754 = vpop.permute.xlu0 %753
          %v758 = vadd.f32 %v674, %v750
          %v759 = vadd.f32 %v675, %v752
          %v760 = vadd.f32 %v676, %v754
          %v761 = vstv %s538
          %v762 = vmul.f32 %v761, %v614
          %v763 = vmul.f32 %v761, %v615
          %v764 = vmul.f32 %v761, %v616
          %v768 = vrot.slane %v762, 1
          %v769 = vrot.slane %v763, 1
          %v770 = vsel %vm723, %v768, %v769
          %v771 = vrot.slane %v764, 1
          %v772 = vsel %vm723, %v769, %v771
          %773 = vrot.lane.b32.xlu0 %v770, 127
          %v774 = vpop.permute.xlu0 %773
          %775 = vrot.lane.b32.xlu0 %v772, 127
          %v776 = vpop.permute.xlu0 %775
          %777 = vrot.lane.b32.xlu0 %v771, 127
          %v778 = vpop.permute.xlu0 %777
          %v782 = vadd.f32 %v692, %v774
          %v783 = vadd.f32 %v693, %v776
          %v784 = vadd.f32 %v694, %v778
          %v785 = vstv %s545
          %v786 = vmul.f32 %v785, %v614
          %v787 = vmul.f32 %v785, %v615
          %v788 = vmul.f32 %v785, %v616
          %v792 = vrot.slane %v786, 1
          %v793 = vrot.slane %v787, 1
          %v794 = vsel %vm723, %v792, %v793
          %v795 = vrot.slane %v788, 1
          %v796 = vsel %vm723, %v793, %v795
          %797 = vrot.lane.b32.xlu0 %v794, 127
          %v798 = vpop.permute.xlu0 %797
          %799 = vrot.lane.b32.xlu0 %v796, 127
          %v800 = vpop.permute.xlu0 %799
          %801 = vrot.lane.b32.xlu0 %v795, 127
          %v802 = vpop.permute.xlu0 %801
          %v806 = vadd.f32 %v713, %v798
          %v807 = vadd.f32 %v714, %v800
          %v808 = vadd.f32 %v715, %v802
          %v809 = vstv %s552
          %v810 = vmul.f32 %v809, %v614
          %v811 = vmul.f32 %v809, %v615
          %v812 = vmul.f32 %v809, %v616
          %v816 = vrot.slane %v810, 5
          %v817 = vrot.slane %v811, 5
          %v818 = vsel %vm700, %v816, %v817
          %v819 = vrot.slane %v812, 5
          %v820 = vsel %vm700, %v817, %v819
          %821 = vrot.lane.b32.xlu0 %v818, 127
          %v822 = vpop.permute.xlu0 %821
          %823 = vrot.lane.b32.xlu0 %v820, 127
          %v824 = vpop.permute.xlu0 %823
          %v827 = vadd.f32 %v735, %v822
          %v828 = vadd.f32 %v736, %v824
          %v829 = vstv %s559
          %v830 = vmul.f32 %v829, %v614
          %v831 = vmul.f32 %v829, %v615
          %v832 = vmul.f32 %v829, %v616
          %v836 = vrot.slane %v830, 5
          %v837 = vrot.slane %v831, 5
          %v838 = vsel %vm700, %v836, %v837
          %v839 = vrot.slane %v832, 5
          %v840 = vsel %vm700, %v837, %v839
          %841 = vrot.lane.b32.xlu0 %v838, 127
          %v842 = vpop.permute.xlu0 %841
          %843 = vrot.lane.b32.xlu0 %v840, 127
          %v844 = vpop.permute.xlu0 %843
          %845 = vrot.lane.b32.xlu0 %v839, 127
          %v846 = vpop.permute.xlu0 %845
          %v850 = vadd.f32 %v758, %v842
          %v851 = vadd.f32 %v759, %v844
          %v852 = vadd.f32 %v760, %v846
          %v853 = vstv %s518
          %v854 = vmul.f32 %v853, %v614
          %v855 = vmul.f32 %v853, %v615
          %vm858 = vcmask 1041408
          %v859 = vrot.slane %v854, 6
          %v860 = vrot.slane %v855, 6
          %v861 = vsel %vm858, %v859, %v860
          %862 = vrot.lane.b32.xlu0 %v859, 126
          %v863 = vpop.permute.xlu0 %862
          %864 = vrot.lane.b32.xlu0 %v861, 126
          %v865 = vpop.permute.xlu0 %864
          %866 = vrot.lane.b32.xlu0 %v860, 126
          %v867 = vpop.permute.xlu0 %866
          %v871 = vadd.f32 %v782, %v863
          %v872 = vadd.f32 %v783, %v865
          %v873 = vadd.f32 %v784, %v867
          %v874 = vstv %s525
          %v875 = vmul.f32 %v874, %v614
          %v876 = vmul.f32 %v874, %v615
          %v877 = vmul.f32 %v874, %v616
          %v881 = vrot.slane %v875, 6
          %v882 = vrot.slane %v876, 6
          %v883 = vsel %vm858, %v881, %v882
          %v884 = vrot.slane %v877, 6
          %v885 = vsel %vm858, %v882, %v884
          %886 = vrot.lane.b32.xlu0 %v881, 126
          %v887 = vpop.permute.xlu0 %886
          %888 = vrot.lane.b32.xlu0 %v883, 126
          %v889 = vpop.permute.xlu0 %888
          %890 = vrot.lane.b32.xlu0 %v885, 126
          %v891 = vpop.permute.xlu0 %890
          %v895 = vadd.f32 %v806, %v887
          %v896 = vadd.f32 %v807, %v889
          %v897 = vadd.f32 %v808, %v891
          %v898 = vstv %s532
          %v899 = vmul.f32 %v898, %v614
          %v900 = vmul.f32 %v898, %v615
          %v901 = vmul.f32 %v898, %v616
          %vm905 = vcmask 1045504
          %v906 = vrot.slane %v899, 2
          %v907 = vrot.slane %v900, 2
          %v908 = vsel %vm905, %v906, %v907
          %v909 = vrot.slane %v901, 2
          %v910 = vsel %vm905, %v907, %v909
          %911 = vrot.lane.b32.xlu0 %v908, 126
          %v912 = vpop.permute.xlu0 %911
          %913 = vrot.lane.b32.xlu0 %v910, 126
          %v914 = vpop.permute.xlu0 %913
          %v917 = vadd.f32 %v827, %v912
          %v918 = vadd.f32 %v828, %v914
          %v919 = vstv %s539
          %v920 = vmul.f32 %v919, %v614
          %v921 = vmul.f32 %v919, %v615
          %v922 = vmul.f32 %v919, %v616
          %v926 = vrot.slane %v920, 2
          %v927 = vrot.slane %v921, 2
          %v928 = vsel %vm905, %v926, %v927
          %v929 = vrot.slane %v922, 2
          %v930 = vsel %vm905, %v927, %v929
          %931 = vrot.lane.b32.xlu0 %v928, 126
          %v932 = vpop.permute.xlu0 %931
          %933 = vrot.lane.b32.xlu0 %v930, 126
          %v934 = vpop.permute.xlu0 %933
          %935 = vrot.lane.b32.xlu0 %v929, 126
          %v936 = vpop.permute.xlu0 %935
          %v940 = vadd.f32 %v850, %v932
          %v941 = vadd.f32 %v851, %v934
          %v942 = vadd.f32 %v852, %v936
          %v943 = vstv %s546
          %v944 = vmul.f32 %v943, %v614
          %v945 = vmul.f32 %v943, %v615
          %v946 = vmul.f32 %v943, %v616
          %v950 = vrot.slane %v944, 2
          %v951 = vrot.slane %v945, 2
          %v952 = vsel %vm905, %v950, %v951
          %v953 = vrot.slane %v946, 2
          %v954 = vsel %vm905, %v951, %v953
          %955 = vrot.lane.b32.xlu0 %v952, 126
          %v956 = vpop.permute.xlu0 %955
          %957 = vrot.lane.b32.xlu0 %v954, 126
          %v958 = vpop.permute.xlu0 %957
          %959 = vrot.lane.b32.xlu0 %v953, 126
          %v960 = vpop.permute.xlu0 %959
          %v964 = vadd.f32 %v871, %v956
          %v965 = vadd.f32 %v872, %v958
          %v966 = vadd.f32 %v873, %v960
          %v967 = vstv %s553
          %v968 = vmul.f32 %v967, %v614
          %v969 = vmul.f32 %v967, %v615
          %v970 = vmul.f32 %v967, %v616
          %v974 = vrot.slane %v968, 2
          %v975 = vrot.slane %v969, 2
          %v976 = vsel %vm905, %v974, %v975
          %v977 = vrot.slane %v970, 2
          %v978 = vsel %vm905, %v975, %v977
          %979 = vrot.lane.b32.xlu0 %v976, 126
          %v980 = vpop.permute.xlu0 %979
          %981 = vrot.lane.b32.xlu0 %v978, 126
          %v982 = vpop.permute.xlu0 %981
          %983 = vrot.lane.b32.xlu0 %v977, 126
          %v984 = vpop.permute.xlu0 %983
          %v988 = vadd.f32 %v895, %v980
          %v989 = vadd.f32 %v896, %v982
          %v990 = vadd.f32 %v897, %v984
          %v991 = vstv %s560
          %v992 = vmul.f32 %v991, %v614
          %v993 = vmul.f32 %v991, %v615
          %v994 = vmul.f32 %v991, %v616
          %v998 = vrot.slane %v992, 6
          %v999 = vrot.slane %v993, 6
          %v1000 = vsel %vm858, %v998, %v999
          %v1001 = vrot.slane %v994, 6
          %v1002 = vsel %vm858, %v999, %v1001
          %1003 = vrot.lane.b32.xlu0 %v1000, 126
          %v1004 = vpop.permute.xlu0 %1003
          %1005 = vrot.lane.b32.xlu0 %v1002, 126
          %v1006 = vpop.permute.xlu0 %1005
          %v1009 = vadd.f32 %v917, %v1004
          %v1010 = vadd.f32 %v918, %v1006
          %v1011 = vstv %s519
          %v1012 = vmul.f32 %v1011, %v614
          %v1013 = vmul.f32 %v1011, %v615
          %v1016 = vrot.slane %v1012, 7
          %v1017 = vrot.slane %v1013, 7
          %v1018 = vsel %vm236, %v1016, %v1017
          %1019 = vrot.lane.b32.xlu0 %v1016, 125
          %v1020 = vpop.permute.xlu0 %1019
          %1021 = vrot.lane.b32.xlu0 %v1018, 125
          %v1022 = vpop.permute.xlu0 %1021
          %1023 = vrot.lane.b32.xlu0 %v1017, 125
          %v1024 = vpop.permute.xlu0 %1023
          %v1028 = vadd.f32 %v940, %v1020
          %v1029 = vadd.f32 %v941, %v1022
          %v1030 = vadd.f32 %v942, %v1024
          %v1031 = vstv %s526
          %v1032 = vmul.f32 %v1031, %v614
          %v1033 = vmul.f32 %v1031, %v615
          %v1034 = vmul.f32 %v1031, %v616
          %v1038 = vrot.slane %v1032, 7
          %v1039 = vrot.slane %v1033, 7
          %v1040 = vsel %vm236, %v1038, %v1039
          %v1041 = vrot.slane %v1034, 7
          %v1042 = vsel %vm236, %v1039, %v1041
          %1043 = vrot.lane.b32.xlu0 %v1038, 125
          %v1044 = vpop.permute.xlu0 %1043
          %1045 = vrot.lane.b32.xlu0 %v1040, 125
          %v1046 = vpop.permute.xlu0 %1045
          %1047 = vrot.lane.b32.xlu0 %v1042, 125
          %v1048 = vpop.permute.xlu0 %1047
          %v1052 = vadd.f32 %v964, %v1044
          %v1053 = vadd.f32 %v965, %v1046
          %v1054 = vadd.f32 %v966, %v1048
          %v1055 = vstv %s533
          %v1056 = vmul.f32 %v1055, %v614
          %v1057 = vmul.f32 %v1055, %v615
          %v1058 = vmul.f32 %v1055, %v616
          %v1062 = vrot.slane %v1056, 7
          %v1063 = vrot.slane %v1057, 7
          %v1064 = vsel %vm236, %v1062, %v1063
          %v1065 = vrot.slane %v1058, 7
          %v1066 = vsel %vm236, %v1063, %v1065
          %1067 = vrot.lane.b32.xlu0 %v1062, 125
          %v1068 = vpop.permute.xlu0 %1067
          %1069 = vrot.lane.b32.xlu0 %v1064, 125
          %v1070 = vpop.permute.xlu0 %1069
          %1071 = vrot.lane.b32.xlu0 %v1066, 125
          %v1072 = vpop.permute.xlu0 %1071
          %v1076 = vadd.f32 %v988, %v1068
          %v1077 = vadd.f32 %v989, %v1070
          %v1078 = vadd.f32 %v990, %v1072
          %v1079 = vstv %s540
          %v1080 = vmul.f32 %v1079, %v614
          %v1081 = vmul.f32 %v1079, %v615
          %v1082 = vmul.f32 %v1079, %v616
          %vm1086 = vcmask 1044480
          %v1087 = vrot.slane %v1080, 3
          %v1088 = vrot.slane %v1081, 3
          %v1089 = vsel %vm1086, %v1087, %v1088
          %v1090 = vrot.slane %v1082, 3
          %v1091 = vsel %vm1086, %v1088, %v1090
          %1092 = vrot.lane.b32.xlu0 %v1089, 125
          %v1093 = vpop.permute.xlu0 %1092
          %1094 = vrot.lane.b32.xlu0 %v1091, 125
          %v1095 = vpop.permute.xlu0 %1094
          %v1098 = vadd.f32 %v1009, %v1093
          %v1099 = vadd.f32 %v1010, %v1095
          %v1100 = vstv %s547
          %v1101 = vmul.f32 %v1100, %v614
          %v1102 = vmul.f32 %v1100, %v615
          %v1103 = vmul.f32 %v1100, %v616
          %v1107 = vrot.slane %v1101, 3
          %v1108 = vrot.slane %v1102, 3
          %v1109 = vsel %vm1086, %v1107, %v1108
          %v1110 = vrot.slane %v1103, 3
          %v1111 = vsel %vm1086, %v1108, %v1110
          %1112 = vrot.lane.b32.xlu0 %v1109, 125
          %v1113 = vpop.permute.xlu0 %1112
          %1114 = vrot.lane.b32.xlu0 %v1111, 125
          %v1115 = vpop.permute.xlu0 %1114
          %1116 = vrot.lane.b32.xlu0 %v1110, 125
          %v1117 = vpop.permute.xlu0 %1116
          %v1121 = vadd.f32 %v1028, %v1113
          %v1122 = vadd.f32 %v1029, %v1115
          %v1123 = vadd.f32 %v1030, %v1117
          %v1124 = vstv %s554
          %v1125 = vmul.f32 %v1124, %v614
          %v1126 = vmul.f32 %v1124, %v615
          %v1127 = vmul.f32 %v1124, %v616
          %v1131 = vrot.slane %v1125, 3
          %v1132 = vrot.slane %v1126, 3
          %v1133 = vsel %vm1086, %v1131, %v1132
          %v1134 = vrot.slane %v1127, 3
          %v1135 = vsel %vm1086, %v1132, %v1134
          %1136 = vrot.lane.b32.xlu0 %v1133, 125
          %v1137 = vpop.permute.xlu0 %1136
          %1138 = vrot.lane.b32.xlu0 %v1135, 125
          %v1139 = vpop.permute.xlu0 %1138
          %1140 = vrot.lane.b32.xlu0 %v1134, 125
          %v1141 = vpop.permute.xlu0 %1140
          %v1145 = vadd.f32 %v1052, %v1137
          %v1146 = vadd.f32 %v1053, %v1139
          %v1147 = vadd.f32 %v1054, %v1141
          %v1148 = vstv %s561
          %v1149 = vmul.f32 %v1148, %v614
          %v1150 = vmul.f32 %v1148, %v615
          %v1151 = vmul.f32 %v1148, %v616
          %v1155 = vrot.slane %v1149, 3
          %v1156 = vrot.slane %v1150, 3
          %v1157 = vsel %vm1086, %v1155, %v1156
          %v1158 = vrot.slane %v1151, 3
          %v1159 = vsel %vm1086, %v1156, %v1158
          %1160 = vrot.lane.b32.xlu0 %v1157, 125
          %v1161 = vpop.permute.xlu0 %1160
          %1162 = vrot.lane.b32.xlu0 %v1159, 125
          %v1163 = vpop.permute.xlu0 %1162
          %1164 = vrot.lane.b32.xlu0 %v1158, 125
          %v1165 = vpop.permute.xlu0 %1164
          %v1169 = vadd.f32 %v1076, %v1161
          %v1170 = vadd.f32 %v1077, %v1163
          %v1171 = vadd.f32 %v1078, %v1165
          %v1172 = vstv %s520
          %v1173 = vmul.f32 %v1172, %v614
          %v1174 = vmul.f32 %v1172, %v615
          %1177 = vrot.lane.b32.xlu0 %v1173, 124
          %v1178 = vpop.permute.xlu0 %1177
          %1179 = vrot.lane.b32.xlu0 %v1174, 124
          %v1180 = vpop.permute.xlu0 %1179
          %v1183 = vadd.f32 %v1098, %v1178
          %v1184 = vadd.f32 %v1099, %v1180
          %v1185 = vstv %s527
          %v1186 = vmul.f32 %v1185, %v614
          %v1187 = vmul.f32 %v1185, %v615
          %v1188 = vmul.f32 %v1185, %v616
          %1192 = vrot.lane.b32.xlu0 %v1186, 124
          %v1193 = vpop.permute.xlu0 %1192
          %1194 = vrot.lane.b32.xlu0 %v1187, 124
          %v1195 = vpop.permute.xlu0 %1194
          %1196 = vrot.lane.b32.xlu0 %v1188, 124
          %v1197 = vpop.permute.xlu0 %1196
          %v1201 = vadd.f32 %v1121, %v1193
          %v1202 = vadd.f32 %v1122, %v1195
          %v1203 = vadd.f32 %v1123, %v1197
          %v1204 = vstv %s534
          %v1205 = vmul.f32 %v1204, %v614
          %v1206 = vmul.f32 %v1204, %v615
          %v1207 = vmul.f32 %v1204, %v616
          %1211 = vrot.lane.b32.xlu0 %v1205, 124
          %v1212 = vpop.permute.xlu0 %1211
          %1213 = vrot.lane.b32.xlu0 %v1206, 124
          %v1214 = vpop.permute.xlu0 %1213
          %1215 = vrot.lane.b32.xlu0 %v1207, 124
          %v1216 = vpop.permute.xlu0 %1215
          %v1220 = vadd.f32 %v1145, %v1212
          %v1221 = vadd.f32 %v1146, %v1214
          %v1222 = vadd.f32 %v1147, %v1216
          %v1223 = vstv %s541
          %v1224 = vmul.f32 %v1223, %v614
          %v1225 = vmul.f32 %v1223, %v615
          %v1226 = vmul.f32 %v1223, %v616
          %1230 = vrot.lane.b32.xlu0 %v1224, 124
          %v1231 = vpop.permute.xlu0 %1230
          %1232 = vrot.lane.b32.xlu0 %v1225, 124
          %v1233 = vpop.permute.xlu0 %1232
          %1234 = vrot.lane.b32.xlu0 %v1226, 124
          %v1235 = vpop.permute.xlu0 %1234
          %v1239 = vadd.f32 %v1169, %v1231
          %v1240 = vadd.f32 %v1170, %v1233
          %v1241 = vadd.f32 %v1171, %v1235
          %v1242 = vstv %s548
          %v1243 = vmul.f32 %v1242, %v614
          %v1244 = vmul.f32 %v1242, %v615
          %v1245 = vmul.f32 %v1242, %v616
          %v1249 = vrot.slane %v1243, 4
          %v1250 = vrot.slane %v1244, 4
          %v1251 = vsel %vm218, %v1249, %v1250
          %v1252 = vrot.slane %v1245, 4
          %v1253 = vsel %vm218, %v1250, %v1252
          %1254 = vrot.lane.b32.xlu0 %v1251, 124
          %v1255 = vpop.permute.xlu0 %1254
          %1256 = vrot.lane.b32.xlu0 %v1253, 124
          %v1257 = vpop.permute.xlu0 %1256
          %v1260 = vadd.f32 %v1183, %v1255
          %v1261 = vadd.f32 %v1184, %v1257
          %v1262 = vstv %s555
          %v1263 = vmul.f32 %v1262, %v614
          %v1264 = vmul.f32 %v1262, %v615
          %v1265 = vmul.f32 %v1262, %v616
          %v1269 = vrot.slane %v1263, 4
          %v1270 = vrot.slane %v1264, 4
          %v1271 = vsel %vm218, %v1269, %v1270
          %v1272 = vrot.slane %v1265, 4
          %v1273 = vsel %vm218, %v1270, %v1272
          %1274 = vrot.lane.b32.xlu0 %v1271, 124
          %v1275 = vpop.permute.xlu0 %1274
          %1276 = vrot.lane.b32.xlu0 %v1273, 124
          %v1277 = vpop.permute.xlu0 %1276
          %1278 = vrot.lane.b32.xlu0 %v1272, 124
          %v1279 = vpop.permute.xlu0 %1278
          %v1283 = vadd.f32 %v1201, %v1275
          %v1284 = vadd.f32 %v1202, %v1277
          %v1285 = vadd.f32 %v1203, %v1279
          %v1286 = vstv %s562
          %v1287 = vmul.f32 %v1286, %v614
          %v1288 = vmul.f32 %v1286, %v615
          %v1289 = vmul.f32 %v1286, %v616
          %v1293 = vrot.slane %v1287, 4
          %v1294 = vrot.slane %v1288, 4
          %v1295 = vsel %vm218, %v1293, %v1294
          %v1296 = vrot.slane %v1289, 4
          %v1297 = vsel %vm218, %v1294, %v1296
          %1298 = vrot.lane.b32.xlu0 %v1295, 124
          %v1299 = vpop.permute.xlu0 %1298
          %1300 = vrot.lane.b32.xlu0 %v1297, 124
          %v1301 = vpop.permute.xlu0 %1300
          %1302 = vrot.lane.b32.xlu0 %v1296, 124
          %v1303 = vpop.permute.xlu0 %1302
          %v1307 = vadd.f32 %v1220, %v1299
          %v1308 = vadd.f32 %v1221, %v1301
          %v1309 = vadd.f32 %v1222, %v1303
          %v1310 = vstv %s521
          %v1311 = vmul.f32 %v1310, %v614
          %v1312 = vmul.f32 %v1310, %v615
          %v1315 = vrot.slane %v1311, 5
          %v1316 = vrot.slane %v1312, 5
          %v1317 = vsel %vm700, %v1315, %v1316
          %1318 = vrot.lane.b32.xlu0 %v1315, 123
          %v1319 = vpop.permute.xlu0 %1318
          %1320 = vrot.lane.b32.xlu0 %v1317, 123
          %v1321 = vpop.permute.xlu0 %1320
          %1322 = vrot.lane.b32.xlu0 %v1316, 123
          %v1323 = vpop.permute.xlu0 %1322
          %v1327 = vadd.f32 %v1239, %v1319
          %v1328 = vadd.f32 %v1240, %v1321
          %v1329 = vadd.f32 %v1241, %v1323
          %v1330 = vstv %s528
          %v1331 = vmul.f32 %v1330, %v614
          %v1332 = vmul.f32 %v1330, %v615
          %v1333 = vmul.f32 %v1330, %v616
          %v1337 = vrot.slane %v1331, 1
          %v1338 = vrot.slane %v1332, 1
          %v1339 = vsel %vm723, %v1337, %v1338
          %v1340 = vrot.slane %v1333, 1
          %v1341 = vsel %vm723, %v1338, %v1340
          %1342 = vrot.lane.b32.xlu0 %v1339, 123
          %v1343 = vpop.permute.xlu0 %1342
          %1344 = vrot.lane.b32.xlu0 %v1341, 123
          %v1345 = vpop.permute.xlu0 %1344
          %v1348 = vadd.f32 %v1260, %v1343
          %v1349 = vadd.f32 %v1261, %v1345
          %v1350 = vstv %s535
          %v1351 = vmul.f32 %v1350, %v614
          %v1352 = vmul.f32 %v1350, %v615
          %v1353 = vmul.f32 %v1350, %v616
          %v1357 = vrot.slane %v1351, 1
          %v1358 = vrot.slane %v1352, 1
          %v1359 = vsel %vm723, %v1357, %v1358
          %v1360 = vrot.slane %v1353, 1
          %v1361 = vsel %vm723, %v1358, %v1360
          %1362 = vrot.lane.b32.xlu0 %v1359, 123
          %v1363 = vpop.permute.xlu0 %1362
          %1364 = vrot.lane.b32.xlu0 %v1361, 123
          %v1365 = vpop.permute.xlu0 %1364
          %1366 = vrot.lane.b32.xlu0 %v1360, 123
          %v1367 = vpop.permute.xlu0 %1366
          %v1371 = vadd.f32 %v1283, %v1363
          %v1372 = vadd.f32 %v1284, %v1365
          %v1373 = vadd.f32 %v1285, %v1367
          %v1374 = vstv %s542
          %v1375 = vmul.f32 %v1374, %v614
          %v1376 = vmul.f32 %v1374, %v615
          %v1377 = vmul.f32 %v1374, %v616
          %v1381 = vrot.slane %v1375, 1
          %v1382 = vrot.slane %v1376, 1
          %v1383 = vsel %vm723, %v1381, %v1382
          %v1384 = vrot.slane %v1377, 1
          %v1385 = vsel %vm723, %v1382, %v1384
          %1386 = vrot.lane.b32.xlu0 %v1383, 123
          %v1387 = vpop.permute.xlu0 %1386
          %1388 = vrot.lane.b32.xlu0 %v1385, 123
          %v1389 = vpop.permute.xlu0 %1388
          %1390 = vrot.lane.b32.xlu0 %v1384, 123
          %v1391 = vpop.permute.xlu0 %1390
          %v1395 = vadd.f32 %v1307, %v1387
          %v1396 = vadd.f32 %v1308, %v1389
          %v1397 = vadd.f32 %v1309, %v1391
          %v1398 = vstv %s549
          %v1399 = vmul.f32 %v1398, %v614
          %v1400 = vmul.f32 %v1398, %v615
          %v1401 = vmul.f32 %v1398, %v616
          %v1405 = vrot.slane %v1399, 1
          %v1406 = vrot.slane %v1400, 1
          %v1407 = vsel %vm723, %v1405, %v1406
          %v1408 = vrot.slane %v1401, 1
          %v1409 = vsel %vm723, %v1406, %v1408
          %1410 = vrot.lane.b32.xlu0 %v1407, 123
          %v1411 = vpop.permute.xlu0 %1410
          %1412 = vrot.lane.b32.xlu0 %v1409, 123
          %v1413 = vpop.permute.xlu0 %1412
          %1414 = vrot.lane.b32.xlu0 %v1408, 123
          %v1415 = vpop.permute.xlu0 %1414
          %v1419 = vadd.f32 %v1327, %v1411
          %v1420 = vadd.f32 %v1328, %v1413
          %v1421 = vadd.f32 %v1329, %v1415
          %v1422 = vstv %s556
          %v1423 = vmul.f32 %v1422, %v614
          %v1424 = vmul.f32 %v1422, %v615
          %v1425 = vmul.f32 %v1422, %v616
          %v1429 = vrot.slane %v1423, 5
          %v1430 = vrot.slane %v1424, 5
          %v1431 = vsel %vm700, %v1429, %v1430
          %v1432 = vrot.slane %v1425, 5
          %v1433 = vsel %vm700, %v1430, %v1432
          %1434 = vrot.lane.b32.xlu0 %v1431, 123
          %v1435 = vpop.permute.xlu0 %1434
          %1436 = vrot.lane.b32.xlu0 %v1433, 123
          %v1437 = vpop.permute.xlu0 %1436
          %v1440 = vadd.f32 %v1348, %v1435
          %v1441 = vadd.f32 %v1349, %v1437
          %v1442 = vstv %s563
          %v1443 = vmul.f32 %v1442, %v614
          %v1444 = vmul.f32 %v1442, %v615
          %v1445 = vmul.f32 %v1442, %v616
          %v1449 = vrot.slane %v1443, 5
          %v1450 = vrot.slane %v1444, 5
          %v1451 = vsel %vm700, %v1449, %v1450
          %v1452 = vrot.slane %v1445, 5
          %v1453 = vsel %vm700, %v1450, %v1452
          %1454 = vrot.lane.b32.xlu0 %v1451, 123
          %v1455 = vpop.permute.xlu0 %1454
          %1456 = vrot.lane.b32.xlu0 %v1453, 123
          %v1457 = vpop.permute.xlu0 %1456
          %1458 = vrot.lane.b32.xlu0 %v1452, 123
          %v1459 = vpop.permute.xlu0 %1458
          %v1463 = vadd.f32 %v1371, %v1455
          %v1464 = vadd.f32 %v1372, %v1457
          %v1465 = vadd.f32 %v1373, %v1459
          %v1466 = vstv %s522
          %v1467 = vmul.f32 %v1466, %v614
          %v1468 = vmul.f32 %v1466, %v615
          %v1471 = vrot.slane %v1467, 6
          %v1472 = vrot.slane %v1468, 6
          %v1473 = vsel %vm858, %v1471, %v1472
          %1474 = vrot.lane.b32.xlu0 %v1471, 122
          %v1475 = vpop.permute.xlu0 %1474
          %1476 = vrot.lane.b32.xlu0 %v1473, 122
          %v1477 = vpop.permute.xlu0 %1476
          %1478 = vrot.lane.b32.xlu0 %v1472, 122
          %v1479 = vpop.permute.xlu0 %1478
          %v1483 = vadd.f32 %v1395, %v1475
          %v1484 = vadd.f32 %v1396, %v1477
          %v1485 = vadd.f32 %v1397, %v1479
          %v1486 = vstv %s529
          %v1487 = vmul.f32 %v1486, %v614
          %v1488 = vmul.f32 %v1486, %v615
          %v1489 = vmul.f32 %v1486, %v616
          %v1493 = vrot.slane %v1487, 6
          %v1494 = vrot.slane %v1488, 6
          %v1495 = vsel %vm858, %v1493, %v1494
          %v1496 = vrot.slane %v1489, 6
          %v1497 = vsel %vm858, %v1494, %v1496
          %1498 = vrot.lane.b32.xlu0 %v1493, 122
          %v1499 = vpop.permute.xlu0 %1498
          %1500 = vrot.lane.b32.xlu0 %v1495, 122
          %v1501 = vpop.permute.xlu0 %1500
          %1502 = vrot.lane.b32.xlu0 %v1497, 122
          %v1503 = vpop.permute.xlu0 %1502
          %v1507 = vadd.f32 %v1419, %v1499
          %v1508 = vadd.f32 %v1420, %v1501
          %v1509 = vadd.f32 %v1421, %v1503
          %v1510 = vstv %s536
          %v1511 = vmul.f32 %v1510, %v614
          %v1512 = vmul.f32 %v1510, %v615
          %v1513 = vmul.f32 %v1510, %v616
          %v1517 = vrot.slane %v1511, 2
          %v1518 = vrot.slane %v1512, 2
          %v1519 = vsel %vm905, %v1517, %v1518
          %v1520 = vrot.slane %v1513, 2
          %v1521 = vsel %vm905, %v1518, %v1520
          %1522 = vrot.lane.b32.xlu0 %v1519, 122
          %v1523 = vpop.permute.xlu0 %1522
          %1524 = vrot.lane.b32.xlu0 %v1521, 122
          %v1525 = vpop.permute.xlu0 %1524
          %v1528 = vadd.f32 %v1440, %v1523
          %v1529 = vadd.f32 %v1441, %v1525
          %v1530 = vstv %s543
          %v1531 = vmul.f32 %v1530, %v614
          %v1532 = vmul.f32 %v1530, %v615
          %v1533 = vmul.f32 %v1530, %v616
          %v1537 = vrot.slane %v1531, 2
          %v1538 = vrot.slane %v1532, 2
          %v1539 = vsel %vm905, %v1537, %v1538
          %v1540 = vrot.slane %v1533, 2
          %v1541 = vsel %vm905, %v1538, %v1540
          %1542 = vrot.lane.b32.xlu0 %v1539, 122
          %v1543 = vpop.permute.xlu0 %1542
          %1544 = vrot.lane.b32.xlu0 %v1541, 122
          %v1545 = vpop.permute.xlu0 %1544
          %1546 = vrot.lane.b32.xlu0 %v1540, 122
          %v1547 = vpop.permute.xlu0 %1546
          %v1551 = vadd.f32 %v1463, %v1543
          %v1552 = vadd.f32 %v1464, %v1545
          %v1553 = vadd.f32 %v1465, %v1547
          %v1554 = vstv %s550
          %v1555 = vmul.f32 %v1554, %v614
          %v1556 = vmul.f32 %v1554, %v615
          %v1557 = vmul.f32 %v1554, %v616
          %v1561 = vrot.slane %v1555, 2
          %v1562 = vrot.slane %v1556, 2
          %v1563 = vsel %vm905, %v1561, %v1562
          %v1564 = vrot.slane %v1557, 2
          %v1565 = vsel %vm905, %v1562, %v1564
          %1566 = vrot.lane.b32.xlu0 %v1563, 122
          %v1567 = vpop.permute.xlu0 %1566
          %1568 = vrot.lane.b32.xlu0 %v1565, 122
          %v1569 = vpop.permute.xlu0 %1568
          %1570 = vrot.lane.b32.xlu0 %v1564, 122
          %v1571 = vpop.permute.xlu0 %1570
          %v1575 = vadd.f32 %v1483, %v1567
          %v1576 = vadd.f32 %v1484, %v1569
          %v1577 = vadd.f32 %v1485, %v1571
          %v1578 = vstv %s557
          %v1579 = vmul.f32 %v1578, %v614
          %v1580 = vmul.f32 %v1578, %v615
          %v1581 = vmul.f32 %v1578, %v616
          %v1585 = vrot.slane %v1579, 2
          %v1586 = vrot.slane %v1580, 2
          %v1587 = vsel %vm905, %v1585, %v1586
          %v1588 = vrot.slane %v1581, 2
          %v1589 = vsel %vm905, %v1586, %v1588
          %1590 = vrot.lane.b32.xlu0 %v1587, 122
          %v1591 = vpop.permute.xlu0 %1590
          %1592 = vrot.lane.b32.xlu0 %v1589, 122
          %v1593 = vpop.permute.xlu0 %1592
          %1594 = vrot.lane.b32.xlu0 %v1588, 122
          %v1595 = vpop.permute.xlu0 %1594
          %v1599 = vadd.f32 %v1507, %v1591
          %v1600 = vadd.f32 %v1508, %v1593
          %v1601 = vadd.f32 %v1509, %v1595
          %v1602 = vstv %s564
          %v1603 = vmul.f32 %v1602, %v614
          %v1604 = vmul.f32 %v1602, %v615
          %v1605 = vmul.f32 %v1602, %v616
          %v1609 = vrot.slane %v1603, 6
          %v1610 = vrot.slane %v1604, 6
          %v1611 = vsel %vm858, %v1609, %v1610
          %v1612 = vrot.slane %v1605, 6
          %v1613 = vsel %vm858, %v1610, %v1612
          %1614 = vrot.lane.b32.xlu0 %v1611, 122
          %v1615 = vpop.permute.xlu0 %1614
          %1616 = vrot.lane.b32.xlu0 %v1613, 122
          %v1617 = vpop.permute.xlu0 %1616
          %v1620 = vadd.f32 %v1528, %v1615
          %v1621 = vadd.f32 %v1529, %v1617
          %v1622 = vld [vmem:[#allocation5] sm:$0xff]
          %v1623 = vld [vmem:[#allocation5 + $0x8] sm:$0xff]
          %v1624 = vld [vmem:[#allocation5 + $0x10] sm:$0x3f]
          %v1625 = vstv %s565
          %v1626 = vmul.f32 %v1625, %v1622
          %v1627 = vmul.f32 %v1625, %v1623
          %v1630 = vrot.slane %v1626, 7
          %v1631 = vrot.slane %v1627, 7
          %v1632 = vsel %vm236, %v1630, %v1631
          %v1636 = vadd.f32 %v1551, %v1630
          %v1637 = vadd.f32 %v1552, %v1632
          %v1638 = vadd.f32 %v1553, %v1631
          %v1639 = vstv %s572
          %v1640 = vmul.f32 %v1639, %v1622
          %v1641 = vmul.f32 %v1639, %v1623
          %v1642 = vmul.f32 %v1639, %v1624
          %v1646 = vrot.slane %v1640, 7
          %v1647 = vrot.slane %v1641, 7
          %v1648 = vsel %vm236, %v1646, %v1647
          %v1649 = vrot.slane %v1642, 7
          %v1650 = vsel %vm236, %v1647, %v1649
          %v1654 = vadd.f32 %v1575, %v1646
          %v1655 = vadd.f32 %v1576, %v1648
          %v1656 = vadd.f32 %v1577, %v1650
          %v1657 = vstv %s579
          %v1658 = vmul.f32 %v1657, %v1622
          %v1659 = vmul.f32 %v1657, %v1623
          %v1660 = vmul.f32 %v1657, %v1624
          %v1664 = vrot.slane %v1658, 7
          %v1665 = vrot.slane %v1659, 7
          %v1666 = vsel %vm236, %v1664, %v1665
          %v1667 = vrot.slane %v1660, 7
          %v1668 = vsel %vm236, %v1665, %v1667
          %v1672 = vadd.f32 %v1599, %v1664
          %v1673 = vadd.f32 %v1600, %v1666
          %v1674 = vadd.f32 %v1601, %v1668
          %v1675 = vstv %s586
          %v1676 = vmul.f32 %v1675, %v1622
          %v1677 = vmul.f32 %v1675, %v1623
          %v1678 = vmul.f32 %v1675, %v1624
          %v1682 = vrot.slane %v1676, 3
          %v1683 = vrot.slane %v1677, 3
          %v1684 = vsel %vm1086, %v1682, %v1683
          %v1685 = vrot.slane %v1678, 3
          %v1686 = vsel %vm1086, %v1683, %v1685
          %v1689 = vadd.f32 %v1620, %v1684
          %v1690 = vadd.f32 %v1621, %v1686
          %v1691 = vstv %s593
          %v1692 = vmul.f32 %v1691, %v1622
          %v1693 = vmul.f32 %v1691, %v1623
          %v1694 = vmul.f32 %v1691, %v1624
          %v1698 = vrot.slane %v1692, 3
          %v1699 = vrot.slane %v1693, 3
          %v1700 = vsel %vm1086, %v1698, %v1699
          %v1701 = vrot.slane %v1694, 3
          %v1702 = vsel %vm1086, %v1699, %v1701
          %v1706 = vadd.f32 %v1636, %v1700
          %v1707 = vadd.f32 %v1637, %v1702
          %v1708 = vadd.f32 %v1638, %v1701
          %v1709 = vstv %s600
          %v1710 = vmul.f32 %v1709, %v1622
          %v1711 = vmul.f32 %v1709, %v1623
          %v1712 = vmul.f32 %v1709, %v1624
          %v1716 = vrot.slane %v1710, 3
          %v1717 = vrot.slane %v1711, 3
          %v1718 = vsel %vm1086, %v1716, %v1717
          %v1719 = vrot.slane %v1712, 3
          %v1720 = vsel %vm1086, %v1717, %v1719
          %v1724 = vadd.f32 %v1654, %v1718
          %v1725 = vadd.f32 %v1655, %v1720
          %v1726 = vadd.f32 %v1656, %v1719
          %v1727 = vstv %s607
          %v1728 = vmul.f32 %v1727, %v1622
          %v1729 = vmul.f32 %v1727, %v1623
          %v1730 = vmul.f32 %v1727, %v1624
          %v1734 = vrot.slane %v1728, 3
          %v1735 = vrot.slane %v1729, 3
          %v1736 = vsel %vm1086, %v1734, %v1735
          %v1737 = vrot.slane %v1730, 3
          %v1738 = vsel %vm1086, %v1735, %v1737
          %v1742 = vadd.f32 %v1672, %v1736
          %v1743 = vadd.f32 %v1673, %v1738
          %v1744 = vadd.f32 %v1674, %v1737
          %v1745 = vstv %s566
          %v1746 = vmul.f32 %v1745, %v1622
          %v1747 = vmul.f32 %v1745, %v1623
          %1750 = vrot.lane.b32.xlu0 %v1746, 127
          %v1751 = vpop.permute.xlu0 %1750
          %1752 = vrot.lane.b32.xlu0 %v1747, 127
          %v1753 = vpop.permute.xlu0 %1752
          %v1756 = vadd.f32 %v1689, %v1751
          %v1757 = vadd.f32 %v1690, %v1753
          %v1758 = vstv %s573
          %v1759 = vmul.f32 %v1758, %v1622
          %v1760 = vmul.f32 %v1758, %v1623
          %v1761 = vmul.f32 %v1758, %v1624
          %1765 = vrot.lane.b32.xlu0 %v1759, 127
          %v1766 = vpop.permute.xlu0 %1765
          %1767 = vrot.lane.b32.xlu0 %v1760, 127
          %v1768 = vpop.permute.xlu0 %1767
          %1769 = vrot.lane.b32.xlu0 %v1761, 127
          %v1770 = vpop.permute.xlu0 %1769
          %v1774 = vadd.f32 %v1706, %v1766
          %v1775 = vadd.f32 %v1707, %v1768
          %v1776 = vadd.f32 %v1708, %v1770
          %v1777 = vstv %s580
          %v1778 = vmul.f32 %v1777, %v1622
          %v1779 = vmul.f32 %v1777, %v1623
          %v1780 = vmul.f32 %v1777, %v1624
          %1784 = vrot.lane.b32.xlu0 %v1778, 127
          %v1785 = vpop.permute.xlu0 %1784
          %1786 = vrot.lane.b32.xlu0 %v1779, 127
          %v1787 = vpop.permute.xlu0 %1786
          %1788 = vrot.lane.b32.xlu0 %v1780, 127
          %v1789 = vpop.permute.xlu0 %1788
          %v1793 = vadd.f32 %v1724, %v1785
          %v1794 = vadd.f32 %v1725, %v1787
          %v1795 = vadd.f32 %v1726, %v1789
          %v1796 = vstv %s587
          %v1797 = vmul.f32 %v1796, %v1622
          %v1798 = vmul.f32 %v1796, %v1623
          %v1799 = vmul.f32 %v1796, %v1624
          %1803 = vrot.lane.b32.xlu0 %v1797, 127
          %v1804 = vpop.permute.xlu0 %1803
          %1805 = vrot.lane.b32.xlu0 %v1798, 127
          %v1806 = vpop.permute.xlu0 %1805
          %1807 = vrot.lane.b32.xlu0 %v1799, 127
          %v1808 = vpop.permute.xlu0 %1807
          %v1812 = vadd.f32 %v1742, %v1804
          %v1813 = vadd.f32 %v1743, %v1806
          %v1814 = vadd.f32 %v1744, %v1808
          %v1815 = vstv %s594
          %v1816 = vmul.f32 %v1815, %v1622
          %v1817 = vmul.f32 %v1815, %v1623
          %v1818 = vmul.f32 %v1815, %v1624
          %v1822 = vrot.slane %v1816, 4
          %v1823 = vrot.slane %v1817, 4
          %v1824 = vsel %vm218, %v1822, %v1823
          %v1825 = vrot.slane %v1818, 4
          %v1826 = vsel %vm218, %v1823, %v1825
          %1827 = vrot.lane.b32.xlu0 %v1824, 127
          %v1828 = vpop.permute.xlu0 %1827
          %1829 = vrot.lane.b32.xlu0 %v1826, 127
          %v1830 = vpop.permute.xlu0 %1829
          %v1833 = vadd.f32 %v1756, %v1828
          %v1834 = vadd.f32 %v1757, %v1830
          %v1835 = vstv %s601
          %v1836 = vmul.f32 %v1835, %v1622
          %v1837 = vmul.f32 %v1835, %v1623
          %v1838 = vmul.f32 %v1835, %v1624
          %v1842 = vrot.slane %v1836, 4
          %v1843 = vrot.slane %v1837, 4
          %v1844 = vsel %vm218, %v1842, %v1843
          %v1845 = vrot.slane %v1838, 4
          %v1846 = vsel %vm218, %v1843, %v1845
          %1847 = vrot.lane.b32.xlu0 %v1844, 127
          %v1848 = vpop.permute.xlu0 %1847
          %1849 = vrot.lane.b32.xlu0 %v1846, 127
          %v1850 = vpop.permute.xlu0 %1849
          %1851 = vrot.lane.b32.xlu0 %v1845, 127
          %v1852 = vpop.permute.xlu0 %1851
          %v1856 = vadd.f32 %v1774, %v1848
          %v1857 = vadd.f32 %v1775, %v1850
          %v1858 = vadd.f32 %v1776, %v1852
          %v1859 = vstv %s608
          %v1860 = vmul.f32 %v1859, %v1622
          %v1861 = vmul.f32 %v1859, %v1623
          %v1862 = vmul.f32 %v1859, %v1624
          %v1866 = vrot.slane %v1860, 4
          %v1867 = vrot.slane %v1861, 4
          %v1868 = vsel %vm218, %v1866, %v1867
          %v1869 = vrot.slane %v1862, 4
          %v1870 = vsel %vm218, %v1867, %v1869
          %1871 = vrot.lane.b32.xlu0 %v1868, 127
          %v1872 = vpop.permute.xlu0 %1871
          %1873 = vrot.lane.b32.xlu0 %v1870, 127
          %v1874 = vpop.permute.xlu0 %1873
          %1875 = vrot.lane.b32.xlu0 %v1869, 127
          %v1876 = vpop.permute.xlu0 %1875
          %v1880 = vadd.f32 %v1793, %v1872
          %v1881 = vadd.f32 %v1794, %v1874
          %v1882 = vadd.f32 %v1795, %v1876
          %v1883 = vstv %s567
          %v1884 = vmul.f32 %v1883, %v1622
          %v1885 = vmul.f32 %v1883, %v1623
          %v1888 = vrot.slane %v1884, 5
          %v1889 = vrot.slane %v1885, 5
          %v1890 = vsel %vm700, %v1888, %v1889
          %1891 = vrot.lane.b32.xlu0 %v1888, 126
          %v1892 = vpop.permute.xlu0 %1891
          %1893 = vrot.lane.b32.xlu0 %v1890, 126
          %v1894 = vpop.permute.xlu0 %1893
          %1895 = vrot.lane.b32.xlu0 %v1889, 126
          %v1896 = vpop.permute.xlu0 %1895
          %v1900 = vadd.f32 %v1812, %v1892
          %v1901 = vadd.f32 %v1813, %v1894
          %v1902 = vadd.f32 %v1814, %v1896
          %v1903 = vstv %s574
          %v1904 = vmul.f32 %v1903, %v1622
          %v1905 = vmul.f32 %v1903, %v1623
          %v1906 = vmul.f32 %v1903, %v1624
          %v1910 = vrot.slane %v1904, 1
          %v1911 = vrot.slane %v1905, 1
          %v1912 = vsel %vm723, %v1910, %v1911
          %v1913 = vrot.slane %v1906, 1
          %v1914 = vsel %vm723, %v1911, %v1913
          %1915 = vrot.lane.b32.xlu0 %v1912, 126
          %v1916 = vpop.permute.xlu0 %1915
          %1917 = vrot.lane.b32.xlu0 %v1914, 126
          %v1918 = vpop.permute.xlu0 %1917
          %v1921 = vadd.f32 %v1833, %v1916
          %v1922 = vadd.f32 %v1834, %v1918
          %v1923 = vstv %s581
          %v1924 = vmul.f32 %v1923, %v1622
          %v1925 = vmul.f32 %v1923, %v1623
          %v1926 = vmul.f32 %v1923, %v1624
          %v1930 = vrot.slane %v1924, 1
          %v1931 = vrot.slane %v1925, 1
          %v1932 = vsel %vm723, %v1930, %v1931
          %v1933 = vrot.slane %v1926, 1
          %v1934 = vsel %vm723, %v1931, %v1933
          %1935 = vrot.lane.b32.xlu0 %v1932, 126
          %v1936 = vpop.permute.xlu0 %1935
          %1937 = vrot.lane.b32.xlu0 %v1934, 126
          %v1938 = vpop.permute.xlu0 %1937
          %1939 = vrot.lane.b32.xlu0 %v1933, 126
          %v1940 = vpop.permute.xlu0 %1939
          %v1944 = vadd.f32 %v1856, %v1936
          %v1945 = vadd.f32 %v1857, %v1938
          %v1946 = vadd.f32 %v1858, %v1940
          %v1947 = vstv %s588
          %v1948 = vmul.f32 %v1947, %v1622
          %v1949 = vmul.f32 %v1947, %v1623
          %v1950 = vmul.f32 %v1947, %v1624
          %v1954 = vrot.slane %v1948, 1
          %v1955 = vrot.slane %v1949, 1
          %v1956 = vsel %vm723, %v1954, %v1955
          %v1957 = vrot.slane %v1950, 1
          %v1958 = vsel %vm723, %v1955, %v1957
          %1959 = vrot.lane.b32.xlu0 %v1956, 126
          %v1960 = vpop.permute.xlu0 %1959
          %1961 = vrot.lane.b32.xlu0 %v1958, 126
          %v1962 = vpop.permute.xlu0 %1961
          %1963 = vrot.lane.b32.xlu0 %v1957, 126
          %v1964 = vpop.permute.xlu0 %1963
          %v1968 = vadd.f32 %v1880, %v1960
          %v1969 = vadd.f32 %v1881, %v1962
          %v1970 = vadd.f32 %v1882, %v1964
          %v1971 = vstv %s595
          %v1972 = vmul.f32 %v1971, %v1622
          %v1973 = vmul.f32 %v1971, %v1623
          %v1974 = vmul.f32 %v1971, %v1624
          %v1978 = vrot.slane %v1972, 1
          %v1979 = vrot.slane %v1973, 1
          %v1980 = vsel %vm723, %v1978, %v1979
          %v1981 = vrot.slane %v1974, 1
          %v1982 = vsel %vm723, %v1979, %v1981
          %1983 = vrot.lane.b32.xlu0 %v1980, 126
          %v1984 = vpop.permute.xlu0 %1983
          %1985 = vrot.lane.b32.xlu0 %v1982, 126
          %v1986 = vpop.permute.xlu0 %1985
          %1987 = vrot.lane.b32.xlu0 %v1981, 126
          %v1988 = vpop.permute.xlu0 %1987
          %v1992 = vadd.f32 %v1900, %v1984
          %v1993 = vadd.f32 %v1901, %v1986
          %v1994 = vadd.f32 %v1902, %v1988
          %v1995 = vstv %s602
          %v1996 = vmul.f32 %v1995, %v1622
          %v1997 = vmul.f32 %v1995, %v1623
          %v1998 = vmul.f32 %v1995, %v1624
          %v2002 = vrot.slane %v1996, 5
          %v2003 = vrot.slane %v1997, 5
          %v2004 = vsel %vm700, %v2002, %v2003
          %v2005 = vrot.slane %v1998, 5
          %v2006 = vsel %vm700, %v2003, %v2005
          %2007 = vrot.lane.b32.xlu0 %v2004, 126
          %v2008 = vpop.permute.xlu0 %2007
          %2009 = vrot.lane.b32.xlu0 %v2006, 126
          %v2010 = vpop.permute.xlu0 %2009
          %v2013 = vadd.f32 %v1921, %v2008
          %v2014 = vadd.f32 %v1922, %v2010
          %v2015 = vstv %s609
          %v2016 = vmul.f32 %v2015, %v1622
          %v2017 = vmul.f32 %v2015, %v1623
          %v2018 = vmul.f32 %v2015, %v1624
          %v2022 = vrot.slane %v2016, 5
          %v2023 = vrot.slane %v2017, 5
          %v2024 = vsel %vm700, %v2022, %v2023
          %v2025 = vrot.slane %v2018, 5
          %v2026 = vsel %vm700, %v2023, %v2025
          %2027 = vrot.lane.b32.xlu0 %v2024, 126
          %v2028 = vpop.permute.xlu0 %2027
          %2029 = vrot.lane.b32.xlu0 %v2026, 126
          %v2030 = vpop.permute.xlu0 %2029
          %2031 = vrot.lane.b32.xlu0 %v2025, 126
          %v2032 = vpop.permute.xlu0 %2031
          %v2036 = vadd.f32 %v1944, %v2028
          %v2037 = vadd.f32 %v1945, %v2030
          %v2038 = vadd.f32 %v1946, %v2032
          %v2039 = vstv %s568
          %v2040 = vmul.f32 %v2039, %v1622
          %v2041 = vmul.f32 %v2039, %v1623
          %v2044 = vrot.slane %v2040, 6
          %v2045 = vrot.slane %v2041, 6
          %v2046 = vsel %vm858, %v2044, %v2045
          %2047 = vrot.lane.b32.xlu0 %v2044, 125
          %v2048 = vpop.permute.xlu0 %2047
          %2049 = vrot.lane.b32.xlu0 %v2046, 125
          %v2050 = vpop.permute.xlu0 %2049
          %2051 = vrot.lane.b32.xlu0 %v2045, 125
          %v2052 = vpop.permute.xlu0 %2051
          %v2056 = vadd.f32 %v1968, %v2048
          %v2057 = vadd.f32 %v1969, %v2050
          %v2058 = vadd.f32 %v1970, %v2052
          %v2059 = vstv %s575
          %v2060 = vmul.f32 %v2059, %v1622
          %v2061 = vmul.f32 %v2059, %v1623
          %v2062 = vmul.f32 %v2059, %v1624
          %v2066 = vrot.slane %v2060, 6
          %v2067 = vrot.slane %v2061, 6
          %v2068 = vsel %vm858, %v2066, %v2067
          %v2069 = vrot.slane %v2062, 6
          %v2070 = vsel %vm858, %v2067, %v2069
          %2071 = vrot.lane.b32.xlu0 %v2066, 125
          %v2072 = vpop.permute.xlu0 %2071
          %2073 = vrot.lane.b32.xlu0 %v2068, 125
          %v2074 = vpop.permute.xlu0 %2073
          %2075 = vrot.lane.b32.xlu0 %v2070, 125
          %v2076 = vpop.permute.xlu0 %2075
          %v2080 = vadd.f32 %v1992, %v2072
          %v2081 = vadd.f32 %v1993, %v2074
          %v2082 = vadd.f32 %v1994, %v2076
          %v2083 = vstv %s582
          %v2084 = vmul.f32 %v2083, %v1622
          %v2085 = vmul.f32 %v2083, %v1623
          %v2086 = vmul.f32 %v2083, %v1624
          %v2090 = vrot.slane %v2084, 2
          %v2091 = vrot.slane %v2085, 2
          %v2092 = vsel %vm905, %v2090, %v2091
          %v2093 = vrot.slane %v2086, 2
          %v2094 = vsel %vm905, %v2091, %v2093
          %2095 = vrot.lane.b32.xlu0 %v2092, 125
          %v2096 = vpop.permute.xlu0 %2095
          %2097 = vrot.lane.b32.xlu0 %v2094, 125
          %v2098 = vpop.permute.xlu0 %2097
          %v2101 = vadd.f32 %v2013, %v2096
          %v2102 = vadd.f32 %v2014, %v2098
          %v2103 = vstv %s589
          %v2104 = vmul.f32 %v2103, %v1622
          %v2105 = vmul.f32 %v2103, %v1623
          %v2106 = vmul.f32 %v2103, %v1624
          %v2110 = vrot.slane %v2104, 2
          %v2111 = vrot.slane %v2105, 2
          %v2112 = vsel %vm905, %v2110, %v2111
          %v2113 = vrot.slane %v2106, 2
          %v2114 = vsel %vm905, %v2111, %v2113
          %2115 = vrot.lane.b32.xlu0 %v2112, 125
          %v2116 = vpop.permute.xlu0 %2115
          %2117 = vrot.lane.b32.xlu0 %v2114, 125
          %v2118 = vpop.permute.xlu0 %2117
          %2119 = vrot.lane.b32.xlu0 %v2113, 125
          %v2120 = vpop.permute.xlu0 %2119
          %v2124 = vadd.f32 %v2036, %v2116
          %v2125 = vadd.f32 %v2037, %v2118
          %v2126 = vadd.f32 %v2038, %v2120
          %v2127 = vstv %s596
          %v2128 = vmul.f32 %v2127, %v1622
          %v2129 = vmul.f32 %v2127, %v1623
          %v2130 = vmul.f32 %v2127, %v1624
          %v2134 = vrot.slane %v2128, 2
          %v2135 = vrot.slane %v2129, 2
          %v2136 = vsel %vm905, %v2134, %v2135
          %v2137 = vrot.slane %v2130, 2
          %v2138 = vsel %vm905, %v2135, %v2137
          %2139 = vrot.lane.b32.xlu0 %v2136, 125
          %v2140 = vpop.permute.xlu0 %2139
          %2141 = vrot.lane.b32.xlu0 %v2138, 125
          %v2142 = vpop.permute.xlu0 %2141
          %2143 = vrot.lane.b32.xlu0 %v2137, 125
          %v2144 = vpop.permute.xlu0 %2143
          %v2148 = vadd.f32 %v2056, %v2140
          %v2149 = vadd.f32 %v2057, %v2142
          %v2150 = vadd.f32 %v2058, %v2144
          %v2151 = vstv %s603
          %v2152 = vmul.f32 %v2151, %v1622
          %v2153 = vmul.f32 %v2151, %v1623
          %v2154 = vmul.f32 %v2151, %v1624
          %v2158 = vrot.slane %v2152, 2
          %v2159 = vrot.slane %v2153, 2
          %v2160 = vsel %vm905, %v2158, %v2159
          %v2161 = vrot.slane %v2154, 2
          %v2162 = vsel %vm905, %v2159, %v2161
          %2163 = vrot.lane.b32.xlu0 %v2160, 125
          %v2164 = vpop.permute.xlu0 %2163
          %2165 = vrot.lane.b32.xlu0 %v2162, 125
          %v2166 = vpop.permute.xlu0 %2165
          %2167 = vrot.lane.b32.xlu0 %v2161, 125
          %v2168 = vpop.permute.xlu0 %2167
          %v2172 = vadd.f32 %v2080, %v2164
          %v2173 = vadd.f32 %v2081, %v2166
          %v2174 = vadd.f32 %v2082, %v2168
          %v2175 = vstv %s610
          %v2176 = vmul.f32 %v2175, %v1622
          %v2177 = vmul.f32 %v2175, %v1623
          %v2178 = vmul.f32 %v2175, %v1624
          %v2182 = vrot.slane %v2176, 6
          %v2183 = vrot.slane %v2177, 6
          %v2184 = vsel %vm858, %v2182, %v2183
          %v2185 = vrot.slane %v2178, 6
          %v2186 = vsel %vm858, %v2183, %v2185
          %2187 = vrot.lane.b32.xlu0 %v2184, 125
          %v2188 = vpop.permute.xlu0 %2187
          %2189 = vrot.lane.b32.xlu0 %v2186, 125
          %v2190 = vpop.permute.xlu0 %2189
          %v2193 = vadd.f32 %v2101, %v2188
          %v2194 = vadd.f32 %v2102, %v2190
          %v2195 = vstv %s569
          %v2196 = vmul.f32 %v2195, %v1622
          %v2197 = vmul.f32 %v2195, %v1623
          %v2200 = vrot.slane %v2196, 7
          %v2201 = vrot.slane %v2197, 7
          %v2202 = vsel %vm236, %v2200, %v2201
          %2203 = vrot.lane.b32.xlu0 %v2200, 124
          %v2204 = vpop.permute.xlu0 %2203
          %2205 = vrot.lane.b32.xlu0 %v2202, 124
          %v2206 = vpop.permute.xlu0 %2205
          %2207 = vrot.lane.b32.xlu0 %v2201, 124
          %v2208 = vpop.permute.xlu0 %2207
          %v2212 = vadd.f32 %v2124, %v2204
          %v2213 = vadd.f32 %v2125, %v2206
          %v2214 = vadd.f32 %v2126, %v2208
          %v2215 = vstv %s576
          %v2216 = vmul.f32 %v2215, %v1622
          %v2217 = vmul.f32 %v2215, %v1623
          %v2218 = vmul.f32 %v2215, %v1624
          %v2222 = vrot.slane %v2216, 7
          %v2223 = vrot.slane %v2217, 7
          %v2224 = vsel %vm236, %v2222, %v2223
          %v2225 = vrot.slane %v2218, 7
          %v2226 = vsel %vm236, %v2223, %v2225
          %2227 = vrot.lane.b32.xlu0 %v2222, 124
          %v2228 = vpop.permute.xlu0 %2227
          %2229 = vrot.lane.b32.xlu0 %v2224, 124
          %v2230 = vpop.permute.xlu0 %2229
          %2231 = vrot.lane.b32.xlu0 %v2226, 124
          %v2232 = vpop.permute.xlu0 %2231
          %v2236 = vadd.f32 %v2148, %v2228
          %v2237 = vadd.f32 %v2149, %v2230
          %v2238 = vadd.f32 %v2150, %v2232
          %v2239 = vstv %s583
          %v2240 = vmul.f32 %v2239, %v1622
          %v2241 = vmul.f32 %v2239, %v1623
          %v2242 = vmul.f32 %v2239, %v1624
          %v2246 = vrot.slane %v2240, 7
          %v2247 = vrot.slane %v2241, 7
          %v2248 = vsel %vm236, %v2246, %v2247
          %v2249 = vrot.slane %v2242, 7
          %v2250 = vsel %vm236, %v2247, %v2249
          %2251 = vrot.lane.b32.xlu0 %v2246, 124
          %v2252 = vpop.permute.xlu0 %2251
          %2253 = vrot.lane.b32.xlu0 %v2248, 124
          %v2254 = vpop.permute.xlu0 %2253
          %2255 = vrot.lane.b32.xlu0 %v2250, 124
          %v2256 = vpop.permute.xlu0 %2255
          %v2260 = vadd.f32 %v2172, %v2252
          %v2261 = vadd.f32 %v2173, %v2254
          %v2262 = vadd.f32 %v2174, %v2256
          %v2263 = vstv %s590
          %v2264 = vmul.f32 %v2263, %v1622
          %v2265 = vmul.f32 %v2263, %v1623
          %v2266 = vmul.f32 %v2263, %v1624
          %v2270 = vrot.slane %v2264, 3
          %v2271 = vrot.slane %v2265, 3
          %v2272 = vsel %vm1086, %v2270, %v2271
          %v2273 = vrot.slane %v2266, 3
          %v2274 = vsel %vm1086, %v2271, %v2273
          %2275 = vrot.lane.b32.xlu0 %v2272, 124
          %v2276 = vpop.permute.xlu0 %2275
          %2277 = vrot.lane.b32.xlu0 %v2274, 124
          %v2278 = vpop.permute.xlu0 %2277
          %v2281 = vadd.f32 %v2193, %v2276
          %v2282 = vadd.f32 %v2194, %v2278
          %v2283 = vstv %s597
          %v2284 = vmul.f32 %v2283, %v1622
          %v2285 = vmul.f32 %v2283, %v1623
          %v2286 = vmul.f32 %v2283, %v1624
          %v2290 = vrot.slane %v2284, 3
          %v2291 = vrot.slane %v2285, 3
          %v2292 = vsel %vm1086, %v2290, %v2291
          %v2293 = vrot.slane %v2286, 3
          %v2294 = vsel %vm1086, %v2291, %v2293
          %2295 = vrot.lane.b32.xlu0 %v2292, 124
          %v2296 = vpop.permute.xlu0 %2295
          %2297 = vrot.lane.b32.xlu0 %v2294, 124
          %v2298 = vpop.permute.xlu0 %2297
          %2299 = vrot.lane.b32.xlu0 %v2293, 124
          %v2300 = vpop.permute.xlu0 %2299
          %v2304 = vadd.f32 %v2212, %v2296
          %v2305 = vadd.f32 %v2213, %v2298
          %v2306 = vadd.f32 %v2214, %v2300
          %v2307 = vstv %s604
          %v2308 = vmul.f32 %v2307, %v1622
          %v2309 = vmul.f32 %v2307, %v1623
          %v2310 = vmul.f32 %v2307, %v1624
          %v2314 = vrot.slane %v2308, 3
          %v2315 = vrot.slane %v2309, 3
          %v2316 = vsel %vm1086, %v2314, %v2315
          %v2317 = vrot.slane %v2310, 3
          %v2318 = vsel %vm1086, %v2315, %v2317
          %2319 = vrot.lane.b32.xlu0 %v2316, 124
          %v2320 = vpop.permute.xlu0 %2319
          %2321 = vrot.lane.b32.xlu0 %v2318, 124
          %v2322 = vpop.permute.xlu0 %2321
          %2323 = vrot.lane.b32.xlu0 %v2317, 124
          %v2324 = vpop.permute.xlu0 %2323
          %v2328 = vadd.f32 %v2236, %v2320
          %v2329 = vadd.f32 %v2237, %v2322
          %v2330 = vadd.f32 %v2238, %v2324
          %v2331 = vstv %s611
          %v2332 = vmul.f32 %v2331, %v1622
          %v2333 = vmul.f32 %v2331, %v1623
          %v2334 = vmul.f32 %v2331, %v1624
          %v2338 = vrot.slane %v2332, 3
          %v2339 = vrot.slane %v2333, 3
          %v2340 = vsel %vm1086, %v2338, %v2339
          %v2341 = vrot.slane %v2334, 3
          %v2342 = vsel %vm1086, %v2339, %v2341
          %2343 = vrot.lane.b32.xlu0 %v2340, 124
          %v2344 = vpop.permute.xlu0 %2343
          %2345 = vrot.lane.b32.xlu0 %v2342, 124
          %v2346 = vpop.permute.xlu0 %2345
          %2347 = vrot.lane.b32.xlu0 %v2341, 124
          %v2348 = vpop.permute.xlu0 %2347
          %v2352 = vadd.f32 %v2260, %v2344
          %v2353 = vadd.f32 %v2261, %v2346
          %v2354 = vadd.f32 %v2262, %v2348
          %v2355 = vstv %s570
          %v2356 = vmul.f32 %v2355, %v1622
          %v2357 = vmul.f32 %v2355, %v1623
          %2360 = vrot.lane.b32.xlu0 %v2356, 123
          %v2361 = vpop.permute.xlu0 %2360
          %2362 = vrot.lane.b32.xlu0 %v2357, 123
          %v2363 = vpop.permute.xlu0 %2362
          %v2366 = vadd.f32 %v2281, %v2361
          %v2367 = vadd.f32 %v2282, %v2363
          %v2368 = vstv %s577
          %v2369 = vmul.f32 %v2368, %v1622
          %v2370 = vmul.f32 %v2368, %v1623
          %v2371 = vmul.f32 %v2368, %v1624
          %2375 = vrot.lane.b32.xlu0 %v2369, 123
          %v2376 = vpop.permute.xlu0 %2375
          %2377 = vrot.lane.b32.xlu0 %v2370, 123
          %v2378 = vpop.permute.xlu0 %2377
          %2379 = vrot.lane.b32.xlu0 %v2371, 123
          %v2380 = vpop.permute.xlu0 %2379
          %v2384 = vadd.f32 %v2304, %v2376
          %v2385 = vadd.f32 %v2305, %v2378
          %v2386 = vadd.f32 %v2306, %v2380
          %v2387 = vstv %s584
          %v2388 = vmul.f32 %v2387, %v1622
          %v2389 = vmul.f32 %v2387, %v1623
          %v2390 = vmul.f32 %v2387, %v1624
          %2394 = vrot.lane.b32.xlu0 %v2388, 123
          %v2395 = vpop.permute.xlu0 %2394
          %2396 = vrot.lane.b32.xlu0 %v2389, 123
          %v2397 = vpop.permute.xlu0 %2396
          %2398 = vrot.lane.b32.xlu0 %v2390, 123
          %v2399 = vpop.permute.xlu0 %2398
          %v2403 = vadd.f32 %v2328, %v2395
          %v2404 = vadd.f32 %v2329, %v2397
          %v2405 = vadd.f32 %v2330, %v2399
          %v2406 = vstv %s591
          %v2407 = vmul.f32 %v2406, %v1622
          %v2408 = vmul.f32 %v2406, %v1623
          %v2409 = vmul.f32 %v2406, %v1624
          %2413 = vrot.lane.b32.xlu0 %v2407, 123
          %v2414 = vpop.permute.xlu0 %2413
          %2415 = vrot.lane.b32.xlu0 %v2408, 123
          %v2416 = vpop.permute.xlu0 %2415
          %2417 = vrot.lane.b32.xlu0 %v2409, 123
          %v2418 = vpop.permute.xlu0 %2417
          %v2422 = vadd.f32 %v2352, %v2414
          %v2423 = vadd.f32 %v2353, %v2416
          %v2424 = vadd.f32 %v2354, %v2418
          %v2425 = vstv %s598
          %v2426 = vmul.f32 %v2425, %v1622
          %v2427 = vmul.f32 %v2425, %v1623
          %v2428 = vmul.f32 %v2425, %v1624
          %v2432 = vrot.slane %v2426, 4
          %v2433 = vrot.slane %v2427, 4
          %v2434 = vsel %vm218, %v2432, %v2433
          %v2435 = vrot.slane %v2428, 4
          %v2436 = vsel %vm218, %v2433, %v2435
          %2437 = vrot.lane.b32.xlu0 %v2434, 123
          %v2438 = vpop.permute.xlu0 %2437
          %2439 = vrot.lane.b32.xlu0 %v2436, 123
          %v2440 = vpop.permute.xlu0 %2439
          %v2443 = vadd.f32 %v2366, %v2438
          %v2444 = vadd.f32 %v2367, %v2440
          %v2445 = vstv %s605
          %v2446 = vmul.f32 %v2445, %v1622
          %v2447 = vmul.f32 %v2445, %v1623
          %v2448 = vmul.f32 %v2445, %v1624
          %v2452 = vrot.slane %v2446, 4
          %v2453 = vrot.slane %v2447, 4
          %v2454 = vsel %vm218, %v2452, %v2453
          %v2455 = vrot.slane %v2448, 4
          %v2456 = vsel %vm218, %v2453, %v2455
          %2457 = vrot.lane.b32.xlu0 %v2454, 123
          %v2458 = vpop.permute.xlu0 %2457
          %2459 = vrot.lane.b32.xlu0 %v2456, 123
          %v2460 = vpop.permute.xlu0 %2459
          %2461 = vrot.lane.b32.xlu0 %v2455, 123
          %v2462 = vpop.permute.xlu0 %2461
          %v2466 = vadd.f32 %v2384, %v2458
          %v2467 = vadd.f32 %v2385, %v2460
          %v2468 = vadd.f32 %v2386, %v2462
          %v2469 = vstv %s612
          %v2470 = vmul.f32 %v2469, %v1622
          %v2471 = vmul.f32 %v2469, %v1623
          %v2472 = vmul.f32 %v2469, %v1624
          %v2476 = vrot.slane %v2470, 4
          %v2477 = vrot.slane %v2471, 4
          %v2478 = vsel %vm218, %v2476, %v2477
          %v2479 = vrot.slane %v2472, 4
          %v2480 = vsel %vm218, %v2477, %v2479
          %2481 = vrot.lane.b32.xlu0 %v2478, 123
          %v2482 = vpop.permute.xlu0 %2481
          %2483 = vrot.lane.b32.xlu0 %v2480, 123
          %v2484 = vpop.permute.xlu0 %2483
          %2485 = vrot.lane.b32.xlu0 %v2479, 123
          %v2486 = vpop.permute.xlu0 %2485
          %v2490 = vadd.f32 %v2403, %v2482
          %v2491 = vadd.f32 %v2404, %v2484
          %v2492 = vadd.f32 %v2405, %v2486
          %v2493 = vstv %s571
          %v2494 = vmul.f32 %v2493, %v1622
          %v2495 = vmul.f32 %v2493, %v1623
          %v2498 = vrot.slane %v2494, 5
          %v2499 = vrot.slane %v2495, 5
          %v2500 = vsel %vm700, %v2498, %v2499
          %2501 = vrot.lane.b32.xlu0 %v2498, 122
          %v2502 = vpop.permute.xlu0 %2501
          %2503 = vrot.lane.b32.xlu0 %v2500, 122
          %v2504 = vpop.permute.xlu0 %2503
          %2505 = vrot.lane.b32.xlu0 %v2499, 122
          %v2506 = vpop.permute.xlu0 %2505
          %v2510 = vadd.f32 %v2422, %v2502
          %v2511 = vadd.f32 %v2423, %v2504
          %v2512 = vadd.f32 %v2424, %v2506
          %v2513 = vstv %s578
          %v2514 = vmul.f32 %v2513, %v1622
          %v2515 = vmul.f32 %v2513, %v1623
          %v2516 = vmul.f32 %v2513, %v1624
          %v2520 = vrot.slane %v2514, 1
          %v2521 = vrot.slane %v2515, 1
          %v2522 = vsel %vm723, %v2520, %v2521
          %v2523 = vrot.slane %v2516, 1
          %v2524 = vsel %vm723, %v2521, %v2523
          %2525 = vrot.lane.b32.xlu0 %v2522, 122
          %v2526 = vpop.permute.xlu0 %2525
          %2527 = vrot.lane.b32.xlu0 %v2524, 122
          %v2528 = vpop.permute.xlu0 %2527
          %v2531 = vadd.f32 %v2443, %v2526
          %v2532 = vadd.f32 %v2444, %v2528
          %v2533 = vstv %s585
          %v2534 = vmul.f32 %v2533, %v1622
          %v2535 = vmul.f32 %v2533, %v1623
          %v2536 = vmul.f32 %v2533, %v1624
          %v2540 = vrot.slane %v2534, 1
          %v2541 = vrot.slane %v2535, 1
          %v2542 = vsel %vm723, %v2540, %v2541
          %v2543 = vrot.slane %v2536, 1
          %v2544 = vsel %vm723, %v2541, %v2543
          %2545 = vrot.lane.b32.xlu0 %v2542, 122
          %v2546 = vpop.permute.xlu0 %2545
          %2547 = vrot.lane.b32.xlu0 %v2544, 122
          %v2548 = vpop.permute.xlu0 %2547
          %2549 = vrot.lane.b32.xlu0 %v2543, 122
          %v2550 = vpop.permute.xlu0 %2549
          %v2554 = vadd.f32 %v2466, %v2546
          %v2555 = vadd.f32 %v2467, %v2548
          %v2556 = vadd.f32 %v2468, %v2550
          %v2557 = vstv %s592
          %v2558 = vmul.f32 %v2557, %v1622
          %v2559 = vmul.f32 %v2557, %v1623
          %v2560 = vmul.f32 %v2557, %v1624
          %v2564 = vrot.slane %v2558, 1
          %v2565 = vrot.slane %v2559, 1
          %v2566 = vsel %vm723, %v2564, %v2565
          %v2567 = vrot.slane %v2560, 1
          %v2568 = vsel %vm723, %v2565, %v2567
          %2569 = vrot.lane.b32.xlu0 %v2566, 122
          %v2570 = vpop.permute.xlu0 %2569
          %2571 = vrot.lane.b32.xlu0 %v2568, 122
          %v2572 = vpop.permute.xlu0 %2571
          %2573 = vrot.lane.b32.xlu0 %v2567, 122
          %v2574 = vpop.permute.xlu0 %2573
          %v2578 = vadd.f32 %v2490, %v2570
          %v2579 = vadd.f32 %v2491, %v2572
          %v2580 = vadd.f32 %v2492, %v2574
          %v2581 = vstv %s599
          %v2582 = vmul.f32 %v2581, %v1622
          %v2583 = vmul.f32 %v2581, %v1623
          %v2584 = vmul.f32 %v2581, %v1624
          %v2588 = vrot.slane %v2582, 1
          %v2589 = vrot.slane %v2583, 1
          %v2590 = vsel %vm723, %v2588, %v2589
          %v2591 = vrot.slane %v2584, 1
          %v2592 = vsel %vm723, %v2589, %v2591
          %2593 = vrot.lane.b32.xlu0 %v2590, 122
          %v2594 = vpop.permute.xlu0 %2593
          %2595 = vrot.lane.b32.xlu0 %v2592, 122
          %v2596 = vpop.permute.xlu0 %2595
          %2597 = vrot.lane.b32.xlu0 %v2591, 122
          %v2598 = vpop.permute.xlu0 %2597
          %v2602 = vadd.f32 %v2510, %v2594
          %v2603 = vadd.f32 %v2511, %v2596
          %v2604 = vadd.f32 %v2512, %v2598
          %v2605 = vstv %s606
          %v2606 = vmul.f32 %v2605, %v1622
          %v2607 = vmul.f32 %v2605, %v1623
          %v2608 = vmul.f32 %v2605, %v1624
          %v2612 = vrot.slane %v2606, 5
          %v2613 = vrot.slane %v2607, 5
          %v2614 = vsel %vm700, %v2612, %v2613
          %v2615 = vrot.slane %v2608, 5
          %v2616 = vsel %vm700, %v2613, %v2615
          %2617 = vrot.lane.b32.xlu0 %v2614, 122
          %v2618 = vpop.permute.xlu0 %2617
          %2619 = vrot.lane.b32.xlu0 %v2616, 122
          %v2620 = vpop.permute.xlu0 %2619
          %v2623 = vadd.f32 %v2531, %v2618
          %v2624 = vadd.f32 %v2532, %v2620
          %v2625 = vstv %s613
          %v2626 = vmul.f32 %v2625, %v1622
          %v2627 = vmul.f32 %v2625, %v1623
          %v2628 = vmul.f32 %v2625, %v1624
          %v2632 = vrot.slane %v2626, 5
          %v2633 = vrot.slane %v2627, 5
          %v2634 = vsel %vm700, %v2632, %v2633
          %v2635 = vrot.slane %v2628, 5
          %v2636 = vsel %vm700, %v2633, %v2635
          %2637 = vrot.lane.b32.xlu0 %v2634, 122
          %v2638 = vpop.permute.xlu0 %2637
          %2639 = vrot.lane.b32.xlu0 %v2636, 122
          %v2640 = vpop.permute.xlu0 %2639
          %2641 = vrot.lane.b32.xlu0 %v2635, 122
          %v2642 = vpop.permute.xlu0 %2641
          %v2646 = vadd.f32 %v2554, %v2638
          %v2647 = vadd.f32 %v2555, %v2640
          %v2648 = vadd.f32 %v2556, %v2642
          %v2652 = vrot.slane %v2646, 1
          %v2653 = vrot.slane %v2647, 1
          %v2654 = vsel %vm723, %v2652, %v2653
          %v2655 = vrot.slane %v2648, 1
          %v2656 = vsel %vm723, %v2653, %v2655
          %v2659 = vadd.f32 %v2623, %v2654
          %v2660 = vadd.f32 %v2624, %v2656
          %v2664 = vrot.slane %v2602, 1
          %v2665 = vrot.slane %v2603, 1
          %v2666 = vsel %vm723, %v2664, %v2665
          %v2667 = vrot.slane %v2604, 1
          %v2668 = vsel %vm723, %v2665, %v2667
          %v2672 = vadd.f32 %v2578, %v2666
          %v2673 = vadd.f32 %v2579, %v2668
          %v2674 = vadd.f32 %v2580, %v2667
          %v2678 = vrot.slane %v2672, 2
          %v2679 = vrot.slane %v2673, 2
          %v2680 = vsel %vm905, %v2678, %v2679
          %v2681 = vrot.slane %v2674, 2
          %v2682 = vsel %vm905, %v2679, %v2681
          %v2685 = vadd.f32 %v2659, %v2680
          %v2686 = vadd.f32 %v2660, %v2682
          %v2687 = vxor.u32 %v2685, 2147483648
          %v2688 = vxor.u32 %v2686, 2147483648
          %v2689 = vmul.f32 %v2687, 1.442695
          %v2690 = vpow.pop %v2689
          %v2691 = vmul.f32 %v2688, 1.442695
          %v2692 = vpow.pop %v2691
          %v2693 = vadd.f32 %v2690, 1.0
          %v2694 = vadd.f32 %v2692, 1.0
          %v2695 = vrcp.pop %v2693
          %v2696 = vmul.f32 %v2693, %v2695
          %v2697 = vsub.f32 1.0, %v2696
          %v2698 = vmul.f32 %v2695, %v2697
          %v2699 = vadd.f32 %v2695, %v2698
          %vm2700 = vweird.f32 %v2693
          %vm2701 = vweird.f32 %v2695
          %vm2702 = vmor %vm2700, %vm2701
          %v2703 = vsel %vm2702, %v2695, %v2699
          %v2704 = vand.u32 2147483647, %v2693
          %vm2705 = vcmp.eq.f32.partialorder %v2704, 8.507059e+37
          %v2706 = vand.u32 %v2693, 2147483648
          %v2707 = vor.u32 1.1754944e-38, %v2706
          %v2708 = vsel %vm2705, %v2707, %v2703
          %v2709 = vmul.f32 1.0, %v2708
          %v2710 = vrcp.pop %v2694
          %v2711 = vmul.f32 %v2694, %v2710
          %v2712 = vsub.f32 1.0, %v2711
          %v2713 = vmul.f32 %v2710, %v2712
          %v2714 = vadd.f32 %v2710, %v2713
          %vm2715 = vweird.f32 %v2694
          %vm2716 = vweird.f32 %v2710
          %vm2717 = vmor %vm2715, %vm2716
          %v2718 = vsel %vm2717, %v2710, %v2714
          %v2719 = vand.u32 2147483647, %v2694
          %vm2720 = vcmp.eq.f32.partialorder %v2719, 8.507059e+37
          %v2721 = vand.u32 %v2694, 2147483648
          %v2722 = vor.u32 1.1754944e-38, %v2721
          %v2723 = vsel %vm2720, %v2722, %v2718
          %v2724 = vmul.f32 1.0, %v2723
          %vm2725 = vcmask 130048
          %2726 = vst.msk [vmem:[%s191] sm:$0xff] %vm2725, %v2709
          %2727 = vst.msk [vmem:[%s191 + $0x8] sm:$0xff] %vm2725, %v2724
        $region44: #{tpu_custom_call.1} parent=27 // pred_fallthru
          _
        %s2728 = sand.u32 %s89, 1
        %s2729 = scalar_lea.sflag [#allocation8], %s2728
        %s2730 = sand.u32 %s89, 1
        %s2731 = smul.addr %s2730, 16
        %s2732 = scalar_lea.vmem [#allocation11], %s2731
        // Predicated region
        $region45: #{tpu_custom_call.1} parent=27 // pred_check
          %p2733 = pneg %p99
        $region46: #{tpu_custom_call.1} parent=27 // pred_check_branch
          %2735 = sbr.rel (%p2733) target = $region48
        $region47: #{tpu_custom_call.1} parent=27 // pred_region
          %2737 = vsyncadd %s2729, 0
          %s2738 = smul.addr %s24, 2
          %s2739 = smul.addr %s2738, 8
          %s2740 = scalar_lea.hbm %s2, %s2739
          %s2741 = sshll.u32 %s2732, 4
          %s2742 = int_to_ptr.vmem [resolvable:$true] %s2741
          %s2743 = sshll.u32 %s2740, 4
          %s2744 = int_to_ptr.hbm [resolvable:$true] %s2743
          %2749 = dma.vmem_to_hbm [thread:$0]  %s2742, 256, %s2744, %s2729, 128, 128, 8
        $region48: #{tpu_custom_call.1} parent=27 // pred_fallthru
          _
      $region28: #{tpu_custom_call.1} parent=5 // pred_fallthru
        _
      %p2750 = scmp.le.s32.totalorder 2, %s15
      // Predicated region
      $region49: #{tpu_custom_call.1} parent=5 // pred_check
        %p2751 = pneg %p2750
      $region50: #{tpu_custom_call.1} parent=5 // pred_check_branch
        %2753 = sbr.rel (%p2751) target = $region52
      $region51: #{tpu_custom_call.1} parent=5 // pred_region
        %s2754 = ssub.s32 %s15, 2
        // Predicated region
        $region53: #{tpu_custom_call.1} parent=51 // pred_check
          %p2755 = pneg %p105
        $region54: #{tpu_custom_call.1} parent=51 // pred_check_branch
          %2757 = sbr.rel (%p2755) target = $region56
        $region55: #{tpu_custom_call.1} parent=51 // pred_region
          %s2758 = sand.u32 %s90, 1
          %s2759 = scalar_lea.sflag [#allocation8], %s2758
          %s2760 = sand.u32 %s90, 1
          %s2761 = smul.addr %s2760, 16
          %s2762 = scalar_lea.vmem [#allocation11], %s2761
          %2764 = dma.done %s2759, 256
        $region56: #{tpu_custom_call.1} parent=51 // pred_fallthru
          _
      $region52: #{tpu_custom_call.1} parent=5 // pred_fallthru
        _
    $region6: #{tpu_custom_call.1} parent=1 // loop_footer
      %s19 = sadd.s32 1, %s15
    $region7: #{tpu_custom_call.1} parent=1 // loop_footer_branch
      %14 = sbr.rel target = $region3
    $region8: #{tpu_custom_call.1} parent=1 // loop_exit
      _
    %2765 = vsyncpa [#allocation7], 1
    %s2766 = scalar_lea.sflag [#allocation7], 1
    %2767 = vsyncpa %s2766, 1
    %2768 = vsyncpa [#allocation8], 1
    %s2769 = scalar_lea.sflag [#allocation8], 1
    %2770 = vsyncpa %s2769, 1
    %2771 = vsyncpa [#allocation9], 1
    %s2772 = scalar_lea.sflag [#allocation9], 1
    %2773 = vsyncpa %s2772, 1

</llo_original>
